<compile_context>
chip_gen: v5e
topology: v5e:2x2
jax: 0.10.0
libtpu: 0.0.40
codegen_flags: <defaults>
</compile_context>

<pallas_src>
import jax
import jax.numpy as jnp
from jax.experimental import pallas as pl
from jax.experimental.pallas import tpu as pltpu

# ----------------------------- model config (small) ------------------------------
IMAGE_SIZE = 16
PATCH_SIZE = 4
NUM_CLASSES = 10
DIM = 32
DEPTH = 2          # patch transformer depth
CLS_DEPTH = 1      # class transformer depth
HEADS = 2
DIM_HEAD = 8
MLP_DIM = 64
INNER = HEADS * DIM_HEAD
NUM_PATCHES = (IMAGE_SIZE // PATCH_SIZE) ** 2
PATCH_DIM = 3 * PATCH_SIZE ** 2
LN_EPS = 1e-5
ATTN_SCALE = DIM_HEAD ** -0.5
SLAB_COLS = 128    # lane-dense weight slab / padded head width


# ----------------------------- static slab layout ---------------------------------
def _round8(n):
    return (n + 7) // 8 * 8


def _build_layout():
    """Static (name -> (row_offset, shape)) layout of the packed weight slab."""
    layout = {}
    row = 0

    def add(name, shape):
        nonlocal row
        layout[name] = (row, shape)
        row += _round8(shape[0])          # keep every block 8-sublane aligned

    add("patch_w", (PATCH_DIM, DIM))
    for prefix, depth in (("p", DEPTH), ("c", CLS_DEPTH)):
        for l in range(depth):
            add(f"{prefix}{l}_wqkv", (DIM, 3 * INNER))
            add(f"{prefix}{l}_bqkv", (1, 3 * INNER))
            add(f"{prefix}{l}_mpcols", (HEADS, INNER))
            add(f"{prefix}{l}_mqcols", (HEADS, INNER))
            add(f"{prefix}{l}_wo", (INNER, DIM))
            add(f"{prefix}{l}_bo", (1, DIM))
            add(f"{prefix}{l}_w1", (DIM, MLP_DIM))
            add(f"{prefix}{l}_b1", (1, MLP_DIM))
            add(f"{prefix}{l}_w2", (MLP_DIM, DIM))
            add(f"{prefix}{l}_b2", (1, DIM))
    add("cls_token", (1, DIM))
    add("head_w", (DIM, SLAB_COLS))
    add("head_b", (1, SLAB_COLS))
    return layout, row


_LAYOUT, _SLAB_ROWS = _build_layout()


# ----------------------------- in-kernel math helpers ------------------------------
def _erf(x):
    # Abramowitz & Stegun 7.1.26 polynomial erf (|err| <= 1.5e-7).
    # TODO(synk): not bit-exact with PyTorch's exact-erf nn.GELU(); Mosaic has no erf primitive.
    a1, a2, a3, a4, a5 = 0.254829592, -0.284496736, 1.421413741, -1.453152027, 1.061405429
    p = 0.3275911
    ax = jnp.abs(x)
    t = 1.0 / (1.0 + p * ax)
    poly = ((((a5 * t + a4) * t + a3) * t + a2) * t + a1) * t
    y = 1.0 - poly * jnp.exp(-ax * ax)
    return jnp.where(x >= 0.0, y, -y)


def _gelu(x):
    # PyTorch nn.GELU() default (erf-based).
    return 0.5 * x * (1.0 + _erf(x * 0.7071067811865475))


def _ln(x):
    # LayerNorm over the last axis; affine (gamma/beta) is folded into the next matmul.
    mu = jnp.mean(x, axis=-1, keepdims=True)
    xc = x - mu
    var = jnp.mean(xc * xc, axis=-1, keepdims=True)
    return xc * jax.lax.rsqrt(var + LN_EPS)


def _self_attn(q, k, v, mpcols, mqcols):
    """Talking-heads self-attention for one batch element.

    q/k/v: (n, INNER); the 1/sqrt(d) scale is pre-folded into q.  The pre-softmax
    head mix is applied as a column scale on K (per output head) and the
    post-softmax mix as a column scale on V; both are exact refactorings of the
    original einsums, so there are no SMEM scalar reads and no per-head-pair dots.
    """
    out = None
    for g in range(HEADS):
        dots = jax.lax.dot_general(q, k * mpcols[g:g + 1, :],
                                   (((1,), (1,)), ((), ())),
                                   preferred_element_type=jnp.float32)      # (n, n)
        m = jnp.max(dots, axis=-1, keepdims=True)
        e = jnp.exp(dots - m)
        a = e * pl.reciprocal(jnp.sum(e, axis=-1, keepdims=True), approx=True)
        contrib = jnp.dot(a, v * mqcols[g:g + 1, :],
                          preferred_element_type=jnp.float32)               # (n, INNER)
        out = contrib if out is None else out + contrib
    return out


def _cls_attn(q, k_self, v_self, k_ctx, v_ctx, mpcols, mqcols):
    """Class attention: one query (cls token), keys = [norm(cls)] U [patch tokens].

    The two key groups share one softmax max/denominator, which is exactly the
    softmax over the concatenated 17-token context without an in-kernel concat.
    """
    out = None
    for g in range(HEADS):
        mp_g = mpcols[g:g + 1, :]
        d0 = jnp.sum(q * (k_self * mp_g), axis=-1, keepdims=True)           # (1, 1)
        d1 = jax.lax.dot_general(q, k_ctx * mp_g, (((1,), (1,)), ((), ())),
                                 preferred_element_type=jnp.float32)        # (1, N)
        m = jnp.maximum(d0, jnp.max(d1, axis=-1, keepdims=True))
        e0 = jnp.exp(d0 - m)
        e1 = jnp.exp(d1 - m)
        inv = pl.reciprocal(e0 + jnp.sum(e1, axis=-1, keepdims=True), approx=True)
        mq_g = mqcols[g:g + 1, :]
        contrib = (e0 * inv) * (v_self * mq_g) + jnp.dot(
            e1 * inv, v_ctx * mq_g, preferred_element_type=jnp.float32)     # (1, INNER)
        out = contrib if out is None else out + contrib
    return out


# ----------------------------- the fused kernel ------------------------------------
def cait_kernel(patches_ref, pos_ref, slab_ref, out_ref):
    def W(name):
        # Static slice into the packed weight slab (free ref view + small VMEM load).
        r0, (r, c) = _LAYOUT[name]
        return slab_ref[r0:r0 + r, 0:c]

    n_rows = patches_ref.shape[0]                 # B * NUM_PATCHES (static)
    batch = n_rows // NUM_PATCHES

    # ---- patch embedding + positional embedding (patch_b folded into pos) ----
    x = jnp.dot(patches_ref[...], W("patch_w"),
                preferred_element_type=jnp.float32) + pos_ref[...]          # (B*N, DIM)
    # emb_dropout / dropout / layer_dropout are 0 -> identity (eval mode)

    # ---- patch transformer: LayerScale(PreNorm(Attn)) + LayerScale(PreNorm(FFN)) ----
    for l in range(DEPTH):
        p = f"p{l}"
        proj = jnp.dot(_ln(x), W(p + "_wqkv"),
                       preferred_element_type=jnp.float32) + W(p + "_bqkv")  # (B*N, 3*INNER)
        mpc, mqc = W(p + "_mpcols"), W(p + "_mqcols")
        att_rows = []
        for b in range(batch):
            blk = proj[b * NUM_PATCHES:(b + 1) * NUM_PATCHES]
            att_rows.append(_self_attn(blk[:, :INNER], blk[:, INNER:2 * INNER],
                                       blk[:, 2 * INNER:], mpc, mqc))
        att = att_rows[0] if batch == 1 else jnp.concatenate(att_rows, axis=0)
        x = x + jnp.dot(att, W(p + "_wo"),
                        preferred_element_type=jnp.float32) + W(p + "_bo")
        h = _gelu(jnp.dot(_ln(x), W(p + "_w1"),
                          preferred_element_type=jnp.float32) + W(p + "_b1"))
        x = x + jnp.dot(h, W(p + "_w2"),
                        preferred_element_type=jnp.float32) + W(p + "_b2")

    # ---- class transformer: queries = cls token, keys = [norm(cls), patch tokens] ----
    cls0 = W("cls_token")                                                    # (1, DIM)
    ys = [cls0 for _ in range(batch)]
    for l in range(CLS_DEPTH):
        cp = f"c{l}"
        wqkv, bqkv = W(cp + "_wqkv"), W(cp + "_bqkv")
        mpc, mqc = W(cp + "_mpcols"), W(cp + "_mqcols")
        wo, bo = W(cp + "_wo"), W(cp + "_bo")
        w1, b1 = W(cp + "_w1"), W(cp + "_b1")
        w2, b2 = W(cp + "_w2"), W(cp + "_b2")
        # Context projection of the (fixed) patch tokens: only the K|V columns.
        proj_ctx = jnp.dot(x, wqkv[:, INNER:],
                           preferred_element_type=jnp.float32) + bqkv[:, INNER:]
        for b in range(batch):
            y = ys[b]
            ps = jnp.dot(_ln(y), wqkv, preferred_element_type=jnp.float32) + bqkv  # (1, 3*INNER)
            ctx = proj_ctx[b * NUM_PATCHES:(b + 1) * NUM_PATCHES]                  # (N, 2*INNER)
            att = _cls_attn(ps[:, :INNER], ps[:, INNER:2 * INNER], ps[:, 2 * INNER:],
                            ctx[:, :INNER], ctx[:, INNER:], mpc, mqc)
            y = y + jnp.dot(att, wo, preferred_element_type=jnp.float32) + bo
            h = _gelu(jnp.dot(_ln(y), w1, preferred_element_type=jnp.float32) + b1)
            ys[b] = y + jnp.dot(h, w2, preferred_element_type=jnp.float32) + b2

    # ---- MLP head on the cls token (LN folded into head_w / head_b, 128-lane pad) ----
    head_w, head_b = W("head_w"), W("head_b")
    for b in range(batch):
        out_ref[b:b + 1, :] = jnp.dot(_ln(ys[b]), head_w,
                                      preferred_element_type=jnp.float32) + head_b


# ----------------------------- wrapper ---------------------------------------------
@jax.jit
def cait_forward(prepped, img):
    b, c, hh, ww = img.shape
    p = PATCH_SIZE
    h, w = hh // p, ww // p
    # einops 'b c (h p1) (w p2) -> b (h w) (p1 p2 c)', with batch folded into rows.
    patches = img.reshape(b, c, h, p, w, p).transpose(0, 2, 4, 3, 5, 1).reshape(
        b * h * w, p * p * c)                                                # (B*N, PATCH_DIM)
    pos_full = jnp.tile(prepped["pos_bias"], (b, 1))                         # (B*N, DIM)

    vmem = pl.BlockSpec(memory_space=pltpu.MemorySpace.VMEM)
    out = pl.pallas_call(
        cait_kernel,
        out_shape=jax.ShapeDtypeStruct((b, SLAB_COLS), jnp.float32),
        in_specs=[vmem, vmem, vmem],
        out_specs=vmem,
    )(patches, pos_full, prepped["slab"])
    return out[:, :NUM_CLASSES]


# ----------------------------- parameter prep (fold + pack) ------------------------
def prepare_params(params):
    """Fold LN affine / LayerScale / attn-scale / talking-heads mixes into the weights
    and pack everything into one lane-dense f32 slab.  Runs once, outside the jit."""
    t = {"patch_w": params["patch_w"]}
    for prefix, lkey in (("p", "patch_layers"), ("c", "cls_layers")):
        for l, lp in enumerate(params[lkey]):
            wqkv = lp["wqkv"] * lp["ln1_g"][:, None]
            bqkv = (lp["ln1_b"] @ lp["wqkv"])[None, :]
            # fold the 1/sqrt(d) attention scale into the q columns
            wqkv = wqkv.at[:, :INNER].multiply(ATTN_SCALE)
            bqkv = bqkv.at[:, :INNER].multiply(ATTN_SCALE)
            t[f"{prefix}{l}_wqkv"] = wqkv
            t[f"{prefix}{l}_bqkv"] = bqkv
            # talking-heads mixes as per-head column-scale vectors:
            #   pre : mpcols[g, h*Dh + j] = mix_pre[h, g]   (scales K columns)
            #   post: mqcols[g, g'*Dh + j] = mix_post[g, g'] (scales V columns)
            t[f"{prefix}{l}_mpcols"] = jnp.repeat(lp["mix_pre"].T, DIM_HEAD, axis=1)
            t[f"{prefix}{l}_mqcols"] = jnp.repeat(lp["mix_post"], DIM_HEAD, axis=1)
            t[f"{prefix}{l}_wo"] = lp["wo"] * lp["scale1"][None, :]
            t[f"{prefix}{l}_bo"] = (lp["bo"] * lp["scale1"])[None, :]
            t[f"{prefix}{l}_w1"] = lp["w1"] * lp["ln2_g"][:, None]
            t[f"{prefix}{l}_b1"] = (lp["b1"] + lp["ln2_b"] @ lp["w1"])[None, :]
            t[f"{prefix}{l}_w2"] = lp["w2"] * lp["scale2"][None, :]
            t[f"{prefix}{l}_b2"] = (lp["b2"] * lp["scale2"])[None, :]
    t["cls_token"] = params["cls_token"]
    head_w = params["head_w"] * params["head_ln_g"][:, None]
    head_b = params["head_b"] + params["head_ln_b"] @ params["head_w"]
    t["head_w"] = jnp.pad(head_w, ((0, 0), (0, SLAB_COLS - NUM_CLASSES)))
    t["head_b"] = jnp.pad(head_b[None, :], ((0, 0), (0, SLAB_COLS - NUM_CLASSES)))

    slab = jnp.zeros((_SLAB_ROWS, SLAB_COLS), jnp.float32)
    for name, arr in t.items():
        r0, shape = _LAYOUT[name]
        assert arr.shape == shape, (name, arr.shape, shape)
        slab = slab.at[r0:r0 + shape[0], :shape[1]].set(arr.astype(jnp.float32))
    return dict(slab=slab,
                pos_bias=params["pos_emb"] + params["patch_b"][None, :])     # (N, DIM)


# ----------------------------- deterministic parameter init ------------------------
def _normal(key, shape, std=0.02):
    return std * jax.random.normal(key, shape, dtype=jnp.float32)


def _init_layer(key, depth_ind):
    ks = jax.random.split(key, 6)
    d = depth_ind + 1
    init_eps = 0.1 if d <= 18 else (1e-5 if d <= 24 else 1e-6)
    return dict(
        ln1_g=jnp.ones((DIM,), jnp.float32),
        ln1_b=jnp.zeros((DIM,), jnp.float32),
        wqkv=_normal(ks[0], (DIM, 3 * INNER)),              # columns: [q | k | v]
        mix_pre=jax.random.normal(ks[1], (HEADS, HEADS), dtype=jnp.float32),
        mix_post=jax.random.normal(ks[2], (HEADS, HEADS), dtype=jnp.float32),
        wo=_normal(ks[3], (INNER, DIM)),
        bo=jnp.zeros((DIM,), jnp.float32),
        scale1=jnp.full((DIM,), init_eps, jnp.float32),
        ln2_g=jnp.ones((DIM,), jnp.float32),
        ln2_b=jnp.zeros((DIM,), jnp.float32),
        w1=_normal(ks[4], (DIM, MLP_DIM)),
        b1=jnp.zeros((MLP_DIM,), jnp.float32),
        w2=_normal(ks[5], (MLP_DIM, DIM)),
        b2=jnp.zeros((DIM,), jnp.float32),
        scale2=jnp.full((DIM,), init_eps, jnp.float32),
    )


def init_params(key):
    keys = jax.random.split(key, 4 + DEPTH + CLS_DEPTH)
    patch_layers = [_init_layer(keys[4 + i], i) for i in range(DEPTH)]
    cls_layers = [_init_layer(keys[4 + DEPTH + i], i) for i in range(CLS_DEPTH)]
    return dict(
        patch_w=_normal(keys[0], (PATCH_DIM, DIM)),
        patch_b=jnp.zeros((DIM,), jnp.float32),
        pos_emb=jax.random.normal(keys[1], (NUM_PATCHES, DIM), dtype=jnp.float32),
        cls_token=jax.random.normal(keys[2], (1, DIM), dtype=jnp.float32),
        head_ln_g=jnp.ones((DIM,), jnp.float32),
        head_ln_b=jnp.zeros((DIM,), jnp.float32),
        head_w=_normal(keys[3], (DIM, NUM_CLASSES)),
        head_b=jnp.zeros((NUM_CLASSES,), jnp.float32),
        patch_layers=patch_layers,
        cls_layers=cls_layers,
    )


if __name__ == "__main__":
    key = jax.random.PRNGKey(0)
    pkey, ikey = jax.random.split(key)
    params = init_params(pkey)
    prepped = prepare_params(params)
    img = jax.random.normal(ikey, (2, 3, IMAGE_SIZE, IMAGE_SIZE), dtype=jnp.float32)
    out = cait_forward(prepped, img)
    jax.block_until_ready(out)
    assert out.shape == (2, NUM_CLASSES)
    assert bool(jnp.all(jnp.isfinite(out)))
    print("KERNEL_OK")
</pallas_src>

<mosaic_0001>
module attributes {stable_mosaic.version = 11 : i64} {
  func.func @cait_kernel(%arg0: memref<32x48xf32, #tpu.memory_space<vmem>>, %arg1: memref<32x32xf32, #tpu.memory_space<vmem>>, %arg2: memref<672x128xf32, #tpu.memory_space<vmem>>, %arg3: memref<2x128xf32, #tpu.memory_space<vmem>>) attributes {dimension_semantics = [], scalar_prefetch = 0 : i64, scratch_operands = 0 : i64, tpu.core_type = #tpu.core_type<tc>} {
    %c0 = arith.constant 0 : index
    %c0_0 = arith.constant 0 : index
    %0 = vector.load %arg0[%c0, %c0_0] : memref<32x48xf32, #tpu.memory_space<vmem>>, vector<32x48xf32>
    %c0_1 = arith.constant 0 : index
    %c0_2 = arith.constant 0 : index
    %1 = vector.load %arg2[%c0_1, %c0_2] : memref<672x128xf32, #tpu.memory_space<vmem>>, vector<48x32xf32>
    %cst = arith.constant dense<0.000000e+00> : vector<32x32xf32>
    %2 = tpu.matmul %0, %1, %cst {dimension_numbers = #tpu.dot_dimension_numbers<[1], [0], [0], [1], [0, 0, 1, 1], [], []>} : vector<32x48xf32>, vector<48x32xf32>, vector<32x32xf32> -> vector<32x32xf32>
    %c0_3 = arith.constant 0 : index
    %c0_4 = arith.constant 0 : index
    %3 = vector.load %arg1[%c0_3, %c0_4] : memref<32x32xf32, #tpu.memory_space<vmem>>, vector<32x32xf32>
    %4 = arith.addf %2, %3 : vector<32x32xf32>
    %cst_5 = arith.constant dense<0.000000e+00> : vector<32xf32>
    %5 = vector.multi_reduction <add>, %4, %cst_5 [1] : vector<32x32xf32> to vector<32xf32>
    %6 = vector.shape_cast %5 : vector<32xf32> to vector<32x1xf32>
    %cst_6 = arith.constant 3.200000e+01 : f32
    %7 = vector.broadcast %cst_6 : f32 to vector<32x1xf32>
    %8 = arith.divf %6, %7 : vector<32x1xf32>
    %9 = vector.broadcast %8 : vector<32x1xf32> to vector<32x32xf32>
    %10 = arith.subf %4, %9 : vector<32x32xf32>
    %11 = arith.mulf %10, %10 : vector<32x32xf32>
    %cst_7 = arith.constant dense<0.000000e+00> : vector<32xf32>
    %12 = vector.multi_reduction <add>, %11, %cst_7 [1] : vector<32x32xf32> to vector<32xf32>
    %13 = vector.shape_cast %12 : vector<32xf32> to vector<32x1xf32>
    %cst_8 = arith.constant 3.200000e+01 : f32
    %14 = vector.broadcast %cst_8 : f32 to vector<32x1xf32>
    %15 = arith.divf %13, %14 : vector<32x1xf32>
    %cst_9 = arith.constant 9.99999974E-6 : f32
    %16 = vector.broadcast %cst_9 : f32 to vector<32x1xf32>
    %17 = arith.addf %15, %16 : vector<32x1xf32>
    %18 = math.rsqrt %17 : vector<32x1xf32>
    %19 = vector.broadcast %18 : vector<32x1xf32> to vector<32x32xf32>
    %20 = arith.mulf %10, %19 : vector<32x32xf32>
    %c48 = arith.constant 48 : index
    %c0_10 = arith.constant 0 : index
    %21 = vector.load %arg2[%c48, %c0_10] : memref<672x128xf32, #tpu.memory_space<vmem>>, vector<32x48xf32>
    %cst_11 = arith.constant dense<0.000000e+00> : vector<32x48xf32>
    %22 = tpu.matmul %20, %21, %cst_11 {dimension_numbers = #tpu.dot_dimension_numbers<[1], [0], [0], [1], [0, 0, 1, 1], [], []>} : vector<32x32xf32>, vector<32x48xf32>, vector<32x48xf32> -> vector<32x48xf32>
    %c80 = arith.constant 80 : index
    %c0_12 = arith.constant 0 : index
    %23 = vector.load %arg2[%c80, %c0_12] : memref<672x128xf32, #tpu.memory_space<vmem>>, vector<1x48xf32>
    %24 = vector.broadcast %23 : vector<1x48xf32> to vector<32x48xf32>
    %25 = arith.addf %22, %24 : vector<32x48xf32>
    %c88 = arith.constant 88 : index
    %c0_13 = arith.constant 0 : index
    %26 = vector.load %arg2[%c88, %c0_13] : memref<672x128xf32, #tpu.memory_space<vmem>>, vector<2x16xf32>
    %c96 = arith.constant 96 : index
    %c0_14 = arith.constant 0 : index
    %27 = vector.load %arg2[%c96, %c0_14] : memref<672x128xf32, #tpu.memory_space<vmem>>, vector<2x16xf32>
    %28 = vector.extract_strided_slice %25 {offsets = [0, 0], sizes = [16, 48], strides = [1, 1]} : vector<32x48xf32> to vector<16x48xf32>
    %29 = vector.extract_strided_slice %28 {offsets = [0, 0], sizes = [16, 16], strides = [1, 1]} : vector<16x48xf32> to vector<16x16xf32>
    %30 = vector.extract_strided_slice %28 {offsets = [0, 16], sizes = [16, 16], strides = [1, 1]} : vector<16x48xf32> to vector<16x16xf32>
    %31 = vector.extract_strided_slice %28 {offsets = [0, 32], sizes = [16, 16], strides = [1, 1]} : vector<16x48xf32> to vector<16x16xf32>
    %32 = vector.extract_strided_slice %26 {offsets = [0, 0], sizes = [1, 16], strides = [1, 1]} : vector<2x16xf32> to vector<1x16xf32>
    %33 = vector.broadcast %32 : vector<1x16xf32> to vector<16x16xf32>
    %34 = arith.mulf %30, %33 : vector<16x16xf32>
    %cst_15 = arith.constant dense<0.000000e+00> : vector<16x16xf32>
    %35 = tpu.matmul %29, %34, %cst_15 {dimension_numbers = #tpu.dot_dimension_numbers<[1], [1], [0], [0], [0, 0, 1, 0], [], []>} : vector<16x16xf32>, vector<16x16xf32>, vector<16x16xf32> -> vector<16x16xf32>
    %cst_16 = arith.constant dense<0xFF800000> : vector<16xf32>
    %36 = vector.multi_reduction <maximumf>, %35, %cst_16 [1] : vector<16x16xf32> to vector<16xf32>
    %37 = vector.shape_cast %36 : vector<16xf32> to vector<16x1xf32>
    %38 = vector.broadcast %37 : vector<16x1xf32> to vector<16x16xf32>
    %39 = arith.subf %35, %38 : vector<16x16xf32>
    %40 = math.exp %39 : vector<16x16xf32>
    %cst_17 = arith.constant dense<0.000000e+00> : vector<16xf32>
    %41 = vector.multi_reduction <add>, %40, %cst_17 [1] : vector<16x16xf32> to vector<16xf32>
    %42 = vector.shape_cast %41 : vector<16xf32> to vector<16x1xf32>
    %43 = tpu.reciprocal %42 {approx = true} : vector<16x1xf32> -> vector<16x1xf32>
    %44 = vector.broadcast %43 : vector<16x1xf32> to vector<16x16xf32>
    %45 = arith.mulf %40, %44 : vector<16x16xf32>
    %46 = vector.extract_strided_slice %27 {offsets = [0, 0], sizes = [1, 16], strides = [1, 1]} : vector<2x16xf32> to vector<1x16xf32>
    %47 = vector.broadcast %46 : vector<1x16xf32> to vector<16x16xf32>
    %48 = arith.mulf %31, %47 : vector<16x16xf32>
    %cst_18 = arith.constant dense<0.000000e+00> : vector<16x16xf32>
    %49 = tpu.matmul %45, %48, %cst_18 {dimension_numbers = #tpu.dot_dimension_numbers<[1], [0], [0], [1], [0, 0, 1, 1], [], []>} : vector<16x16xf32>, vector<16x16xf32>, vector<16x16xf32> -> vector<16x16xf32>
    %50 = vector.extract_strided_slice %26 {offsets = [1, 0], sizes = [1, 16], strides = [1, 1]} : vector<2x16xf32> to vector<1x16xf32>
    %51 = vector.broadcast %50 : vector<1x16xf32> to vector<16x16xf32>
    %52 = arith.mulf %30, %51 : vector<16x16xf32>
    %cst_19 = arith.constant dense<0.000000e+00> : vector<16x16xf32>
    %53 = tpu.matmul %29, %52, %cst_19 {dimension_numbers = #tpu.dot_dimension_numbers<[1], [1], [0], [0], [0, 0, 1, 0], [], []>} : vector<16x16xf32>, vector<16x16xf32>, vector<16x16xf32> -> vector<16x16xf32>
    %cst_20 = arith.constant dense<0xFF800000> : vector<16xf32>
    %54 = vector.multi_reduction <maximumf>, %53, %cst_20 [1] : vector<16x16xf32> to vector<16xf32>
    %55 = vector.shape_cast %54 : vector<16xf32> to vector<16x1xf32>
    %56 = vector.broadcast %55 : vector<16x1xf32> to vector<16x16xf32>
    %57 = arith.subf %53, %56 : vector<16x16xf32>
    %58 = math.exp %57 : vector<16x16xf32>
    %cst_21 = arith.constant dense<0.000000e+00> : vector<16xf32>
    %59 = vector.multi_reduction <add>, %58, %cst_21 [1] : vector<16x16xf32> to vector<16xf32>
    %60 = vector.shape_cast %59 : vector<16xf32> to vector<16x1xf32>
    %61 = tpu.reciprocal %60 {approx = true} : vector<16x1xf32> -> vector<16x1xf32>
    %62 = vector.broadcast %61 : vector<16x1xf32> to vector<16x16xf32>
    %63 = arith.mulf %58, %62 : vector<16x16xf32>
    %64 = vector.extract_strided_slice %27 {offsets = [1, 0], sizes = [1, 16], strides = [1, 1]} : vector<2x16xf32> to vector<1x16xf32>
    %65 = vector.broadcast %64 : vector<1x16xf32> to vector<16x16xf32>
    %66 = arith.mulf %31, %65 : vector<16x16xf32>
    %cst_22 = arith.constant dense<0.000000e+00> : vector<16x16xf32>
    %67 = tpu.matmul %63, %66, %cst_22 {dimension_numbers = #tpu.dot_dimension_numbers<[1], [0], [0], [1], [0, 0, 1, 1], [], []>} : vector<16x16xf32>, vector<16x16xf32>, vector<16x16xf32> -> vector<16x16xf32>
    %68 = arith.addf %49, %67 : vector<16x16xf32>
    %69 = vector.extract_strided_slice %25 {offsets = [16, 0], sizes = [16, 48], strides = [1, 1]} : vector<32x48xf32> to vector<16x48xf32>
    %70 = vector.extract_strided_slice %69 {offsets = [0, 0], sizes = [16, 16], strides = [1, 1]} : vector<16x48xf32> to vector<16x16xf32>
    %71 = vector.extract_strided_slice %69 {offsets = [0, 16], sizes = [16, 16], strides = [1, 1]} : vector<16x48xf32> to vector<16x16xf32>
    %72 = vector.extract_strided_slice %69 {offsets = [0, 32], sizes = [16, 16], strides = [1, 1]} : vector<16x48xf32> to vector<16x16xf32>
    %73 = vector.extract_strided_slice %26 {offsets = [0, 0], sizes = [1, 16], strides = [1, 1]} : vector<2x16xf32> to vector<1x16xf32>
    %74 = vector.broadcast %73 : vector<1x16xf32> to vector<16x16xf32>
    %75 = arith.mulf %71, %74 : vector<16x16xf32>
    %cst_23 = arith.constant dense<0.000000e+00> : vector<16x16xf32>
    %76 = tpu.matmul %70, %75, %cst_23 {dimension_numbers = #tpu.dot_dimension_numbers<[1], [1], [0], [0], [0, 0, 1, 0], [], []>} : vector<16x16xf32>, vector<16x16xf32>, vector<16x16xf32> -> vector<16x16xf32>
    %cst_24 = arith.constant dense<0xFF800000> : vector<16xf32>
    %77 = vector.multi_reduction <maximumf>, %76, %cst_24 [1] : vector<16x16xf32> to vector<16xf32>
    %78 = vector.shape_cast %77 : vector<16xf32> to vector<16x1xf32>
    %79 = vector.broadcast %78 : vector<16x1xf32> to vector<16x16xf32>
    %80 = arith.subf %76, %79 : vector<16x16xf32>
    %81 = math.exp %80 : vector<16x16xf32>
    %cst_25 = arith.constant dense<0.000000e+00> : vector<16xf32>
    %82 = vector.multi_reduction <add>, %81, %cst_25 [1] : vector<16x16xf32> to vector<16xf32>
    %83 = vector.shape_cast %82 : vector<16xf32> to vector<16x1xf32>
    %84 = tpu.reciprocal %83 {approx = true} : vector<16x1xf32> -> vector<16x1xf32>
    %85 = vector.broadcast %84 : vector<16x1xf32> to vector<16x16xf32>
    %86 = arith.mulf %81, %85 : vector<16x16xf32>
    %87 = vector.extract_strided_slice %27 {offsets = [0, 0], sizes = [1, 16], strides = [1, 1]} : vector<2x16xf32> to vector<1x16xf32>
    %88 = vector.broadcast %87 : vector<1x16xf32> to vector<16x16xf32>
    %89 = arith.mulf %72, %88 : vector<16x16xf32>
    %cst_26 = arith.constant dense<0.000000e+00> : vector<16x16xf32>
    %90 = tpu.matmul %86, %89, %cst_26 {dimension_numbers = #tpu.dot_dimension_numbers<[1], [0], [0], [1], [0, 0, 1, 1], [], []>} : vector<16x16xf32>, vector<16x16xf32>, vector<16x16xf32> -> vector<16x16xf32>
    %91 = vector.extract_strided_slice %26 {offsets = [1, 0], sizes = [1, 16], strides = [1, 1]} : vector<2x16xf32> to vector<1x16xf32>
    %92 = vector.broadcast %91 : vector<1x16xf32> to vector<16x16xf32>
    %93 = arith.mulf %71, %92 : vector<16x16xf32>
    %cst_27 = arith.constant dense<0.000000e+00> : vector<16x16xf32>
    %94 = tpu.matmul %70, %93, %cst_27 {dimension_numbers = #tpu.dot_dimension_numbers<[1], [1], [0], [0], [0, 0, 1, 0], [], []>} : vector<16x16xf32>, vector<16x16xf32>, vector<16x16xf32> -> vector<16x16xf32>
    %cst_28 = arith.constant dense<0xFF800000> : vector<16xf32>
    %95 = vector.multi_reduction <maximumf>, %94, %cst_28 [1] : vector<16x16xf32> to vector<16xf32>
    %96 = vector.shape_cast %95 : vector<16xf32> to vector<16x1xf32>
    %97 = vector.broadcast %96 : vector<16x1xf32> to vector<16x16xf32>
    %98 = arith.subf %94, %97 : vector<16x16xf32>
    %99 = math.exp %98 : vector<16x16xf32>
    %cst_29 = arith.constant dense<0.000000e+00> : vector<16xf32>
    %100 = vector.multi_reduction <add>, %99, %cst_29 [1] : vector<16x16xf32> to vector<16xf32>
    %101 = vector.shape_cast %100 : vector<16xf32> to vector<16x1xf32>
    %102 = tpu.reciprocal %101 {approx = true} : vector<16x1xf32> -> vector<16x1xf32>
    %103 = vector.broadcast %102 : vector<16x1xf32> to vector<16x16xf32>
    %104 = arith.mulf %99, %103 : vector<16x16xf32>
    %105 = vector.extract_strided_slice %27 {offsets = [1, 0], sizes = [1, 16], strides = [1, 1]} : vector<2x16xf32> to vector<1x16xf32>
    %106 = vector.broadcast %105 : vector<1x16xf32> to vector<16x16xf32>
    %107 = arith.mulf %72, %106 : vector<16x16xf32>
    %cst_30 = arith.constant dense<0.000000e+00> : vector<16x16xf32>
    %108 = tpu.matmul %104, %107, %cst_30 {dimension_numbers = #tpu.dot_dimension_numbers<[1], [0], [0], [1], [0, 0, 1, 1], [], []>} : vector<16x16xf32>, vector<16x16xf32>, vector<16x16xf32> -> vector<16x16xf32>
    %109 = arith.addf %90, %108 : vector<16x16xf32>
    %110 = tpu.concatenate %68, %109 in 0 : vector<16x16xf32>, vector<16x16xf32> -> vector<32x16xf32>
    %c104 = arith.constant 104 : index
    %c0_31 = arith.constant 0 : index
    %111 = vector.load %arg2[%c104, %c0_31] : memref<672x128xf32, #tpu.memory_space<vmem>>, vector<16x32xf32>
    %cst_32 = arith.constant dense<0.000000e+00> : vector<32x32xf32>
    %112 = tpu.matmul %110, %111, %cst_32 {dimension_numbers = #tpu.dot_dimension_numbers<[1], [0], [0], [1], [0, 0, 1, 1], [], []>} : vector<32x16xf32>, vector<16x32xf32>, vector<32x32xf32> -> vector<32x32xf32>
    %113 = arith.addf %4, %112 : vector<32x32xf32>
    %c120 = arith.constant 120 : index
    %c0_33 = arith.constant 0 : index
    %114 = vector.load %arg2[%c120, %c0_33] : memref<672x128xf32, #tpu.memory_space<vmem>>, vector<1x32xf32>
    %115 = vector.broadcast %114 : vector<1x32xf32> to vector<32x32xf32>
    %116 = arith.addf %113, %115 : vector<32x32xf32>
    %cst_34 = arith.constant dense<0.000000e+00> : vector<32xf32>
    %117 = vector.multi_reduction <add>, %116, %cst_34 [1] : vector<32x32xf32> to vector<32xf32>
    %118 = vector.shape_cast %117 : vector<32xf32> to vector<32x1xf32>
    %cst_35 = arith.constant 3.200000e+01 : f32
    %119 = vector.broadcast %cst_35 : f32 to vector<32x1xf32>
    %120 = arith.divf %118, %119 : vector<32x1xf32>
    %121 = vector.broadcast %120 : vector<32x1xf32> to vector<32x32xf32>
    %122 = arith.subf %116, %121 : vector<32x32xf32>
    %123 = arith.mulf %122, %122 : vector<32x32xf32>
    %cst_36 = arith.constant dense<0.000000e+00> : vector<32xf32>
    %124 = vector.multi_reduction <add>, %123, %cst_36 [1] : vector<32x32xf32> to vector<32xf32>
    %125 = vector.shape_cast %124 : vector<32xf32> to vector<32x1xf32>
    %cst_37 = arith.constant 3.200000e+01 : f32
    %126 = vector.broadcast %cst_37 : f32 to vector<32x1xf32>
    %127 = arith.divf %125, %126 : vector<32x1xf32>
    %cst_38 = arith.constant 9.99999974E-6 : f32
    %128 = vector.broadcast %cst_38 : f32 to vector<32x1xf32>
    %129 = arith.addf %127, %128 : vector<32x1xf32>
    %130 = math.rsqrt %129 : vector<32x1xf32>
    %131 = vector.broadcast %130 : vector<32x1xf32> to vector<32x32xf32>
    %132 = arith.mulf %122, %131 : vector<32x32xf32>
    %c128 = arith.constant 128 : index
    %c0_39 = arith.constant 0 : index
    %133 = vector.load %arg2[%c128, %c0_39] : memref<672x128xf32, #tpu.memory_space<vmem>>, vector<32x64xf32>
    %cst_40 = arith.constant dense<0.000000e+00> : vector<32x64xf32>
    %134 = tpu.matmul %132, %133, %cst_40 {dimension_numbers = #tpu.dot_dimension_numbers<[1], [0], [0], [1], [0, 0, 1, 1], [], []>} : vector<32x32xf32>, vector<32x64xf32>, vector<32x64xf32> -> vector<32x64xf32>
    %c160 = arith.constant 160 : index
    %c0_41 = arith.constant 0 : index
    %135 = vector.load %arg2[%c160, %c0_41] : memref<672x128xf32, #tpu.memory_space<vmem>>, vector<1x64xf32>
    %136 = vector.broadcast %135 : vector<1x64xf32> to vector<32x64xf32>
    %137 = arith.addf %134, %136 : vector<32x64xf32>
    %cst_42 = arith.constant 5.000000e-01 : f32
    %138 = vector.broadcast %cst_42 : f32 to vector<32x64xf32>
    %139 = arith.mulf %138, %137 : vector<32x64xf32>
    %cst_43 = arith.constant 0.707106769 : f32
    %140 = vector.broadcast %cst_43 : f32 to vector<32x64xf32>
    %141 = arith.mulf %137, %140 : vector<32x64xf32>
    %142 = math.absf %141 : vector<32x64xf32>
    %cst_44 = arith.constant 0.327591091 : f32
    %143 = vector.broadcast %cst_44 : f32 to vector<32x64xf32>
    %144 = arith.mulf %143, %142 : vector<32x64xf32>
    %cst_45 = arith.constant 1.000000e+00 : f32
    %145 = vector.broadcast %cst_45 : f32 to vector<32x64xf32>
    %146 = arith.addf %145, %144 : vector<32x64xf32>
    %cst_46 = arith.constant 1.000000e+00 : f32
    %147 = vector.broadcast %cst_46 : f32 to vector<32x64xf32>
    %148 = arith.divf %147, %146 : vector<32x64xf32>
    %cst_47 = arith.constant 1.06140542 : f32
    %149 = vector.broadcast %cst_47 : f32 to vector<32x64xf32>
    %150 = arith.mulf %149, %148 : vector<32x64xf32>
    %cst_48 = arith.constant -1.45315206 : f32
    %151 = vector.broadcast %cst_48 : f32 to vector<32x64xf32>
    %152 = arith.addf %150, %151 : vector<32x64xf32>
    %153 = arith.mulf %152, %148 : vector<32x64xf32>
    %cst_49 = arith.constant 1.42141378 : f32
    %154 = vector.broadcast %cst_49 : f32 to vector<32x64xf32>
    %155 = arith.addf %153, %154 : vector<32x64xf32>
    %156 = arith.mulf %155, %148 : vector<32x64xf32>
    %cst_50 = arith.constant -0.284496725 : f32
    %157 = vector.broadcast %cst_50 : f32 to vector<32x64xf32>
    %158 = arith.addf %156, %157 : vector<32x64xf32>
    %159 = arith.mulf %158, %148 : vector<32x64xf32>
    %cst_51 = arith.constant 0.254829586 : f32
    %160 = vector.broadcast %cst_51 : f32 to vector<32x64xf32>
    %161 = arith.addf %159, %160 : vector<32x64xf32>
    %162 = arith.mulf %161, %148 : vector<32x64xf32>
    %cst_52 = arith.constant 0.000000e+00 : f32
    %163 = vector.broadcast %cst_52 : f32 to vector<32x64xf32>
    %164 = arith.subf %163, %142 : vector<32x64xf32>
    %165 = arith.mulf %164, %142 : vector<32x64xf32>
    %166 = math.exp %165 : vector<32x64xf32>
    %167 = arith.mulf %162, %166 : vector<32x64xf32>
    %cst_53 = arith.constant 1.000000e+00 : f32
    %168 = vector.broadcast %cst_53 : f32 to vector<32x64xf32>
    %169 = arith.subf %168, %167 : vector<32x64xf32>
    %cst_54 = arith.constant 0.000000e+00 : f32
    %170 = vector.broadcast %cst_54 : f32 to vector<32x64xf32>
    %171 = arith.cmpf oge, %141, %170 : vector<32x64xf32>
    %cst_55 = arith.constant 0.000000e+00 : f32
    %172 = vector.broadcast %cst_55 : f32 to vector<32x64xf32>
    %173 = arith.subf %172, %169 : vector<32x64xf32>
    %174 = arith.select %171, %169, %173 : vector<32x64xi1>, vector<32x64xf32>
    %cst_56 = arith.constant 1.000000e+00 : f32
    %175 = vector.broadcast %cst_56 : f32 to vector<32x64xf32>
    %176 = arith.addf %175, %174 : vector<32x64xf32>
    %177 = arith.mulf %139, %176 : vector<32x64xf32>
    %c168 = arith.constant 168 : index
    %c0_57 = arith.constant 0 : index
    %178 = vector.load %arg2[%c168, %c0_57] : memref<672x128xf32, #tpu.memory_space<vmem>>, vector<64x32xf32>
    %cst_58 = arith.constant dense<0.000000e+00> : vector<32x32xf32>
    %179 = tpu.matmul %177, %178, %cst_58 {dimension_numbers = #tpu.dot_dimension_numbers<[1], [0], [0], [1], [0, 0, 1, 1], [], []>} : vector<32x64xf32>, vector<64x32xf32>, vector<32x32xf32> -> vector<32x32xf32>
    %180 = arith.addf %116, %179 : vector<32x32xf32>
    %c232 = arith.constant 232 : index
    %c0_59 = arith.constant 0 : index
    %181 = vector.load %arg2[%c232, %c0_59] : memref<672x128xf32, #tpu.memory_space<vmem>>, vector<1x32xf32>
    %182 = vector.broadcast %181 : vector<1x32xf32> to vector<32x32xf32>
    %183 = arith.addf %180, %182 : vector<32x32xf32>
    %cst_60 = arith.constant dense<0.000000e+00> : vector<32xf32>
    %184 = vector.multi_reduction <add>, %183, %cst_60 [1] : vector<32x32xf32> to vector<32xf32>
    %185 = vector.shape_cast %184 : vector<32xf32> to vector<32x1xf32>
    %cst_61 = arith.constant 3.200000e+01 : f32
    %186 = vector.broadcast %cst_61 : f32 to vector<32x1xf32>
    %187 = arith.divf %185, %186 : vector<32x1xf32>
    %188 = vector.broadcast %187 : vector<32x1xf32> to vector<32x32xf32>
    %189 = arith.subf %183, %188 : vector<32x32xf32>
    %190 = arith.mulf %189, %189 : vector<32x32xf32>
    %cst_62 = arith.constant dense<0.000000e+00> : vector<32xf32>
    %191 = vector.multi_reduction <add>, %190, %cst_62 [1] : vector<32x32xf32> to vector<32xf32>
    %192 = vector.shape_cast %191 : vector<32xf32> to vector<32x1xf32>
    %cst_63 = arith.constant 3.200000e+01 : f32
    %193 = vector.broadcast %cst_63 : f32 to vector<32x1xf32>
    %194 = arith.divf %192, %193 : vector<32x1xf32>
    %cst_64 = arith.constant 9.99999974E-6 : f32
    %195 = vector.broadcast %cst_64 : f32 to vector<32x1xf32>
    %196 = arith.addf %194, %195 : vector<32x1xf32>
    %197 = math.rsqrt %196 : vector<32x1xf32>
    %198 = vector.broadcast %197 : vector<32x1xf32> to vector<32x32xf32>
    %199 = arith.mulf %189, %198 : vector<32x32xf32>
    %c240 = arith.constant 240 : index
    %c0_65 = arith.constant 0 : index
    %200 = vector.load %arg2[%c240, %c0_65] : memref<672x128xf32, #tpu.memory_space<vmem>>, vector<32x48xf32>
    %cst_66 = arith.constant dense<0.000000e+00> : vector<32x48xf32>
    %201 = tpu.matmul %199, %200, %cst_66 {dimension_numbers = #tpu.dot_dimension_numbers<[1], [0], [0], [1], [0, 0, 1, 1], [], []>} : vector<32x32xf32>, vector<32x48xf32>, vector<32x48xf32> -> vector<32x48xf32>
    %c272 = arith.constant 272 : index
    %c0_67 = arith.constant 0 : index
    %202 = vector.load %arg2[%c272, %c0_67] : memref<672x128xf32, #tpu.memory_space<vmem>>, vector<1x48xf32>
    %203 = vector.broadcast %202 : vector<1x48xf32> to vector<32x48xf32>
    %204 = arith.addf %201, %203 : vector<32x48xf32>
    %c280 = arith.constant 280 : index
    %c0_68 = arith.constant 0 : index
    %205 = vector.load %arg2[%c280, %c0_68] : memref<672x128xf32, #tpu.memory_space<vmem>>, vector<2x16xf32>
    %c288 = arith.constant 288 : index
    %c0_69 = arith.constant 0 : index
    %206 = vector.load %arg2[%c288, %c0_69] : memref<672x128xf32, #tpu.memory_space<vmem>>, vector<2x16xf32>
    %207 = vector.extract_strided_slice %204 {offsets = [0, 0], sizes = [16, 48], strides = [1, 1]} : vector<32x48xf32> to vector<16x48xf32>
    %208 = vector.extract_strided_slice %207 {offsets = [0, 0], sizes = [16, 16], strides = [1, 1]} : vector<16x48xf32> to vector<16x16xf32>
    %209 = vector.extract_strided_slice %207 {offsets = [0, 16], sizes = [16, 16], strides = [1, 1]} : vector<16x48xf32> to vector<16x16xf32>
    %210 = vector.extract_strided_slice %207 {offsets = [0, 32], sizes = [16, 16], strides = [1, 1]} : vector<16x48xf32> to vector<16x16xf32>
    %211 = vector.extract_strided_slice %205 {offsets = [0, 0], sizes = [1, 16], strides = [1, 1]} : vector<2x16xf32> to vector<1x16xf32>
    %212 = vector.broadcast %211 : vector<1x16xf32> to vector<16x16xf32>
    %213 = arith.mulf %209, %212 : vector<16x16xf32>
    %cst_70 = arith.constant dense<0.000000e+00> : vector<16x16xf32>
    %214 = tpu.matmul %208, %213, %cst_70 {dimension_numbers = #tpu.dot_dimension_numbers<[1], [1], [0], [0], [0, 0, 1, 0], [], []>} : vector<16x16xf32>, vector<16x16xf32>, vector<16x16xf32> -> vector<16x16xf32>
    %cst_71 = arith.constant dense<0xFF800000> : vector<16xf32>
    %215 = vector.multi_reduction <maximumf>, %214, %cst_71 [1] : vector<16x16xf32> to vector<16xf32>
    %216 = vector.shape_cast %215 : vector<16xf32> to vector<16x1xf32>
    %217 = vector.broadcast %216 : vector<16x1xf32> to vector<16x16xf32>
    %218 = arith.subf %214, %217 : vector<16x16xf32>
    %219 = math.exp %218 : vector<16x16xf32>
    %cst_72 = arith.constant dense<0.000000e+00> : vector<16xf32>
    %220 = vector.multi_reduction <add>, %219, %cst_72 [1] : vector<16x16xf32> to vector<16xf32>
    %221 = vector.shape_cast %220 : vector<16xf32> to vector<16x1xf32>
    %222 = tpu.reciprocal %221 {approx = true} : vector<16x1xf32> -> vector<16x1xf32>
    %223 = vector.broadcast %222 : vector<16x1xf32> to vector<16x16xf32>
    %224 = arith.mulf %219, %223 : vector<16x16xf32>
    %225 = vector.extract_strided_slice %206 {offsets = [0, 0], sizes = [1, 16], strides = [1, 1]} : vector<2x16xf32> to vector<1x16xf32>
    %226 = vector.broadcast %225 : vector<1x16xf32> to vector<16x16xf32>
    %227 = arith.mulf %210, %226 : vector<16x16xf32>
    %cst_73 = arith.constant dense<0.000000e+00> : vector<16x16xf32>
    %228 = tpu.matmul %224, %227, %cst_73 {dimension_numbers = #tpu.dot_dimension_numbers<[1], [0], [0], [1], [0, 0, 1, 1], [], []>} : vector<16x16xf32>, vector<16x16xf32>, vector<16x16xf32> -> vector<16x16xf32>
    %229 = vector.extract_strided_slice %205 {offsets = [1, 0], sizes = [1, 16], strides = [1, 1]} : vector<2x16xf32> to vector<1x16xf32>
    %230 = vector.broadcast %229 : vector<1x16xf32> to vector<16x16xf32>
    %231 = arith.mulf %209, %230 : vector<16x16xf32>
    %cst_74 = arith.constant dense<0.000000e+00> : vector<16x16xf32>
    %232 = tpu.matmul %208, %231, %cst_74 {dimension_numbers = #tpu.dot_dimension_numbers<[1], [1], [0], [0], [0, 0, 1, 0], [], []>} : vector<16x16xf32>, vector<16x16xf32>, vector<16x16xf32> -> vector<16x16xf32>
    %cst_75 = arith.constant dense<0xFF800000> : vector<16xf32>
    %233 = vector.multi_reduction <maximumf>, %232, %cst_75 [1] : vector<16x16xf32> to vector<16xf32>
    %234 = vector.shape_cast %233 : vector<16xf32> to vector<16x1xf32>
    %235 = vector.broadcast %234 : vector<16x1xf32> to vector<16x16xf32>
    %236 = arith.subf %232, %235 : vector<16x16xf32>
    %237 = math.exp %236 : vector<16x16xf32>
    %cst_76 = arith.constant dense<0.000000e+00> : vector<16xf32>
    %238 = vector.multi_reduction <add>, %237, %cst_76 [1] : vector<16x16xf32> to vector<16xf32>
    %239 = vector.shape_cast %238 : vector<16xf32> to vector<16x1xf32>
    %240 = tpu.reciprocal %239 {approx = true} : vector<16x1xf32> -> vector<16x1xf32>
    %241 = vector.broadcast %240 : vector<16x1xf32> to vector<16x16xf32>
    %242 = arith.mulf %237, %241 : vector<16x16xf32>
    %243 = vector.extract_strided_slice %206 {offsets = [1, 0], sizes = [1, 16], strides = [1, 1]} : vector<2x16xf32> to vector<1x16xf32>
    %244 = vector.broadcast %243 : vector<1x16xf32> to vector<16x16xf32>
    %245 = arith.mulf %210, %244 : vector<16x16xf32>
    %cst_77 = arith.constant dense<0.000000e+00> : vector<16x16xf32>
    %246 = tpu.matmul %242, %245, %cst_77 {dimension_numbers = #tpu.dot_dimension_numbers<[1], [0], [0], [1], [0, 0, 1, 1], [], []>} : vector<16x16xf32>, vector<16x16xf32>, vector<16x16xf32> -> vector<16x16xf32>
    %247 = arith.addf %228, %246 : vector<16x16xf32>
    %248 = vector.extract_strided_slice %204 {offsets = [16, 0], sizes = [16, 48], strides = [1, 1]} : vector<32x48xf32> to vector<16x48xf32>
    %249 = vector.extract_strided_slice %248 {offsets = [0, 0], sizes = [16, 16], strides = [1, 1]} : vector<16x48xf32> to vector<16x16xf32>
    %250 = vector.extract_strided_slice %248 {offsets = [0, 16], sizes = [16, 16], strides = [1, 1]} : vector<16x48xf32> to vector<16x16xf32>
    %251 = vector.extract_strided_slice %248 {offsets = [0, 32], sizes = [16, 16], strides = [1, 1]} : vector<16x48xf32> to vector<16x16xf32>
    %252 = vector.extract_strided_slice %205 {offsets = [0, 0], sizes = [1, 16], strides = [1, 1]} : vector<2x16xf32> to vector<1x16xf32>
    %253 = vector.broadcast %252 : vector<1x16xf32> to vector<16x16xf32>
    %254 = arith.mulf %250, %253 : vector<16x16xf32>
    %cst_78 = arith.constant dense<0.000000e+00> : vector<16x16xf32>
    %255 = tpu.matmul %249, %254, %cst_78 {dimension_numbers = #tpu.dot_dimension_numbers<[1], [1], [0], [0], [0, 0, 1, 0], [], []>} : vector<16x16xf32>, vector<16x16xf32>, vector<16x16xf32> -> vector<16x16xf32>
    %cst_79 = arith.constant dense<0xFF800000> : vector<16xf32>
    %256 = vector.multi_reduction <maximumf>, %255, %cst_79 [1] : vector<16x16xf32> to vector<16xf32>
    %257 = vector.shape_cast %256 : vector<16xf32> to vector<16x1xf32>
    %258 = vector.broadcast %257 : vector<16x1xf32> to vector<16x16xf32>
    %259 = arith.subf %255, %258 : vector<16x16xf32>
    %260 = math.exp %259 : vector<16x16xf32>
    %cst_80 = arith.constant dense<0.000000e+00> : vector<16xf32>
    %261 = vector.multi_reduction <add>, %260, %cst_80 [1] : vector<16x16xf32> to vector<16xf32>
    %262 = vector.shape_cast %261 : vector<16xf32> to vector<16x1xf32>
    %263 = tpu.reciprocal %262 {approx = true} : vector<16x1xf32> -> vector<16x1xf32>
    %264 = vector.broadcast %263 : vector<16x1xf32> to vector<16x16xf32>
    %265 = arith.mulf %260, %264 : vector<16x16xf32>
    %266 = vector.extract_strided_slice %206 {offsets = [0, 0], sizes = [1, 16], strides = [1, 1]} : vector<2x16xf32> to vector<1x16xf32>
    %267 = vector.broadcast %266 : vector<1x16xf32> to vector<16x16xf32>
    %268 = arith.mulf %251, %267 : vector<16x16xf32>
    %cst_81 = arith.constant dense<0.000000e+00> : vector<16x16xf32>
    %269 = tpu.matmul %265, %268, %cst_81 {dimension_numbers = #tpu.dot_dimension_numbers<[1], [0], [0], [1], [0, 0, 1, 1], [], []>} : vector<16x16xf32>, vector<16x16xf32>, vector<16x16xf32> -> vector<16x16xf32>
    %270 = vector.extract_strided_slice %205 {offsets = [1, 0], sizes = [1, 16], strides = [1, 1]} : vector<2x16xf32> to vector<1x16xf32>
    %271 = vector.broadcast %270 : vector<1x16xf32> to vector<16x16xf32>
    %272 = arith.mulf %250, %271 : vector<16x16xf32>
    %cst_82 = arith.constant dense<0.000000e+00> : vector<16x16xf32>
    %273 = tpu.matmul %249, %272, %cst_82 {dimension_numbers = #tpu.dot_dimension_numbers<[1], [1], [0], [0], [0, 0, 1, 0], [], []>} : vector<16x16xf32>, vector<16x16xf32>, vector<16x16xf32> -> vector<16x16xf32>
    %cst_83 = arith.constant dense<0xFF800000> : vector<16xf32>
    %274 = vector.multi_reduction <maximumf>, %273, %cst_83 [1] : vector<16x16xf32> to vector<16xf32>
    %275 = vector.shape_cast %274 : vector<16xf32> to vector<16x1xf32>
    %276 = vector.broadcast %275 : vector<16x1xf32> to vector<16x16xf32>
    %277 = arith.subf %273, %276 : vector<16x16xf32>
    %278 = math.exp %277 : vector<16x16xf32>
    %cst_84 = arith.constant dense<0.000000e+00> : vector<16xf32>
    %279 = vector.multi_reduction <add>, %278, %cst_84 [1] : vector<16x16xf32> to vector<16xf32>
    %280 = vector.shape_cast %279 : vector<16xf32> to vector<16x1xf32>
    %281 = tpu.reciprocal %280 {approx = true} : vector<16x1xf32> -> vector<16x1xf32>
    %282 = vector.broadcast %281 : vector<16x1xf32> to vector<16x16xf32>
    %283 = arith.mulf %278, %282 : vector<16x16xf32>
    %284 = vector.extract_strided_slice %206 {offsets = [1, 0], sizes = [1, 16], strides = [1, 1]} : vector<2x16xf32> to vector<1x16xf32>
    %285 = vector.broadcast %284 : vector<1x16xf32> to vector<16x16xf32>
    %286 = arith.mulf %251, %285 : vector<16x16xf32>
    %cst_85 = arith.constant dense<0.000000e+00> : vector<16x16xf32>
    %287 = tpu.matmul %283, %286, %cst_85 {dimension_numbers = #tpu.dot_dimension_numbers<[1], [0], [0], [1], [0, 0, 1, 1], [], []>} : vector<16x16xf32>, vector<16x16xf32>, vector<16x16xf32> -> vector<16x16xf32>
    %288 = arith.addf %269, %287 : vector<16x16xf32>
    %289 = tpu.concatenate %247, %288 in 0 : vector<16x16xf32>, vector<16x16xf32> -> vector<32x16xf32>
    %c296 = arith.constant 296 : index
    %c0_86 = arith.constant 0 : index
    %290 = vector.load %arg2[%c296, %c0_86] : memref<672x128xf32, #tpu.memory_space<vmem>>, vector<16x32xf32>
    %cst_87 = arith.constant dense<0.000000e+00> : vector<32x32xf32>
    %291 = tpu.matmul %289, %290, %cst_87 {dimension_numbers = #tpu.dot_dimension_numbers<[1], [0], [0], [1], [0, 0, 1, 1], [], []>} : vector<32x16xf32>, vector<16x32xf32>, vector<32x32xf32> -> vector<32x32xf32>
    %292 = arith.addf %183, %291 : vector<32x32xf32>
    %c312 = arith.constant 312 : index
    %c0_88 = arith.constant 0 : index
    %293 = vector.load %arg2[%c312, %c0_88] : memref<672x128xf32, #tpu.memory_space<vmem>>, vector<1x32xf32>
    %294 = vector.broadcast %293 : vector<1x32xf32> to vector<32x32xf32>
    %295 = arith.addf %292, %294 : vector<32x32xf32>
    %cst_89 = arith.constant dense<0.000000e+00> : vector<32xf32>
    %296 = vector.multi_reduction <add>, %295, %cst_89 [1] : vector<32x32xf32> to vector<32xf32>
    %297 = vector.shape_cast %296 : vector<32xf32> to vector<32x1xf32>
    %cst_90 = arith.constant 3.200000e+01 : f32
    %298 = vector.broadcast %cst_90 : f32 to vector<32x1xf32>
    %299 = arith.divf %297, %298 : vector<32x1xf32>
    %300 = vector.broadcast %299 : vector<32x1xf32> to vector<32x32xf32>
    %301 = arith.subf %295, %300 : vector<32x32xf32>
    %302 = arith.mulf %301, %301 : vector<32x32xf32>
    %cst_91 = arith.constant dense<0.000000e+00> : vector<32xf32>
    %303 = vector.multi_reduction <add>, %302, %cst_91 [1] : vector<32x32xf32> to vector<32xf32>
    %304 = vector.shape_cast %303 : vector<32xf32> to vector<32x1xf32>
    %cst_92 = arith.constant 3.200000e+01 : f32
    %305 = vector.broadcast %cst_92 : f32 to vector<32x1xf32>
    %306 = arith.divf %304, %305 : vector<32x1xf32>
    %cst_93 = arith.constant 9.99999974E-6 : f32
    %307 = vector.broadcast %cst_93 : f32 to vector<32x1xf32>
    %308 = arith.addf %306, %307 : vector<32x1xf32>
    %309 = math.rsqrt %308 : vector<32x1xf32>
    %310 = vector.broadcast %309 : vector<32x1xf32> to vector<32x32xf32>
    %311 = arith.mulf %301, %310 : vector<32x32xf32>
    %c320 = arith.constant 320 : index
    %c0_94 = arith.constant 0 : index
    %312 = vector.load %arg2[%c320, %c0_94] : memref<672x128xf32, #tpu.memory_space<vmem>>, vector<32x64xf32>
    %cst_95 = arith.constant dense<0.000000e+00> : vector<32x64xf32>
    %313 = tpu.matmul %311, %312, %cst_95 {dimension_numbers = #tpu.dot_dimension_numbers<[1], [0], [0], [1], [0, 0, 1, 1], [], []>} : vector<32x32xf32>, vector<32x64xf32>, vector<32x64xf32> -> vector<32x64xf32>
    %c352 = arith.constant 352 : index
    %c0_96 = arith.constant 0 : index
    %314 = vector.load %arg2[%c352, %c0_96] : memref<672x128xf32, #tpu.memory_space<vmem>>, vector<1x64xf32>
    %315 = vector.broadcast %314 : vector<1x64xf32> to vector<32x64xf32>
    %316 = arith.addf %313, %315 : vector<32x64xf32>
    %cst_97 = arith.constant 5.000000e-01 : f32
    %317 = vector.broadcast %cst_97 : f32 to vector<32x64xf32>
    %318 = arith.mulf %317, %316 : vector<32x64xf32>
    %cst_98 = arith.constant 0.707106769 : f32
    %319 = vector.broadcast %cst_98 : f32 to vector<32x64xf32>
    %320 = arith.mulf %316, %319 : vector<32x64xf32>
    %321 = math.absf %320 : vector<32x64xf32>
    %cst_99 = arith.constant 0.327591091 : f32
    %322 = vector.broadcast %cst_99 : f32 to vector<32x64xf32>
    %323 = arith.mulf %322, %321 : vector<32x64xf32>
    %cst_100 = arith.constant 1.000000e+00 : f32
    %324 = vector.broadcast %cst_100 : f32 to vector<32x64xf32>
    %325 = arith.addf %324, %323 : vector<32x64xf32>
    %cst_101 = arith.constant 1.000000e+00 : f32
    %326 = vector.broadcast %cst_101 : f32 to vector<32x64xf32>
    %327 = arith.divf %326, %325 : vector<32x64xf32>
    %cst_102 = arith.constant 1.06140542 : f32
    %328 = vector.broadcast %cst_102 : f32 to vector<32x64xf32>
    %329 = arith.mulf %328, %327 : vector<32x64xf32>
    %cst_103 = arith.constant -1.45315206 : f32
    %330 = vector.broadcast %cst_103 : f32 to vector<32x64xf32>
    %331 = arith.addf %329, %330 : vector<32x64xf32>
    %332 = arith.mulf %331, %327 : vector<32x64xf32>
    %cst_104 = arith.constant 1.42141378 : f32
    %333 = vector.broadcast %cst_104 : f32 to vector<32x64xf32>
    %334 = arith.addf %332, %333 : vector<32x64xf32>
    %335 = arith.mulf %334, %327 : vector<32x64xf32>
    %cst_105 = arith.constant -0.284496725 : f32
    %336 = vector.broadcast %cst_105 : f32 to vector<32x64xf32>
    %337 = arith.addf %335, %336 : vector<32x64xf32>
    %338 = arith.mulf %337, %327 : vector<32x64xf32>
    %cst_106 = arith.constant 0.254829586 : f32
    %339 = vector.broadcast %cst_106 : f32 to vector<32x64xf32>
    %340 = arith.addf %338, %339 : vector<32x64xf32>
    %341 = arith.mulf %340, %327 : vector<32x64xf32>
    %cst_107 = arith.constant 0.000000e+00 : f32
    %342 = vector.broadcast %cst_107 : f32 to vector<32x64xf32>
    %343 = arith.subf %342, %321 : vector<32x64xf32>
    %344 = arith.mulf %343, %321 : vector<32x64xf32>
    %345 = math.exp %344 : vector<32x64xf32>
    %346 = arith.mulf %341, %345 : vector<32x64xf32>
    %cst_108 = arith.constant 1.000000e+00 : f32
    %347 = vector.broadcast %cst_108 : f32 to vector<32x64xf32>
    %348 = arith.subf %347, %346 : vector<32x64xf32>
    %cst_109 = arith.constant 0.000000e+00 : f32
    %349 = vector.broadcast %cst_109 : f32 to vector<32x64xf32>
    %350 = arith.cmpf oge, %320, %349 : vector<32x64xf32>
    %cst_110 = arith.constant 0.000000e+00 : f32
    %351 = vector.broadcast %cst_110 : f32 to vector<32x64xf32>
    %352 = arith.subf %351, %348 : vector<32x64xf32>
    %353 = arith.select %350, %348, %352 : vector<32x64xi1>, vector<32x64xf32>
    %cst_111 = arith.constant 1.000000e+00 : f32
    %354 = vector.broadcast %cst_111 : f32 to vector<32x64xf32>
    %355 = arith.addf %354, %353 : vector<32x64xf32>
    %356 = arith.mulf %318, %355 : vector<32x64xf32>
    %c360 = arith.constant 360 : index
    %c0_112 = arith.constant 0 : index
    %357 = vector.load %arg2[%c360, %c0_112] : memref<672x128xf32, #tpu.memory_space<vmem>>, vector<64x32xf32>
    %cst_113 = arith.constant dense<0.000000e+00> : vector<32x32xf32>
    %358 = tpu.matmul %356, %357, %cst_113 {dimension_numbers = #tpu.dot_dimension_numbers<[1], [0], [0], [1], [0, 0, 1, 1], [], []>} : vector<32x64xf32>, vector<64x32xf32>, vector<32x32xf32> -> vector<32x32xf32>
    %359 = arith.addf %295, %358 : vector<32x32xf32>
    %c424 = arith.constant 424 : index
    %c0_114 = arith.constant 0 : index
    %360 = vector.load %arg2[%c424, %c0_114] : memref<672x128xf32, #tpu.memory_space<vmem>>, vector<1x32xf32>
    %361 = vector.broadcast %360 : vector<1x32xf32> to vector<32x32xf32>
    %362 = arith.addf %359, %361 : vector<32x32xf32>
    %c624 = arith.constant 624 : index
    %c0_115 = arith.constant 0 : index
    %363 = vector.load %arg2[%c624, %c0_115] : memref<672x128xf32, #tpu.memory_space<vmem>>, vector<1x32xf32>
    %c432 = arith.constant 432 : index
    %c0_116 = arith.constant 0 : index
    %364 = vector.load %arg2[%c432, %c0_116] : memref<672x128xf32, #tpu.memory_space<vmem>>, vector<32x48xf32>
    %c464 = arith.constant 464 : index
    %c0_117 = arith.constant 0 : index
    %365 = vector.load %arg2[%c464, %c0_117] : memref<672x128xf32, #tpu.memory_space<vmem>>, vector<1x48xf32>
    %c472 = arith.constant 472 : index
    %c0_118 = arith.constant 0 : index
    %366 = vector.load %arg2[%c472, %c0_118] : memref<672x128xf32, #tpu.memory_space<vmem>>, vector<2x16xf32>
    %c480 = arith.constant 480 : index
    %c0_119 = arith.constant 0 : index
    %367 = vector.load %arg2[%c480, %c0_119] : memref<672x128xf32, #tpu.memory_space<vmem>>, vector<2x16xf32>
    %c488 = arith.constant 488 : index
    %c0_120 = arith.constant 0 : index
    %368 = vector.load %arg2[%c488, %c0_120] : memref<672x128xf32, #tpu.memory_space<vmem>>, vector<16x32xf32>
    %c504 = arith.constant 504 : index
    %c0_121 = arith.constant 0 : index
    %369 = vector.load %arg2[%c504, %c0_121] : memref<672x128xf32, #tpu.memory_space<vmem>>, vector<1x32xf32>
    %c512 = arith.constant 512 : index
    %c0_122 = arith.constant 0 : index
    %370 = vector.load %arg2[%c512, %c0_122] : memref<672x128xf32, #tpu.memory_space<vmem>>, vector<32x64xf32>
    %c544 = arith.constant 544 : index
    %c0_123 = arith.constant 0 : index
    %371 = vector.load %arg2[%c544, %c0_123] : memref<672x128xf32, #tpu.memory_space<vmem>>, vector<1x64xf32>
    %c552 = arith.constant 552 : index
    %c0_124 = arith.constant 0 : index
    %372 = vector.load %arg2[%c552, %c0_124] : memref<672x128xf32, #tpu.memory_space<vmem>>, vector<64x32xf32>
    %c616 = arith.constant 616 : index
    %c0_125 = arith.constant 0 : index
    %373 = vector.load %arg2[%c616, %c0_125] : memref<672x128xf32, #tpu.memory_space<vmem>>, vector<1x32xf32>
    %374 = vector.extract_strided_slice %364 {offsets = [0, 16], sizes = [32, 32], strides = [1, 1]} : vector<32x48xf32> to vector<32x32xf32>
    %cst_126 = arith.constant dense<0.000000e+00> : vector<32x32xf32>
    %375 = tpu.matmul %362, %374, %cst_126 {dimension_numbers = #tpu.dot_dimension_numbers<[1], [0], [0], [1], [0, 0, 1, 1], [], []>} : vector<32x32xf32>, vector<32x32xf32>, vector<32x32xf32> -> vector<32x32xf32>
    %376 = vector.extract_strided_slice %365 {offsets = [0, 16], sizes = [1, 32], strides = [1, 1]} : vector<1x48xf32> to vector<1x32xf32>
    %377 = vector.broadcast %376 : vector<1x32xf32> to vector<32x32xf32>
    %378 = arith.addf %375, %377 : vector<32x32xf32>
    %cst_127 = arith.constant dense<0.000000e+00> : vector<1xf32>
    %379 = vector.multi_reduction <add>, %363, %cst_127 [1] : vector<1x32xf32> to vector<1xf32>
    %380 = vector.shape_cast %379 : vector<1xf32> to vector<1x1xf32>
    %cst_128 = arith.constant 3.200000e+01 : f32
    %381 = vector.broadcast %cst_128 : f32 to vector<1x1xf32>
    %382 = arith.divf %380, %381 : vector<1x1xf32>
    %383 = vector.broadcast %382 : vector<1x1xf32> to vector<1x32xf32>
    %384 = arith.subf %363, %383 : vector<1x32xf32>
    %385 = arith.mulf %384, %384 : vector<1x32xf32>
    %cst_129 = arith.constant dense<0.000000e+00> : vector<1xf32>
    %386 = vector.multi_reduction <add>, %385, %cst_129 [1] : vector<1x32xf32> to vector<1xf32>
    %387 = vector.shape_cast %386 : vector<1xf32> to vector<1x1xf32>
    %cst_130 = arith.constant 3.200000e+01 : f32
    %388 = vector.broadcast %cst_130 : f32 to vector<1x1xf32>
    %389 = arith.divf %387, %388 : vector<1x1xf32>
    %cst_131 = arith.constant 9.99999974E-6 : f32
    %390 = vector.broadcast %cst_131 : f32 to vector<1x1xf32>
    %391 = arith.addf %389, %390 : vector<1x1xf32>
    %392 = math.rsqrt %391 : vector<1x1xf32>
    %393 = vector.broadcast %392 : vector<1x1xf32> to vector<1x32xf32>
    %394 = arith.mulf %384, %393 : vector<1x32xf32>
    %cst_132 = arith.constant dense<0.000000e+00> : vector<1x48xf32>
    %395 = tpu.matmul %394, %364, %cst_132 {dimension_numbers = #tpu.dot_dimension_numbers<[1], [0], [0], [1], [0, 0, 1, 1], [], []>} : vector<1x32xf32>, vector<32x48xf32>, vector<1x48xf32> -> vector<1x48xf32>
    %396 = arith.addf %395, %365 : vector<1x48xf32>
    %397 = vector.extract_strided_slice %378 {offsets = [0, 0], sizes = [16, 32], strides = [1, 1]} : vector<32x32xf32> to vector<16x32xf32>
    %398 = vector.extract_strided_slice %396 {offsets = [0, 0], sizes = [1, 16], strides = [1, 1]} : vector<1x48xf32> to vector<1x16xf32>
    %399 = vector.extract_strided_slice %396 {offsets = [0, 16], sizes = [1, 16], strides = [1, 1]} : vector<1x48xf32> to vector<1x16xf32>
    %400 = vector.extract_strided_slice %396 {offsets = [0, 32], sizes = [1, 16], strides = [1, 1]} : vector<1x48xf32> to vector<1x16xf32>
    %401 = vector.extract_strided_slice %397 {offsets = [0, 0], sizes = [16, 16], strides = [1, 1]} : vector<16x32xf32> to vector<16x16xf32>
    %402 = vector.extract_strided_slice %397 {offsets = [0, 16], sizes = [16, 16], strides = [1, 1]} : vector<16x32xf32> to vector<16x16xf32>
    %403 = vector.extract_strided_slice %366 {offsets = [0, 0], sizes = [1, 16], strides = [1, 1]} : vector<2x16xf32> to vector<1x16xf32>
    %404 = arith.mulf %399, %403 : vector<1x16xf32>
    %405 = arith.mulf %398, %404 : vector<1x16xf32>
    %cst_133 = arith.constant dense<0.000000e+00> : vector<1xf32>
    %406 = vector.multi_reduction <add>, %405, %cst_133 [1] : vector<1x16xf32> to vector<1xf32>
    %407 = vector.shape_cast %406 : vector<1xf32> to vector<1x1xf32>
    %408 = vector.broadcast %403 : vector<1x16xf32> to vector<16x16xf32>
    %409 = arith.mulf %401, %408 : vector<16x16xf32>
    %cst_134 = arith.constant dense<0.000000e+00> : vector<1x16xf32>
    %410 = tpu.matmul %398, %409, %cst_134 {dimension_numbers = #tpu.dot_dimension_numbers<[1], [1], [0], [0], [0, 0, 1, 0], [], []>} : vector<1x16xf32>, vector<16x16xf32>, vector<1x16xf32> -> vector<1x16xf32>
    %cst_135 = arith.constant dense<0xFF800000> : vector<1xf32>
    %411 = vector.multi_reduction <maximumf>, %410, %cst_135 [1] : vector<1x16xf32> to vector<1xf32>
    %412 = vector.shape_cast %411 : vector<1xf32> to vector<1x1xf32>
    %413 = arith.maximumf %407, %412 : vector<1x1xf32>
    %414 = arith.subf %407, %413 : vector<1x1xf32>
    %415 = math.exp %414 : vector<1x1xf32>
    %416 = vector.broadcast %413 : vector<1x1xf32> to vector<1x16xf32>
    %417 = arith.subf %410, %416 : vector<1x16xf32>
    %418 = math.exp %417 : vector<1x16xf32>
    %cst_136 = arith.constant dense<0.000000e+00> : vector<1xf32>
    %419 = vector.multi_reduction <add>, %418, %cst_136 [1] : vector<1x16xf32> to vector<1xf32>
    %420 = vector.shape_cast %419 : vector<1xf32> to vector<1x1xf32>
    %421 = arith.addf %415, %420 : vector<1x1xf32>
    %422 = tpu.reciprocal %421 {approx = true} : vector<1x1xf32> -> vector<1x1xf32>
    %423 = vector.extract_strided_slice %367 {offsets = [0, 0], sizes = [1, 16], strides = [1, 1]} : vector<2x16xf32> to vector<1x16xf32>
    %424 = arith.mulf %415, %422 : vector<1x1xf32>
    %425 = arith.mulf %400, %423 : vector<1x16xf32>
    %426 = vector.broadcast %424 : vector<1x1xf32> to vector<1x16xf32>
    %427 = arith.mulf %426, %425 : vector<1x16xf32>
    %428 = vector.broadcast %422 : vector<1x1xf32> to vector<1x16xf32>
    %429 = arith.mulf %418, %428 : vector<1x16xf32>
    %430 = vector.broadcast %423 : vector<1x16xf32> to vector<16x16xf32>
    %431 = arith.mulf %402, %430 : vector<16x16xf32>
    %cst_137 = arith.constant dense<0.000000e+00> : vector<1x16xf32>
    %432 = tpu.matmul %429, %431, %cst_137 {dimension_numbers = #tpu.dot_dimension_numbers<[1], [0], [0], [1], [0, 0, 1, 1], [], []>} : vector<1x16xf32>, vector<16x16xf32>, vector<1x16xf32> -> vector<1x16xf32>
    %433 = arith.addf %427, %432 : vector<1x16xf32>
    %434 = vector.extract_strided_slice %366 {offsets = [1, 0], sizes = [1, 16], strides = [1, 1]} : vector<2x16xf32> to vector<1x16xf32>
    %435 = arith.mulf %399, %434 : vector<1x16xf32>
    %436 = arith.mulf %398, %435 : vector<1x16xf32>
    %cst_138 = arith.constant dense<0.000000e+00> : vector<1xf32>
    %437 = vector.multi_reduction <add>, %436, %cst_138 [1] : vector<1x16xf32> to vector<1xf32>
    %438 = vector.shape_cast %437 : vector<1xf32> to vector<1x1xf32>
    %439 = vector.broadcast %434 : vector<1x16xf32> to vector<16x16xf32>
    %440 = arith.mulf %401, %439 : vector<16x16xf32>
    %cst_139 = arith.constant dense<0.000000e+00> : vector<1x16xf32>
    %441 = tpu.matmul %398, %440, %cst_139 {dimension_numbers = #tpu.dot_dimension_numbers<[1], [1], [0], [0], [0, 0, 1, 0], [], []>} : vector<1x16xf32>, vector<16x16xf32>, vector<1x16xf32> -> vector<1x16xf32>
    %cst_140 = arith.constant dense<0xFF800000> : vector<1xf32>
    %442 = vector.multi_reduction <maximumf>, %441, %cst_140 [1] : vector<1x16xf32> to vector<1xf32>
    %443 = vector.shape_cast %442 : vector<1xf32> to vector<1x1xf32>
    %444 = arith.maximumf %438, %443 : vector<1x1xf32>
    %445 = arith.subf %438, %444 : vector<1x1xf32>
    %446 = math.exp %445 : vector<1x1xf32>
    %447 = vector.broadcast %444 : vector<1x1xf32> to vector<1x16xf32>
    %448 = arith.subf %441, %447 : vector<1x16xf32>
    %449 = math.exp %448 : vector<1x16xf32>
    %cst_141 = arith.constant dense<0.000000e+00> : vector<1xf32>
    %450 = vector.multi_reduction <add>, %449, %cst_141 [1] : vector<1x16xf32> to vector<1xf32>
    %451 = vector.shape_cast %450 : vector<1xf32> to vector<1x1xf32>
    %452 = arith.addf %446, %451 : vector<1x1xf32>
    %453 = tpu.reciprocal %452 {approx = true} : vector<1x1xf32> -> vector<1x1xf32>
    %454 = vector.extract_strided_slice %367 {offsets = [1, 0], sizes = [1, 16], strides = [1, 1]} : vector<2x16xf32> to vector<1x16xf32>
    %455 = arith.mulf %446, %453 : vector<1x1xf32>
    %456 = arith.mulf %400, %454 : vector<1x16xf32>
    %457 = vector.broadcast %455 : vector<1x1xf32> to vector<1x16xf32>
    %458 = arith.mulf %457, %456 : vector<1x16xf32>
    %459 = vector.broadcast %453 : vector<1x1xf32> to vector<1x16xf32>
    %460 = arith.mulf %449, %459 : vector<1x16xf32>
    %461 = vector.broadcast %454 : vector<1x16xf32> to vector<16x16xf32>
    %462 = arith.mulf %402, %461 : vector<16x16xf32>
    %cst_142 = arith.constant dense<0.000000e+00> : vector<1x16xf32>
    %463 = tpu.matmul %460, %462, %cst_142 {dimension_numbers = #tpu.dot_dimension_numbers<[1], [0], [0], [1], [0, 0, 1, 1], [], []>} : vector<1x16xf32>, vector<16x16xf32>, vector<1x16xf32> -> vector<1x16xf32>
    %464 = arith.addf %458, %463 : vector<1x16xf32>
    %465 = arith.addf %433, %464 : vector<1x16xf32>
    %cst_143 = arith.constant dense<0.000000e+00> : vector<1x32xf32>
    %466 = tpu.matmul %465, %368, %cst_143 {dimension_numbers = #tpu.dot_dimension_numbers<[1], [0], [0], [1], [0, 0, 1, 1], [], []>} : vector<1x16xf32>, vector<16x32xf32>, vector<1x32xf32> -> vector<1x32xf32>
    %467 = arith.addf %363, %466 : vector<1x32xf32>
    %468 = arith.addf %467, %369 : vector<1x32xf32>
    %cst_144 = arith.constant dense<0.000000e+00> : vector<1xf32>
    %469 = vector.multi_reduction <add>, %468, %cst_144 [1] : vector<1x32xf32> to vector<1xf32>
    %470 = vector.shape_cast %469 : vector<1xf32> to vector<1x1xf32>
    %cst_145 = arith.constant 3.200000e+01 : f32
    %471 = vector.broadcast %cst_145 : f32 to vector<1x1xf32>
    %472 = arith.divf %470, %471 : vector<1x1xf32>
    %473 = vector.broadcast %472 : vector<1x1xf32> to vector<1x32xf32>
    %474 = arith.subf %468, %473 : vector<1x32xf32>
    %475 = arith.mulf %474, %474 : vector<1x32xf32>
    %cst_146 = arith.constant dense<0.000000e+00> : vector<1xf32>
    %476 = vector.multi_reduction <add>, %475, %cst_146 [1] : vector<1x32xf32> to vector<1xf32>
    %477 = vector.shape_cast %476 : vector<1xf32> to vector<1x1xf32>
    %cst_147 = arith.constant 3.200000e+01 : f32
    %478 = vector.broadcast %cst_147 : f32 to vector<1x1xf32>
    %479 = arith.divf %477, %478 : vector<1x1xf32>
    %cst_148 = arith.constant 9.99999974E-6 : f32
    %480 = vector.broadcast %cst_148 : f32 to vector<1x1xf32>
    %481 = arith.addf %479, %480 : vector<1x1xf32>
    %482 = math.rsqrt %481 : vector<1x1xf32>
    %483 = vector.broadcast %482 : vector<1x1xf32> to vector<1x32xf32>
    %484 = arith.mulf %474, %483 : vector<1x32xf32>
    %cst_149 = arith.constant dense<0.000000e+00> : vector<1x64xf32>
    %485 = tpu.matmul %484, %370, %cst_149 {dimension_numbers = #tpu.dot_dimension_numbers<[1], [0], [0], [1], [0, 0, 1, 1], [], []>} : vector<1x32xf32>, vector<32x64xf32>, vector<1x64xf32> -> vector<1x64xf32>
    %486 = arith.addf %485, %371 : vector<1x64xf32>
    %cst_150 = arith.constant 5.000000e-01 : f32
    %487 = vector.broadcast %cst_150 : f32 to vector<1x64xf32>
    %488 = arith.mulf %487, %486 : vector<1x64xf32>
    %cst_151 = arith.constant 0.707106769 : f32
    %489 = vector.broadcast %cst_151 : f32 to vector<1x64xf32>
    %490 = arith.mulf %486, %489 : vector<1x64xf32>
    %491 = math.absf %490 : vector<1x64xf32>
    %cst_152 = arith.constant 0.327591091 : f32
    %492 = vector.broadcast %cst_152 : f32 to vector<1x64xf32>
    %493 = arith.mulf %492, %491 : vector<1x64xf32>
    %cst_153 = arith.constant 1.000000e+00 : f32
    %494 = vector.broadcast %cst_153 : f32 to vector<1x64xf32>
    %495 = arith.addf %494, %493 : vector<1x64xf32>
    %cst_154 = arith.constant 1.000000e+00 : f32
    %496 = vector.broadcast %cst_154 : f32 to vector<1x64xf32>
    %497 = arith.divf %496, %495 : vector<1x64xf32>
    %cst_155 = arith.constant 1.06140542 : f32
    %498 = vector.broadcast %cst_155 : f32 to vector<1x64xf32>
    %499 = arith.mulf %498, %497 : vector<1x64xf32>
    %cst_156 = arith.constant -1.45315206 : f32
    %500 = vector.broadcast %cst_156 : f32 to vector<1x64xf32>
    %501 = arith.addf %499, %500 : vector<1x64xf32>
    %502 = arith.mulf %501, %497 : vector<1x64xf32>
    %cst_157 = arith.constant 1.42141378 : f32
    %503 = vector.broadcast %cst_157 : f32 to vector<1x64xf32>
    %504 = arith.addf %502, %503 : vector<1x64xf32>
    %505 = arith.mulf %504, %497 : vector<1x64xf32>
    %cst_158 = arith.constant -0.284496725 : f32
    %506 = vector.broadcast %cst_158 : f32 to vector<1x64xf32>
    %507 = arith.addf %505, %506 : vector<1x64xf32>
    %508 = arith.mulf %507, %497 : vector<1x64xf32>
    %cst_159 = arith.constant 0.254829586 : f32
    %509 = vector.broadcast %cst_159 : f32 to vector<1x64xf32>
    %510 = arith.addf %508, %509 : vector<1x64xf32>
    %511 = arith.mulf %510, %497 : vector<1x64xf32>
    %cst_160 = arith.constant 0.000000e+00 : f32
    %512 = vector.broadcast %cst_160 : f32 to vector<1x64xf32>
    %513 = arith.subf %512, %491 : vector<1x64xf32>
    %514 = arith.mulf %513, %491 : vector<1x64xf32>
    %515 = math.exp %514 : vector<1x64xf32>
    %516 = arith.mulf %511, %515 : vector<1x64xf32>
    %cst_161 = arith.constant 1.000000e+00 : f32
    %517 = vector.broadcast %cst_161 : f32 to vector<1x64xf32>
    %518 = arith.subf %517, %516 : vector<1x64xf32>
    %cst_162 = arith.constant 0.000000e+00 : f32
    %519 = vector.broadcast %cst_162 : f32 to vector<1x64xf32>
    %520 = arith.cmpf oge, %490, %519 : vector<1x64xf32>
    %cst_163 = arith.constant 0.000000e+00 : f32
    %521 = vector.broadcast %cst_163 : f32 to vector<1x64xf32>
    %522 = arith.subf %521, %518 : vector<1x64xf32>
    %523 = arith.select %520, %518, %522 : vector<1x64xi1>, vector<1x64xf32>
    %cst_164 = arith.constant 1.000000e+00 : f32
    %524 = vector.broadcast %cst_164 : f32 to vector<1x64xf32>
    %525 = arith.addf %524, %523 : vector<1x64xf32>
    %526 = arith.mulf %488, %525 : vector<1x64xf32>
    %cst_165 = arith.constant dense<0.000000e+00> : vector<1x32xf32>
    %527 = tpu.matmul %526, %372, %cst_165 {dimension_numbers = #tpu.dot_dimension_numbers<[1], [0], [0], [1], [0, 0, 1, 1], [], []>} : vector<1x64xf32>, vector<64x32xf32>, vector<1x32xf32> -> vector<1x32xf32>
    %528 = arith.addf %468, %527 : vector<1x32xf32>
    %529 = arith.addf %528, %373 : vector<1x32xf32>
    %cst_166 = arith.constant dense<0.000000e+00> : vector<1xf32>
    %530 = vector.multi_reduction <add>, %363, %cst_166 [1] : vector<1x32xf32> to vector<1xf32>
    %531 = vector.shape_cast %530 : vector<1xf32> to vector<1x1xf32>
    %cst_167 = arith.constant 3.200000e+01 : f32
    %532 = vector.broadcast %cst_167 : f32 to vector<1x1xf32>
    %533 = arith.divf %531, %532 : vector<1x1xf32>
    %534 = vector.broadcast %533 : vector<1x1xf32> to vector<1x32xf32>
    %535 = arith.subf %363, %534 : vector<1x32xf32>
    %536 = arith.mulf %535, %535 : vector<1x32xf32>
    %cst_168 = arith.constant dense<0.000000e+00> : vector<1xf32>
    %537 = vector.multi_reduction <add>, %536, %cst_168 [1] : vector<1x32xf32> to vector<1xf32>
    %538 = vector.shape_cast %537 : vector<1xf32> to vector<1x1xf32>
    %cst_169 = arith.constant 3.200000e+01 : f32
    %539 = vector.broadcast %cst_169 : f32 to vector<1x1xf32>
    %540 = arith.divf %538, %539 : vector<1x1xf32>
    %cst_170 = arith.constant 9.99999974E-6 : f32
    %541 = vector.broadcast %cst_170 : f32 to vector<1x1xf32>
    %542 = arith.addf %540, %541 : vector<1x1xf32>
    %543 = math.rsqrt %542 : vector<1x1xf32>
    %544 = vector.broadcast %543 : vector<1x1xf32> to vector<1x32xf32>
    %545 = arith.mulf %535, %544 : vector<1x32xf32>
    %cst_171 = arith.constant dense<0.000000e+00> : vector<1x48xf32>
    %546 = tpu.matmul %545, %364, %cst_171 {dimension_numbers = #tpu.dot_dimension_numbers<[1], [0], [0], [1], [0, 0, 1, 1], [], []>} : vector<1x32xf32>, vector<32x48xf32>, vector<1x48xf32> -> vector<1x48xf32>
    %547 = arith.addf %546, %365 : vector<1x48xf32>
    %548 = vector.extract_strided_slice %378 {offsets = [16, 0], sizes = [16, 32], strides = [1, 1]} : vector<32x32xf32> to vector<16x32xf32>
    %549 = vector.extract_strided_slice %547 {offsets = [0, 0], sizes = [1, 16], strides = [1, 1]} : vector<1x48xf32> to vector<1x16xf32>
    %550 = vector.extract_strided_slice %547 {offsets = [0, 16], sizes = [1, 16], strides = [1, 1]} : vector<1x48xf32> to vector<1x16xf32>
    %551 = vector.extract_strided_slice %547 {offsets = [0, 32], sizes = [1, 16], strides = [1, 1]} : vector<1x48xf32> to vector<1x16xf32>
    %552 = vector.extract_strided_slice %548 {offsets = [0, 0], sizes = [16, 16], strides = [1, 1]} : vector<16x32xf32> to vector<16x16xf32>
    %553 = vector.extract_strided_slice %548 {offsets = [0, 16], sizes = [16, 16], strides = [1, 1]} : vector<16x32xf32> to vector<16x16xf32>
    %554 = vector.extract_strided_slice %366 {offsets = [0, 0], sizes = [1, 16], strides = [1, 1]} : vector<2x16xf32> to vector<1x16xf32>
    %555 = arith.mulf %550, %554 : vector<1x16xf32>
    %556 = arith.mulf %549, %555 : vector<1x16xf32>
    %cst_172 = arith.constant dense<0.000000e+00> : vector<1xf32>
    %557 = vector.multi_reduction <add>, %556, %cst_172 [1] : vector<1x16xf32> to vector<1xf32>
    %558 = vector.shape_cast %557 : vector<1xf32> to vector<1x1xf32>
    %559 = vector.broadcast %554 : vector<1x16xf32> to vector<16x16xf32>
    %560 = arith.mulf %552, %559 : vector<16x16xf32>
    %cst_173 = arith.constant dense<0.000000e+00> : vector<1x16xf32>
    %561 = tpu.matmul %549, %560, %cst_173 {dimension_numbers = #tpu.dot_dimension_numbers<[1], [1], [0], [0], [0, 0, 1, 0], [], []>} : vector<1x16xf32>, vector<16x16xf32>, vector<1x16xf32> -> vector<1x16xf32>
    %cst_174 = arith.constant dense<0xFF800000> : vector<1xf32>
    %562 = vector.multi_reduction <maximumf>, %561, %cst_174 [1] : vector<1x16xf32> to vector<1xf32>
    %563 = vector.shape_cast %562 : vector<1xf32> to vector<1x1xf32>
    %564 = arith.maximumf %558, %563 : vector<1x1xf32>
    %565 = arith.subf %558, %564 : vector<1x1xf32>
    %566 = math.exp %565 : vector<1x1xf32>
    %567 = vector.broadcast %564 : vector<1x1xf32> to vector<1x16xf32>
    %568 = arith.subf %561, %567 : vector<1x16xf32>
    %569 = math.exp %568 : vector<1x16xf32>
    %cst_175 = arith.constant dense<0.000000e+00> : vector<1xf32>
    %570 = vector.multi_reduction <add>, %569, %cst_175 [1] : vector<1x16xf32> to vector<1xf32>
    %571 = vector.shape_cast %570 : vector<1xf32> to vector<1x1xf32>
    %572 = arith.addf %566, %571 : vector<1x1xf32>
    %573 = tpu.reciprocal %572 {approx = true} : vector<1x1xf32> -> vector<1x1xf32>
    %574 = vector.extract_strided_slice %367 {offsets = [0, 0], sizes = [1, 16], strides = [1, 1]} : vector<2x16xf32> to vector<1x16xf32>
    %575 = arith.mulf %566, %573 : vector<1x1xf32>
    %576 = arith.mulf %551, %574 : vector<1x16xf32>
    %577 = vector.broadcast %575 : vector<1x1xf32> to vector<1x16xf32>
    %578 = arith.mulf %577, %576 : vector<1x16xf32>
    %579 = vector.broadcast %573 : vector<1x1xf32> to vector<1x16xf32>
    %580 = arith.mulf %569, %579 : vector<1x16xf32>
    %581 = vector.broadcast %574 : vector<1x16xf32> to vector<16x16xf32>
    %582 = arith.mulf %553, %581 : vector<16x16xf32>
    %cst_176 = arith.constant dense<0.000000e+00> : vector<1x16xf32>
    %583 = tpu.matmul %580, %582, %cst_176 {dimension_numbers = #tpu.dot_dimension_numbers<[1], [0], [0], [1], [0, 0, 1, 1], [], []>} : vector<1x16xf32>, vector<16x16xf32>, vector<1x16xf32> -> vector<1x16xf32>
    %584 = arith.addf %578, %583 : vector<1x16xf32>
    %585 = vector.extract_strided_slice %366 {offsets = [1, 0], sizes = [1, 16], strides = [1, 1]} : vector<2x16xf32> to vector<1x16xf32>
    %586 = arith.mulf %550, %585 : vector<1x16xf32>
    %587 = arith.mulf %549, %586 : vector<1x16xf32>
    %cst_177 = arith.constant dense<0.000000e+00> : vector<1xf32>
    %588 = vector.multi_reduction <add>, %587, %cst_177 [1] : vector<1x16xf32> to vector<1xf32>
    %589 = vector.shape_cast %588 : vector<1xf32> to vector<1x1xf32>
    %590 = vector.broadcast %585 : vector<1x16xf32> to vector<16x16xf32>
    %591 = arith.mulf %552, %590 : vector<16x16xf32>
    %cst_178 = arith.constant dense<0.000000e+00> : vector<1x16xf32>
    %592 = tpu.matmul %549, %591, %cst_178 {dimension_numbers = #tpu.dot_dimension_numbers<[1], [1], [0], [0], [0, 0, 1, 0], [], []>} : vector<1x16xf32>, vector<16x16xf32>, vector<1x16xf32> -> vector<1x16xf32>
    %cst_179 = arith.constant dense<0xFF800000> : vector<1xf32>
    %593 = vector.multi_reduction <maximumf>, %592, %cst_179 [1] : vector<1x16xf32> to vector<1xf32>
    %594 = vector.shape_cast %593 : vector<1xf32> to vector<1x1xf32>
    %595 = arith.maximumf %589, %594 : vector<1x1xf32>
    %596 = arith.subf %589, %595 : vector<1x1xf32>
    %597 = math.exp %596 : vector<1x1xf32>
    %598 = vector.broadcast %595 : vector<1x1xf32> to vector<1x16xf32>
    %599 = arith.subf %592, %598 : vector<1x16xf32>
    %600 = math.exp %599 : vector<1x16xf32>
    %cst_180 = arith.constant dense<0.000000e+00> : vector<1xf32>
    %601 = vector.multi_reduction <add>, %600, %cst_180 [1] : vector<1x16xf32> to vector<1xf32>
    %602 = vector.shape_cast %601 : vector<1xf32> to vector<1x1xf32>
    %603 = arith.addf %597, %602 : vector<1x1xf32>
    %604 = tpu.reciprocal %603 {approx = true} : vector<1x1xf32> -> vector<1x1xf32>
    %605 = vector.extract_strided_slice %367 {offsets = [1, 0], sizes = [1, 16], strides = [1, 1]} : vector<2x16xf32> to vector<1x16xf32>
    %606 = arith.mulf %597, %604 : vector<1x1xf32>
    %607 = arith.mulf %551, %605 : vector<1x16xf32>
    %608 = vector.broadcast %606 : vector<1x1xf32> to vector<1x16xf32>
    %609 = arith.mulf %608, %607 : vector<1x16xf32>
    %610 = vector.broadcast %604 : vector<1x1xf32> to vector<1x16xf32>
    %611 = arith.mulf %600, %610 : vector<1x16xf32>
    %612 = vector.broadcast %605 : vector<1x16xf32> to vector<16x16xf32>
    %613 = arith.mulf %553, %612 : vector<16x16xf32>
    %cst_181 = arith.constant dense<0.000000e+00> : vector<1x16xf32>
    %614 = tpu.matmul %611, %613, %cst_181 {dimension_numbers = #tpu.dot_dimension_numbers<[1], [0], [0], [1], [0, 0, 1, 1], [], []>} : vector<1x16xf32>, vector<16x16xf32>, vector<1x16xf32> -> vector<1x16xf32>
    %615 = arith.addf %609, %614 : vector<1x16xf32>
    %616 = arith.addf %584, %615 : vector<1x16xf32>
    %cst_182 = arith.constant dense<0.000000e+00> : vector<1x32xf32>
    %617 = tpu.matmul %616, %368, %cst_182 {dimension_numbers = #tpu.dot_dimension_numbers<[1], [0], [0], [1], [0, 0, 1, 1], [], []>} : vector<1x16xf32>, vector<16x32xf32>, vector<1x32xf32> -> vector<1x32xf32>
    %618 = arith.addf %363, %617 : vector<1x32xf32>
    %619 = arith.addf %618, %369 : vector<1x32xf32>
    %cst_183 = arith.constant dense<0.000000e+00> : vector<1xf32>
    %620 = vector.multi_reduction <add>, %619, %cst_183 [1] : vector<1x32xf32> to vector<1xf32>
    %621 = vector.shape_cast %620 : vector<1xf32> to vector<1x1xf32>
    %cst_184 = arith.constant 3.200000e+01 : f32
    %622 = vector.broadcast %cst_184 : f32 to vector<1x1xf32>
    %623 = arith.divf %621, %622 : vector<1x1xf32>
    %624 = vector.broadcast %623 : vector<1x1xf32> to vector<1x32xf32>
    %625 = arith.subf %619, %624 : vector<1x32xf32>
    %626 = arith.mulf %625, %625 : vector<1x32xf32>
    %cst_185 = arith.constant dense<0.000000e+00> : vector<1xf32>
    %627 = vector.multi_reduction <add>, %626, %cst_185 [1] : vector<1x32xf32> to vector<1xf32>
    %628 = vector.shape_cast %627 : vector<1xf32> to vector<1x1xf32>
    %cst_186 = arith.constant 3.200000e+01 : f32
    %629 = vector.broadcast %cst_186 : f32 to vector<1x1xf32>
    %630 = arith.divf %628, %629 : vector<1x1xf32>
    %cst_187 = arith.constant 9.99999974E-6 : f32
    %631 = vector.broadcast %cst_187 : f32 to vector<1x1xf32>
    %632 = arith.addf %630, %631 : vector<1x1xf32>
    %633 = math.rsqrt %632 : vector<1x1xf32>
    %634 = vector.broadcast %633 : vector<1x1xf32> to vector<1x32xf32>
    %635 = arith.mulf %625, %634 : vector<1x32xf32>
    %cst_188 = arith.constant dense<0.000000e+00> : vector<1x64xf32>
    %636 = tpu.matmul %635, %370, %cst_188 {dimension_numbers = #tpu.dot_dimension_numbers<[1], [0], [0], [1], [0, 0, 1, 1], [], []>} : vector<1x32xf32>, vector<32x64xf32>, vector<1x64xf32> -> vector<1x64xf32>
    %637 = arith.addf %636, %371 : vector<1x64xf32>
    %cst_189 = arith.constant 5.000000e-01 : f32
    %638 = vector.broadcast %cst_189 : f32 to vector<1x64xf32>
    %639 = arith.mulf %638, %637 : vector<1x64xf32>
    %cst_190 = arith.constant 0.707106769 : f32
    %640 = vector.broadcast %cst_190 : f32 to vector<1x64xf32>
    %641 = arith.mulf %637, %640 : vector<1x64xf32>
    %642 = math.absf %641 : vector<1x64xf32>
    %cst_191 = arith.constant 0.327591091 : f32
    %643 = vector.broadcast %cst_191 : f32 to vector<1x64xf32>
    %644 = arith.mulf %643, %642 : vector<1x64xf32>
    %cst_192 = arith.constant 1.000000e+00 : f32
    %645 = vector.broadcast %cst_192 : f32 to vector<1x64xf32>
    %646 = arith.addf %645, %644 : vector<1x64xf32>
    %cst_193 = arith.constant 1.000000e+00 : f32
    %647 = vector.broadcast %cst_193 : f32 to vector<1x64xf32>
    %648 = arith.divf %647, %646 : vector<1x64xf32>
    %cst_194 = arith.constant 1.06140542 : f32
    %649 = vector.broadcast %cst_194 : f32 to vector<1x64xf32>
    %650 = arith.mulf %649, %648 : vector<1x64xf32>
    %cst_195 = arith.constant -1.45315206 : f32
    %651 = vector.broadcast %cst_195 : f32 to vector<1x64xf32>
    %652 = arith.addf %650, %651 : vector<1x64xf32>
    %653 = arith.mulf %652, %648 : vector<1x64xf32>
    %cst_196 = arith.constant 1.42141378 : f32
    %654 = vector.broadcast %cst_196 : f32 to vector<1x64xf32>
    %655 = arith.addf %653, %654 : vector<1x64xf32>
    %656 = arith.mulf %655, %648 : vector<1x64xf32>
    %cst_197 = arith.constant -0.284496725 : f32
    %657 = vector.broadcast %cst_197 : f32 to vector<1x64xf32>
    %658 = arith.addf %656, %657 : vector<1x64xf32>
    %659 = arith.mulf %658, %648 : vector<1x64xf32>
    %cst_198 = arith.constant 0.254829586 : f32
    %660 = vector.broadcast %cst_198 : f32 to vector<1x64xf32>
    %661 = arith.addf %659, %660 : vector<1x64xf32>
    %662 = arith.mulf %661, %648 : vector<1x64xf32>
    %cst_199 = arith.constant 0.000000e+00 : f32
    %663 = vector.broadcast %cst_199 : f32 to vector<1x64xf32>
    %664 = arith.subf %663, %642 : vector<1x64xf32>
    %665 = arith.mulf %664, %642 : vector<1x64xf32>
    %666 = math.exp %665 : vector<1x64xf32>
    %667 = arith.mulf %662, %666 : vector<1x64xf32>
    %cst_200 = arith.constant 1.000000e+00 : f32
    %668 = vector.broadcast %cst_200 : f32 to vector<1x64xf32>
    %669 = arith.subf %668, %667 : vector<1x64xf32>
    %cst_201 = arith.constant 0.000000e+00 : f32
    %670 = vector.broadcast %cst_201 : f32 to vector<1x64xf32>
    %671 = arith.cmpf oge, %641, %670 : vector<1x64xf32>
    %cst_202 = arith.constant 0.000000e+00 : f32
    %672 = vector.broadcast %cst_202 : f32 to vector<1x64xf32>
    %673 = arith.subf %672, %669 : vector<1x64xf32>
    %674 = arith.select %671, %669, %673 : vector<1x64xi1>, vector<1x64xf32>
    %cst_203 = arith.constant 1.000000e+00 : f32
    %675 = vector.broadcast %cst_203 : f32 to vector<1x64xf32>
    %676 = arith.addf %675, %674 : vector<1x64xf32>
    %677 = arith.mulf %639, %676 : vector<1x64xf32>
    %cst_204 = arith.constant dense<0.000000e+00> : vector<1x32xf32>
    %678 = tpu.matmul %677, %372, %cst_204 {dimension_numbers = #tpu.dot_dimension_numbers<[1], [0], [0], [1], [0, 0, 1, 1], [], []>} : vector<1x64xf32>, vector<64x32xf32>, vector<1x32xf32> -> vector<1x32xf32>
    %679 = arith.addf %619, %678 : vector<1x32xf32>
    %680 = arith.addf %679, %373 : vector<1x32xf32>
    %c632 = arith.constant 632 : index
    %c0_205 = arith.constant 0 : index
    %681 = vector.load %arg2[%c632, %c0_205] : memref<672x128xf32, #tpu.memory_space<vmem>>, vector<32x128xf32>
    %c664 = arith.constant 664 : index
    %c0_206 = arith.constant 0 : index
    %682 = vector.load %arg2[%c664, %c0_206] : memref<672x128xf32, #tpu.memory_space<vmem>>, vector<1x128xf32>
    %cst_207 = arith.constant dense<0.000000e+00> : vector<1xf32>
    %683 = vector.multi_reduction <add>, %529, %cst_207 [1] : vector<1x32xf32> to vector<1xf32>
    %684 = vector.shape_cast %683 : vector<1xf32> to vector<1x1xf32>
    %cst_208 = arith.constant 3.200000e+01 : f32
    %685 = vector.broadcast %cst_208 : f32 to vector<1x1xf32>
    %686 = arith.divf %684, %685 : vector<1x1xf32>
    %687 = vector.broadcast %686 : vector<1x1xf32> to vector<1x32xf32>
    %688 = arith.subf %529, %687 : vector<1x32xf32>
    %689 = arith.mulf %688, %688 : vector<1x32xf32>
    %cst_209 = arith.constant dense<0.000000e+00> : vector<1xf32>
    %690 = vector.multi_reduction <add>, %689, %cst_209 [1] : vector<1x32xf32> to vector<1xf32>
    %691 = vector.shape_cast %690 : vector<1xf32> to vector<1x1xf32>
    %cst_210 = arith.constant 3.200000e+01 : f32
    %692 = vector.broadcast %cst_210 : f32 to vector<1x1xf32>
    %693 = arith.divf %691, %692 : vector<1x1xf32>
    %cst_211 = arith.constant 9.99999974E-6 : f32
    %694 = vector.broadcast %cst_211 : f32 to vector<1x1xf32>
    %695 = arith.addf %693, %694 : vector<1x1xf32>
    %696 = math.rsqrt %695 : vector<1x1xf32>
    %697 = vector.broadcast %696 : vector<1x1xf32> to vector<1x32xf32>
    %698 = arith.mulf %688, %697 : vector<1x32xf32>
    %cst_212 = arith.constant dense<0.000000e+00> : vector<1x128xf32>
    %699 = tpu.matmul %698, %681, %cst_212 {dimension_numbers = #tpu.dot_dimension_numbers<[1], [0], [0], [1], [0, 0, 1, 1], [], []>} : vector<1x32xf32>, vector<32x128xf32>, vector<1x128xf32> -> vector<1x128xf32>
    %700 = arith.addf %699, %682 : vector<1x128xf32>
    %c0_213 = arith.constant 0 : index
    %c0_214 = arith.constant 0 : index
    %701 = vector.load %arg3[%c0_213, %c0_214] : memref<2x128xf32, #tpu.memory_space<vmem>>, vector<1x128xf32>
    tpu.vector_store %arg3[%c0_213, %c0_214], %700 {strides = array<i32>} : memref<2x128xf32, #tpu.memory_space<vmem>>, vector<1x128xf32>,
    %cst_215 = arith.constant dense<0.000000e+00> : vector<1xf32>
    %702 = vector.multi_reduction <add>, %680, %cst_215 [1] : vector<1x32xf32> to vector<1xf32>
    %703 = vector.shape_cast %702 : vector<1xf32> to vector<1x1xf32>
    %cst_216 = arith.constant 3.200000e+01 : f32
    %704 = vector.broadcast %cst_216 : f32 to vector<1x1xf32>
    %705 = arith.divf %703, %704 : vector<1x1xf32>
    %706 = vector.broadcast %705 : vector<1x1xf32> to vector<1x32xf32>
    %707 = arith.subf %680, %706 : vector<1x32xf32>
    %708 = arith.mulf %707, %707 : vector<1x32xf32>
    %cst_217 = arith.constant dense<0.000000e+00> : vector<1xf32>
    %709 = vector.multi_reduction <add>, %708, %cst_217 [1] : vector<1x32xf32> to vector<1xf32>
    %710 = vector.shape_cast %709 : vector<1xf32> to vector<1x1xf32>
    %cst_218 = arith.constant 3.200000e+01 : f32
    %711 = vector.broadcast %cst_218 : f32 to vector<1x1xf32>
    %712 = arith.divf %710, %711 : vector<1x1xf32>
    %cst_219 = arith.constant 9.99999974E-6 : f32
    %713 = vector.broadcast %cst_219 : f32 to vector<1x1xf32>
    %714 = arith.addf %712, %713 : vector<1x1xf32>
    %715 = math.rsqrt %714 : vector<1x1xf32>
    %716 = vector.broadcast %715 : vector<1x1xf32> to vector<1x32xf32>
    %717 = arith.mulf %707, %716 : vector<1x32xf32>
    %cst_220 = arith.constant dense<0.000000e+00> : vector<1x128xf32>
    %718 = tpu.matmul %717, %681, %cst_220 {dimension_numbers = #tpu.dot_dimension_numbers<[1], [0], [0], [1], [0, 0, 1, 1], [], []>} : vector<1x32xf32>, vector<32x128xf32>, vector<1x128xf32> -> vector<1x128xf32>
    %719 = arith.addf %718, %682 : vector<1x128xf32>
    %c1 = arith.constant 1 : index
    %c0_221 = arith.constant 0 : index
    %720 = vector.load %arg3[%c1, %c0_221] : memref<2x128xf32, #tpu.memory_space<vmem>>, vector<1x128xf32>
    tpu.vector_store %arg3[%c1, %c0_221], %719 {strides = array<i32>} : memref<2x128xf32, #tpu.memory_space<vmem>>, vector<1x128xf32>,
    return
  }
}

</mosaic_0001>

<llo_original>
// kernel: cait_forward.1
$region0: #{cait_forward.1}
  #allocation0 [shape = 'u32[]', space=smem, size = 0x4, offset = 0x4, fixed_abs, tag = 'smem constant byte address 0x4 - core index']
  #allocation1 [shape = 'u32[72,128]{1,0:T(1,128)}', space=vmem, size = 0x9000, scoped, tag = 'internal scratch']
  %s0 = inlined_call_operand.vmem [shape: f32[32,48], index: 0, kind: input, shape index: {}]
  %s1 = inlined_call_operand.vmem [shape: f32[32,32], index: 1, kind: input, shape index: {}]
  %s2 = inlined_call_operand.vmem [shape: f32[672,128], index: 2, kind: input, shape index: {}]
  %s3 = inlined_call_operand.hbm [shape: f32[2,128], index: 3, kind: output, shape index: {}]
  %s4 = sld [smem:[#allocation0]]
  $region22: #{cait_forward.1} parent=0
    _
  %s6 = ssub.s32 1, %s4
  %s7 = scalar_select 0, %s6, %s4
  $region1: #{cait_forward.1} parent=0
    #allocation2 [shape = 'u8[1024]{0}', space=vmem, size = 0x400, scoped, tag = 'output window, operand 0, single buffered']
    #allocation3 [shape = 's32[1]{0}', space=sflag, size = 0x4, scoped, tag = 'scoped memory for cait_forward.1']
    %8 = vsyncpa [#allocation3], 0
    // Predicated region
    $region2: #{cait_forward.1} parent=1 // pred_check
      _
    $region3: #{cait_forward.1} parent=1 // pred_check_branch
      %10 = sbr.rel (0) target = $region5
    $region4: #{cait_forward.1} parent=1 // pred_region
      _
    $region5: #{cait_forward.1} parent=1 // pred_fallthru
      _
    // Predicated region
    $region6: #{cait_forward.1} parent=1 // pred_check
      _
    $region7: #{cait_forward.1} parent=1 // pred_check_branch
      %12 = sbr.rel (0) target = $region9
    $region8: #{cait_forward.1} parent=1 // pred_region
      _
    $region9: #{cait_forward.1} parent=1 // pred_fallthru
      _
    // Predicated region
    $region10: #{cait_forward.1} parent=1 // pred_check
      _
    $region11: #{cait_forward.1} parent=1 // pred_check_branch
      %14 = sbr.rel (0) target = $region13
    $region12: #{cait_forward.1} parent=1 // pred_region
      _
    $region13: #{cait_forward.1} parent=1 // pred_fallthru
      _
    %v15 = vld [vmem:[%s0] sm:$0xff]
    %v16 = vld [vmem:[%s0 + $0x8] sm:$0xff]
    %v17 = vld [vmem:[%s0 + $0x10] sm:$0xff]
    %v18 = vld [vmem:[%s0 + $0x18] sm:$0xff]
    %v19 = vld [vmem:[%s2] sm:$0xff]
    %v20 = vld [vmem:[%s2 + $0x8] sm:$0xff]
    %v21 = vld [vmem:[%s2 + $0x10] sm:$0xff]
    %v22 = vld [vmem:[%s2 + $0x18] sm:$0xff]
    %v23 = vld [vmem:[%s2 + $0x20] sm:$0xff]
    %v24 = vld [vmem:[%s2 + $0x28] sm:$0xff]
    %v25 = vld [vmem:[%s1] sm:$0xff]
    %v26 = vld [vmem:[%s1 + $0x8] sm:$0xff]
    %v27 = vld [vmem:[%s1 + $0x10] sm:$0xff]
    %v28 = vld [vmem:[%s1 + $0x18] sm:$0xff]
    %vm29 = vcmask 392192
    %v31 = vsel %vm29, %v15, 0
    %v34 = vsel %vm29, %v16, 0
    %v37 = vsel %vm29, %v17, 0
    %v40 = vsel %vm29, %v18, 0
    %42 = vmatpush.msra.mxu0 0.0
    %43 = vmatpush.msra.mxu0 0.0
    %44 = vmatpush.msra.mxu0 0.0
    %45 = vmatpush.msra.mxu0 0.0
    %46 = vmatpush.msra.mxu0 0.0
    %47 = vmatpush.msra.mxu0 0.0
    %48 = vmatpush.msra.mxu0 0.0
    %49 = vmatpush.msra.mxu0 0.0
    %50 = vmatpush.msra.mxu0 0.0
    %51 = vmatpush.msra.mxu0 0.0
    %52 = vmatpush.msra.mxu0 %v24
    %53 = vmatpush.msra.mxu0 %v23
    %54 = vmatpush.msra.mxu0 %v22
    %55 = vmatpush.msra.mxu0 %v21
    %56 = vmatpush.msra.mxu0 %v20
    %57 = vmatpush.msra.mxu0 %v19
    %58 = vmatmul.f32.gmra.mxu0 %v31
    %v59 = vpop.f32.mrf.mxu0
    %v60 = vadd.f32 %v25, %v59
    %61 = vmatmul.f32.gmra.mxu0 %v34
    %v62 = vpop.f32.mrf.mxu0
    %v63 = vadd.f32 %v26, %v62
    %64 = vmatmul.f32.gmra.mxu0 %v37
    %v65 = vpop.f32.mrf.mxu0
    %v66 = vadd.f32 %v27, %v65
    %67 = vmatmul.f32.gmra.mxu0 %v40
    %v68 = vpop.f32.mrf.mxu0
    %v69 = vadd.f32 %v28, %v68
    %70 = vdwg.mxu0
    %vm71 = vcmask 261120
    %v72 = vsel %vm71, %v60, 0.0
    %73 = vadd.xlane.f32.xlu0 %v72
    %v74 = vpop.xlane.xlu0 %73
    %v75 = vsel %vm71, %v63, 0.0
    %76 = vadd.xlane.f32.xlu0 %v75
    %v77 = vpop.xlane.xlu0 %76
    %v78 = vsel %vm71, %v66, 0.0
    %79 = vadd.xlane.f32.xlu0 %v78
    %v80 = vpop.xlane.xlu0 %79
    %v81 = vsel %vm71, %v69, 0.0
    %82 = vadd.xlane.f32.xlu0 %v81
    %v83 = vpop.xlane.xlu0 %82
    %v84 = vrcp.pop 32.0
    %v85 = vmul.f32 32.0, %v84
    %v86 = vsub.f32 1.0, %v85
    %v87 = vmul.f32 %v84, %v86
    %v88 = vadd.f32 %v84, %v87
    %vm89 = vweird.f32 %v84
    %v90 = vsel %vm89, %v84, %v88
    %v91 = vmul.f32 %v74, %v90
    %v92 = vmul.f32 %v77, %v90
    %v93 = vmul.f32 %v80, %v90
    %v94 = vmul.f32 %v83, %v90
    %v95 = vsub.f32 %v60, %v91
    %v96 = vsub.f32 %v63, %v92
    %v97 = vsub.f32 %v66, %v93
    %v98 = vsub.f32 %v69, %v94
    %v99 = vmul.f32 %v95, %v95
    %v100 = vmul.f32 %v96, %v96
    %v101 = vmul.f32 %v97, %v97
    %v102 = vmul.f32 %v98, %v98
    %v103 = vsel %vm71, %v99, 0.0
    %104 = vadd.xlane.f32.xlu0 %v103
    %v105 = vpop.xlane.xlu0 %104
    %v106 = vsel %vm71, %v100, 0.0
    %107 = vadd.xlane.f32.xlu0 %v106
    %v108 = vpop.xlane.xlu0 %107
    %v109 = vsel %vm71, %v101, 0.0
    %110 = vadd.xlane.f32.xlu0 %v109
    %v111 = vpop.xlane.xlu0 %110
    %v112 = vsel %vm71, %v102, 0.0
    %113 = vadd.xlane.f32.xlu0 %v112
    %v114 = vpop.xlane.xlu0 %113
    %v115 = vmul.f32 %v105, %v90
    %v116 = vmul.f32 %v108, %v90
    %v117 = vmul.f32 %v111, %v90
    %v118 = vmul.f32 %v114, %v90
    %v119 = vadd.f32 %v115, 1e-05
    %v120 = vadd.f32 %v116, 1e-05
    %v121 = vadd.f32 %v117, 1e-05
    %v122 = vadd.f32 %v118, 1e-05
    %v123 = vrsqrt.pop %v119
    %v124 = vmul.f32 %v123, %v119
    %v125 = vmul.f32 %v124, %v123
    %v126 = vmul.f32 0.5, %v125
    %v127 = vsub.f32 1.5, %v126
    %v128 = vmul.f32 %v123, %v127
    %vm129 = vweird.f32 %v119
    %vm130 = vweird.f32 %v123
    %vm131 = vmor %vm129, %vm130
    %v132 = vsel %vm131, %v123, %v128
    %v133 = vrsqrt.pop %v120
    %v134 = vmul.f32 %v133, %v120
    %v135 = vmul.f32 %v134, %v133
    %v136 = vmul.f32 0.5, %v135
    %v137 = vsub.f32 1.5, %v136
    %v138 = vmul.f32 %v133, %v137
    %vm139 = vweird.f32 %v120
    %vm140 = vweird.f32 %v133
    %vm141 = vmor %vm139, %vm140
    %v142 = vsel %vm141, %v133, %v138
    %v143 = vrsqrt.pop %v121
    %v144 = vmul.f32 %v143, %v121
    %v145 = vmul.f32 %v144, %v143
    %v146 = vmul.f32 0.5, %v145
    %v147 = vsub.f32 1.5, %v146
    %v148 = vmul.f32 %v143, %v147
    %vm149 = vweird.f32 %v121
    %vm150 = vweird.f32 %v143
    %vm151 = vmor %vm149, %vm150
    %v152 = vsel %vm151, %v143, %v148
    %v153 = vrsqrt.pop %v122
    %v154 = vmul.f32 %v153, %v122
    %v155 = vmul.f32 %v154, %v153
    %v156 = vmul.f32 0.5, %v155
    %v157 = vsub.f32 1.5, %v156
    %v158 = vmul.f32 %v153, %v157
    %vm159 = vweird.f32 %v122
    %vm160 = vweird.f32 %v153
    %vm161 = vmor %vm159, %vm160
    %v162 = vsel %vm161, %v153, %v158
    %v163 = vmul.f32 %v95, %v132
    %v164 = vmul.f32 %v96, %v142
    %v165 = vmul.f32 %v97, %v152
    %v166 = vmul.f32 %v98, %v162
    %v167 = vld [vmem:[%s2 + $0x30] sm:$0xff]
    %v168 = vld [vmem:[%s2 + $0x38] sm:$0xff]
    %v169 = vld [vmem:[%s2 + $0x40] sm:$0xff]
    %v170 = vld [vmem:[%s2 + $0x48] sm:$0xff]
    %v171 = vld [vmem:[%s2 + $0x50] sm:$0x1]
    %v172 = vperm.slane %v171, 0
    %v174 = vsel %vm71, %v163, 0
    %v177 = vsel %vm71, %v164, 0
    %v180 = vsel %vm71, %v165, 0
    %v183 = vsel %vm71, %v166, 0
    %185 = vmatpush.msra.mxu0 0.0
    %186 = vmatpush.msra.mxu0 0.0
    %187 = vmatpush.msra.mxu0 0.0
    %188 = vmatpush.msra.mxu0 0.0
    %189 = vmatpush.msra.mxu0 0.0
    %190 = vmatpush.msra.mxu0 0.0
    %191 = vmatpush.msra.mxu0 0.0
    %192 = vmatpush.msra.mxu0 0.0
    %193 = vmatpush.msra.mxu0 0.0
    %194 = vmatpush.msra.mxu0 0.0
    %195 = vmatpush.msra.mxu0 0.0
    %196 = vmatpush.msra.mxu0 0.0
    %197 = vmatpush.msra.mxu0 %v170
    %198 = vmatpush.msra.mxu0 %v169
    %199 = vmatpush.msra.mxu0 %v168
    %200 = vmatpush.msra.mxu0 %v167
    %201 = vmatmul.f32.gmra.mxu0 %v174
    %v202 = vpop.f32.mrf.mxu0
    %v203 = vadd.f32 %v172, %v202
    %204 = vmatmul.f32.gmra.mxu0 %v177
    %v205 = vpop.f32.mrf.mxu0
    %v206 = vadd.f32 %v172, %v205
    %207 = vmatmul.f32.gmra.mxu0 %v180
    %v208 = vpop.f32.mrf.mxu0
    %v209 = vadd.f32 %v172, %v208
    %210 = vmatmul.f32.gmra.mxu0 %v183
    %v211 = vpop.f32.mrf.mxu0
    %v212 = vadd.f32 %v172, %v211
    %213 = vdwg.mxu0
    %v214 = vld [vmem:[%s2 + $0x58] sm:$0x3]
    %v215 = vld [vmem:[%s2 + $0x60] sm:$0x3]
    %v216 = vperm.slane %v214, 0
    %218 = vrot.lane.b32.xlu0 %v216, 16
    %v219 = vpop.permute.xlu0 %218
    %v221 = vmul.f32 %v203, %v219
    %v222 = vmul.f32 %v206, %v219
    %225 = vrot.lane.b32.xlu0 %v221, 112
    %v226 = vpop.permute.xlu0 %225
    %227 = vrot.lane.b32.xlu0 %v222, 112
    %v228 = vpop.permute.xlu0 %227
    %vm229 = vcmask 130048
    %v231 = vsel %vm229, %v203, 0
    %v234 = vsel %vm229, %v206, 0
    %v236 = vsel %vm229, %v226, 0
    %v238 = vsel %vm229, %v228, 0
    %240 = vmatpush.xpose.msra.mxu0 0.0
    %241 = vmatpush.xpose.msra.mxu0 0.0
    %242 = vmatpush.xpose.msra.mxu0 0.0
    %243 = vmatpush.xpose.msra.mxu0 0.0
    %244 = vmatpush.xpose.msra.mxu0 0.0
    %245 = vmatpush.xpose.msra.mxu0 0.0
    %246 = vmatpush.xpose.msra.mxu0 0.0
    %247 = vmatpush.xpose.msra.mxu0 0.0
    %248 = vmatpush.xpose.msra.mxu0 0.0
    %249 = vmatpush.xpose.msra.mxu0 0.0
    %250 = vmatpush.xpose.msra.mxu0 0.0
    %251 = vmatpush.xpose.msra.mxu0 0.0
    %252 = vmatpush.xpose.msra.mxu0 0.0
    %253 = vmatpush.xpose.msra.mxu0 0.0
    %254 = vmatpush.xpose.msra.mxu0 %v238
    %255 = vmatpush.xpose.msra.mxu0 %v236
    %256 = vmatmul.f32.gmra.mxu0 %v231
    %v257 = vpop.f32.mrf.mxu0
    %v258 = vadd.f32 0.0, %v257
    %259 = vmatmul.f32.gmra.mxu0 %v234
    %v260 = vpop.f32.mrf.mxu0
    %v261 = vadd.f32 0.0, %v260
    %262 = vdwg.mxu0
    %v263 = vsel %vm229, %v258, -inf
    %264 = vmax.xlane.f32.xlu0 %v263
    %v265 = vpop.xlane.xlu0 %264
    %v266 = vsel %vm229, %v261, -inf
    %267 = vmax.xlane.f32.xlu0 %v266
    %v268 = vpop.xlane.xlu0 %267
    %v269 = vsub.f32 %v258, %v265
    %v270 = vsub.f32 %v261, %v268
    %v271 = vmul.f32 %v269, 1.442695
    %v272 = vpow.pop %v271
    %v273 = vmul.f32 %v270, 1.442695
    %v274 = vpow.pop %v273
    %v275 = vsel %vm229, %v272, 0.0
    %276 = vadd.xlane.f32.xlu0 %v275
    %v277 = vpop.xlane.xlu0 %276
    %v278 = vsel %vm229, %v274, 0.0
    %279 = vadd.xlane.f32.xlu0 %v278
    %v280 = vpop.xlane.xlu0 %279
    %v281 = vrcp.pop %v277
    %v282 = vrcp.pop %v280
    %v283 = vmul.f32 %v272, %v281
    %v284 = vmul.f32 %v274, %v282
    %v285 = vperm.slane %v215, 0
    %287 = vrot.lane.b32.xlu0 %v285, 32
    %v288 = vpop.permute.xlu0 %287
    %v290 = vmul.f32 %v203, %v288
    %v291 = vmul.f32 %v206, %v288
    %v292 = vperm.slane %v214, 1
    %294 = vrot.lane.b32.xlu0 %v292, 16
    %v295 = vpop.permute.xlu0 %294
    %v297 = vmul.f32 %v203, %v295
    %v298 = vmul.f32 %v206, %v295
    %301 = vrot.lane.b32.xlu0 %v297, 112
    %v302 = vpop.permute.xlu0 %301
    %303 = vrot.lane.b32.xlu0 %v298, 112
    %v304 = vpop.permute.xlu0 %303
    %v305 = vsel %vm229, %v302, 0
    %v307 = vsel %vm229, %v304, 0
    %309 = vmatpush.xpose.msra.mxu0 0.0
    %310 = vmatpush.xpose.msra.mxu0 0.0
    %311 = vmatpush.xpose.msra.mxu0 0.0
    %312 = vmatpush.xpose.msra.mxu0 0.0
    %313 = vmatpush.xpose.msra.mxu0 0.0
    %314 = vmatpush.xpose.msra.mxu0 0.0
    %315 = vmatpush.xpose.msra.mxu0 0.0
    %316 = vmatpush.xpose.msra.mxu0 0.0
    %317 = vmatpush.xpose.msra.mxu0 0.0
    %318 = vmatpush.xpose.msra.mxu0 0.0
    %319 = vmatpush.xpose.msra.mxu0 0.0
    %320 = vmatpush.xpose.msra.mxu0 0.0
    %321 = vmatpush.xpose.msra.mxu0 0.0
    %322 = vmatpush.xpose.msra.mxu0 0.0
    %323 = vmatpush.xpose.msra.mxu0 %v307
    %324 = vmatpush.xpose.msra.mxu0 %v305
    %325 = vmatmul.f32.gmra.mxu0 %v231
    %v326 = vpop.f32.mrf.mxu0
    %v327 = vadd.f32 0.0, %v326
    %328 = vmatmul.f32.gmra.mxu0 %v234
    %v329 = vpop.f32.mrf.mxu0
    %v330 = vadd.f32 0.0, %v329
    %331 = vdwg.mxu0
    %v332 = vsel %vm229, %v327, -inf
    %333 = vmax.xlane.f32.xlu0 %v332
    %v334 = vpop.xlane.xlu0 %333
    %v335 = vsel %vm229, %v330, -inf
    %336 = vmax.xlane.f32.xlu0 %v335
    %v337 = vpop.xlane.xlu0 %336
    %v338 = vsub.f32 %v327, %v334
    %v339 = vsub.f32 %v330, %v337
    %v340 = vmul.f32 %v338, 1.442695
    %v341 = vpow.pop %v340
    %v342 = vmul.f32 %v339, 1.442695
    %v343 = vpow.pop %v342
    %v344 = vsel %vm229, %v341, 0.0
    %345 = vadd.xlane.f32.xlu0 %v344
    %v346 = vpop.xlane.xlu0 %345
    %v347 = vsel %vm229, %v343, 0.0
    %348 = vadd.xlane.f32.xlu0 %v347
    %v349 = vpop.xlane.xlu0 %348
    %v350 = vrcp.pop %v346
    %v351 = vrcp.pop %v349
    %v352 = vmul.f32 %v341, %v350
    %v353 = vmul.f32 %v343, %v351
    %v354 = vperm.slane %v215, 1
    %356 = vrot.lane.b32.xlu0 %v354, 32
    %v357 = vpop.permute.xlu0 %356
    %v359 = vmul.f32 %v203, %v357
    %v360 = vmul.f32 %v206, %v357
    %363 = vrot.lane.b32.xlu0 %v359, 96
    %v364 = vpop.permute.xlu0 %363
    %365 = vrot.lane.b32.xlu0 %v360, 96
    %v366 = vpop.permute.xlu0 %365
    %v370 = vsel %vm229, %v352, 0
    %v373 = vsel %vm229, %v353, 0
    %375 = vmatpush.msra.mxu0 0.0
    %376 = vmatpush.msra.mxu0 0.0
    %377 = vmatpush.msra.mxu0 0.0
    %378 = vmatpush.msra.mxu0 0.0
    %379 = vmatpush.msra.mxu0 0.0
    %380 = vmatpush.msra.mxu0 0.0
    %381 = vmatpush.msra.mxu0 0.0
    %382 = vmatpush.msra.mxu0 0.0
    %383 = vmatpush.msra.mxu0 0.0
    %384 = vmatpush.msra.mxu0 0.0
    %385 = vmatpush.msra.mxu0 0.0
    %386 = vmatpush.msra.mxu0 0.0
    %387 = vmatpush.msra.mxu0 0.0
    %388 = vmatpush.msra.mxu0 0.0
    %389 = vmatpush.msra.mxu0 %v366
    %390 = vmatpush.msra.mxu0 %v364
    %391 = vmatmul.f32.gmra.mxu0 %v370
    %v392 = vpop.f32.mrf.mxu0
    %v393 = vadd.f32 0.0, %v392
    %394 = vmatmul.f32.gmra.mxu0 %v373
    %v395 = vpop.f32.mrf.mxu0
    %v396 = vadd.f32 0.0, %v395
    %397 = vdwg.mxu0
    %400 = vrot.lane.b32.xlu0 %v290, 96
    %v401 = vpop.permute.xlu0 %400
    %402 = vrot.lane.b32.xlu0 %v291, 96
    %v403 = vpop.permute.xlu0 %402
    %v407 = vsel %vm229, %v283, 0
    %v410 = vsel %vm229, %v284, 0
    %412 = vmatpush.msra.mxu0 0.0
    %413 = vmatpush.msra.mxu0 0.0
    %414 = vmatpush.msra.mxu0 0.0
    %415 = vmatpush.msra.mxu0 0.0
    %416 = vmatpush.msra.mxu0 0.0
    %417 = vmatpush.msra.mxu0 0.0
    %418 = vmatpush.msra.mxu0 0.0
    %419 = vmatpush.msra.mxu0 0.0
    %420 = vmatpush.msra.mxu0 0.0
    %421 = vmatpush.msra.mxu0 0.0
    %422 = vmatpush.msra.mxu0 0.0
    %423 = vmatpush.msra.mxu0 0.0
    %424 = vmatpush.msra.mxu0 0.0
    %425 = vmatpush.msra.mxu0 0.0
    %426 = vmatpush.msra.mxu0 %v403
    %427 = vmatpush.msra.mxu0 %v401
    %428 = vmatmul.f32.gmra.mxu0 %v407
    %v429 = vpop.f32.mrf.mxu0
    %v430 = vadd.f32 %v393, %v429
    %431 = vmatmul.f32.gmra.mxu0 %v410
    %v432 = vpop.f32.mrf.mxu0
    %v433 = vadd.f32 %v396, %v432
    %434 = vdwg.mxu0
    %v435 = vmul.f32 %v209, %v219
    %v436 = vmul.f32 %v212, %v219
    %439 = vrot.lane.b32.xlu0 %v435, 112
    %v440 = vpop.permute.xlu0 %439
    %441 = vrot.lane.b32.xlu0 %v436, 112
    %v442 = vpop.permute.xlu0 %441
    %v444 = vsel %vm229, %v209, 0
    %v447 = vsel %vm229, %v212, 0
    %v449 = vsel %vm229, %v440, 0
    %v451 = vsel %vm229, %v442, 0
    %453 = vmatpush.xpose.msra.mxu0 0.0
    %454 = vmatpush.xpose.msra.mxu0 0.0
    %455 = vmatpush.xpose.msra.mxu0 0.0
    %456 = vmatpush.xpose.msra.mxu0 0.0
    %457 = vmatpush.xpose.msra.mxu0 0.0
    %458 = vmatpush.xpose.msra.mxu0 0.0
    %459 = vmatpush.xpose.msra.mxu0 0.0
    %460 = vmatpush.xpose.msra.mxu0 0.0
    %461 = vmatpush.xpose.msra.mxu0 0.0
    %462 = vmatpush.xpose.msra.mxu0 0.0
    %463 = vmatpush.xpose.msra.mxu0 0.0
    %464 = vmatpush.xpose.msra.mxu0 0.0
    %465 = vmatpush.xpose.msra.mxu0 0.0
    %466 = vmatpush.xpose.msra.mxu0 0.0
    %467 = vmatpush.xpose.msra.mxu0 %v451
    %468 = vmatpush.xpose.msra.mxu0 %v449
    %469 = vmatmul.f32.gmra.mxu0 %v444
    %v470 = vpop.f32.mrf.mxu0
    %v471 = vadd.f32 0.0, %v470
    %472 = vmatmul.f32.gmra.mxu0 %v447
    %v473 = vpop.f32.mrf.mxu0
    %v474 = vadd.f32 0.0, %v473
    %475 = vdwg.mxu0
    %v476 = vsel %vm229, %v471, -inf
    %477 = vmax.xlane.f32.xlu0 %v476
    %v478 = vpop.xlane.xlu0 %477
    %v479 = vsel %vm229, %v474, -inf
    %480 = vmax.xlane.f32.xlu0 %v479
    %v481 = vpop.xlane.xlu0 %480
    %v482 = vsub.f32 %v471, %v478
    %v483 = vsub.f32 %v474, %v481
    %v484 = vmul.f32 %v482, 1.442695
    %v485 = vpow.pop %v484
    %v486 = vmul.f32 %v483, 1.442695
    %v487 = vpow.pop %v486
    %v488 = vsel %vm229, %v485, 0.0
    %489 = vadd.xlane.f32.xlu0 %v488
    %v490 = vpop.xlane.xlu0 %489
    %v491 = vsel %vm229, %v487, 0.0
    %492 = vadd.xlane.f32.xlu0 %v491
    %v493 = vpop.xlane.xlu0 %492
    %v494 = vrcp.pop %v490
    %v495 = vrcp.pop %v493
    %v496 = vmul.f32 %v485, %v494
    %v497 = vmul.f32 %v487, %v495
    %v498 = vmul.f32 %v209, %v288
    %v499 = vmul.f32 %v212, %v288
    %v500 = vmul.f32 %v209, %v295
    %v501 = vmul.f32 %v212, %v295
    %504 = vrot.lane.b32.xlu0 %v500, 112
    %v505 = vpop.permute.xlu0 %504
    %506 = vrot.lane.b32.xlu0 %v501, 112
    %v507 = vpop.permute.xlu0 %506
    %v508 = vsel %vm229, %v505, 0
    %v510 = vsel %vm229, %v507, 0
    %512 = vmatpush.xpose.msra.mxu0 0.0
    %513 = vmatpush.xpose.msra.mxu0 0.0
    %514 = vmatpush.xpose.msra.mxu0 0.0
    %515 = vmatpush.xpose.msra.mxu0 0.0
    %516 = vmatpush.xpose.msra.mxu0 0.0
    %517 = vmatpush.xpose.msra.mxu0 0.0
    %518 = vmatpush.xpose.msra.mxu0 0.0
    %519 = vmatpush.xpose.msra.mxu0 0.0
    %520 = vmatpush.xpose.msra.mxu0 0.0
    %521 = vmatpush.xpose.msra.mxu0 0.0
    %522 = vmatpush.xpose.msra.mxu0 0.0
    %523 = vmatpush.xpose.msra.mxu0 0.0
    %524 = vmatpush.xpose.msra.mxu0 0.0
    %525 = vmatpush.xpose.msra.mxu0 0.0
    %526 = vmatpush.xpose.msra.mxu0 %v510
    %527 = vmatpush.xpose.msra.mxu0 %v508
    %528 = vmatmul.f32.gmra.mxu0 %v444
    %v529 = vpop.f32.mrf.mxu0
    %v530 = vadd.f32 0.0, %v529
    %531 = vmatmul.f32.gmra.mxu0 %v447
    %v532 = vpop.f32.mrf.mxu0
    %v533 = vadd.f32 0.0, %v532
    %534 = vdwg.mxu0
    %v535 = vsel %vm229, %v530, -inf
    %536 = vmax.xlane.f32.xlu0 %v535
    %v537 = vpop.xlane.xlu0 %536
    %v538 = vsel %vm229, %v533, -inf
    %539 = vmax.xlane.f32.xlu0 %v538
    %v540 = vpop.xlane.xlu0 %539
    %v541 = vsub.f32 %v530, %v537
    %v542 = vsub.f32 %v533, %v540
    %v543 = vmul.f32 %v541, 1.442695
    %v544 = vpow.pop %v543
    %v545 = vmul.f32 %v542, 1.442695
    %v546 = vpow.pop %v545
    %v547 = vsel %vm229, %v544, 0.0
    %548 = vadd.xlane.f32.xlu0 %v547
    %v549 = vpop.xlane.xlu0 %548
    %v550 = vsel %vm229, %v546, 0.0
    %551 = vadd.xlane.f32.xlu0 %v550
    %v552 = vpop.xlane.xlu0 %551
    %v553 = vrcp.pop %v549
    %v554 = vrcp.pop %v552
    %v555 = vmul.f32 %v544, %v553
    %v556 = vmul.f32 %v546, %v554
    %v557 = vmul.f32 %v209, %v357
    %v558 = vmul.f32 %v212, %v357
    %561 = vrot.lane.b32.xlu0 %v557, 96
    %v562 = vpop.permute.xlu0 %561
    %563 = vrot.lane.b32.xlu0 %v558, 96
    %v564 = vpop.permute.xlu0 %563
    %v568 = vsel %vm229, %v555, 0
    %v571 = vsel %vm229, %v556, 0
    %573 = vmatpush.msra.mxu0 0.0
    %574 = vmatpush.msra.mxu0 0.0
    %575 = vmatpush.msra.mxu0 0.0
    %576 = vmatpush.msra.mxu0 0.0
    %577 = vmatpush.msra.mxu0 0.0
    %578 = vmatpush.msra.mxu0 0.0
    %579 = vmatpush.msra.mxu0 0.0
    %580 = vmatpush.msra.mxu0 0.0
    %581 = vmatpush.msra.mxu0 0.0
    %582 = vmatpush.msra.mxu0 0.0
    %583 = vmatpush.msra.mxu0 0.0
    %584 = vmatpush.msra.mxu0 0.0
    %585 = vmatpush.msra.mxu0 0.0
    %586 = vmatpush.msra.mxu0 0.0
    %587 = vmatpush.msra.mxu0 %v564
    %588 = vmatpush.msra.mxu0 %v562
    %589 = vmatmul.f32.gmra.mxu0 %v568
    %v590 = vpop.f32.mrf.mxu0
    %v591 = vadd.f32 0.0, %v590
    %592 = vmatmul.f32.gmra.mxu0 %v571
    %v593 = vpop.f32.mrf.mxu0
    %v594 = vadd.f32 0.0, %v593
    %595 = vdwg.mxu0
    %598 = vrot.lane.b32.xlu0 %v498, 96
    %v599 = vpop.permute.xlu0 %598
    %600 = vrot.lane.b32.xlu0 %v499, 96
    %v601 = vpop.permute.xlu0 %600
    %v605 = vsel %vm229, %v496, 0
    %v608 = vsel %vm229, %v497, 0
    %610 = vmatpush.msra.mxu0 0.0
    %611 = vmatpush.msra.mxu0 0.0
    %612 = vmatpush.msra.mxu0 0.0
    %613 = vmatpush.msra.mxu0 0.0
    %614 = vmatpush.msra.mxu0 0.0
    %615 = vmatpush.msra.mxu0 0.0
    %616 = vmatpush.msra.mxu0 0.0
    %617 = vmatpush.msra.mxu0 0.0
    %618 = vmatpush.msra.mxu0 0.0
    %619 = vmatpush.msra.mxu0 0.0
    %620 = vmatpush.msra.mxu0 0.0
    %621 = vmatpush.msra.mxu0 0.0
    %622 = vmatpush.msra.mxu0 0.0
    %623 = vmatpush.msra.mxu0 0.0
    %624 = vmatpush.msra.mxu0 %v601
    %625 = vmatpush.msra.mxu0 %v599
    %626 = vmatmul.f32.gmra.mxu0 %v605
    %v627 = vpop.f32.mrf.mxu0
    %v628 = vadd.f32 %v591, %v627
    %629 = vmatmul.f32.gmra.mxu0 %v608
    %v630 = vpop.f32.mrf.mxu0
    %v631 = vadd.f32 %v594, %v630
    %632 = vdwg.mxu0
    %v633 = vld [vmem:[%s2 + $0x68] sm:$0xff]
    %v634 = vld [vmem:[%s2 + $0x70] sm:$0xff]
    %v636 = vsel %vm229, %v430, 0
    %v639 = vsel %vm229, %v433, 0
    %v642 = vsel %vm229, %v628, 0
    %v645 = vsel %vm229, %v631, 0
    %647 = vmatpush.msra.mxu0 0.0
    %648 = vmatpush.msra.mxu0 0.0
    %649 = vmatpush.msra.mxu0 0.0
    %650 = vmatpush.msra.mxu0 0.0
    %651 = vmatpush.msra.mxu0 0.0
    %652 = vmatpush.msra.mxu0 0.0
    %653 = vmatpush.msra.mxu0 0.0
    %654 = vmatpush.msra.mxu0 0.0
    %655 = vmatpush.msra.mxu0 0.0
    %656 = vmatpush.msra.mxu0 0.0
    %657 = vmatpush.msra.mxu0 0.0
    %658 = vmatpush.msra.mxu0 0.0
    %659 = vmatpush.msra.mxu0 0.0
    %660 = vmatpush.msra.mxu0 0.0
    %661 = vmatpush.msra.mxu0 %v634
    %662 = vmatpush.msra.mxu0 %v633
    %663 = vmatmul.f32.gmra.mxu0 %v636
    %v664 = vpop.f32.mrf.mxu0
    %v665 = vadd.f32 0.0, %v664
    %666 = vmatmul.f32.gmra.mxu0 %v639
    %v667 = vpop.f32.mrf.mxu0
    %v668 = vadd.f32 0.0, %v667
    %669 = vmatmul.f32.gmra.mxu0 %v642
    %v670 = vpop.f32.mrf.mxu0
    %v671 = vadd.f32 0.0, %v670
    %672 = vmatmul.f32.gmra.mxu0 %v645
    %v673 = vpop.f32.mrf.mxu0
    %v674 = vadd.f32 0.0, %v673
    %675 = vdwg.mxu0
    %v676 = vadd.f32 %v60, %v665
    %v677 = vadd.f32 %v63, %v668
    %v678 = vadd.f32 %v66, %v671
    %v679 = vadd.f32 %v69, %v674
    %v680 = vld [vmem:[%s2 + $0x78] sm:$0x1]
    %v681 = vperm.slane %v680, 0
    %v682 = vadd.f32 %v676, %v681
    %v683 = vadd.f32 %v677, %v681
    %v684 = vadd.f32 %v678, %v681
    %v685 = vadd.f32 %v679, %v681
    %v686 = vsel %vm71, %v682, 0.0
    %687 = vadd.xlane.f32.xlu0 %v686
    %v688 = vpop.xlane.xlu0 %687
    %v689 = vsel %vm71, %v683, 0.0
    %690 = vadd.xlane.f32.xlu0 %v689
    %v691 = vpop.xlane.xlu0 %690
    %v692 = vsel %vm71, %v684, 0.0
    %693 = vadd.xlane.f32.xlu0 %v692
    %v694 = vpop.xlane.xlu0 %693
    %v695 = vsel %vm71, %v685, 0.0
    %696 = vadd.xlane.f32.xlu0 %v695
    %v697 = vpop.xlane.xlu0 %696
    %v698 = vmul.f32 %v688, %v90
    %v699 = vmul.f32 %v691, %v90
    %v700 = vmul.f32 %v694, %v90
    %v701 = vmul.f32 %v697, %v90
    %v702 = vsub.f32 %v682, %v698
    %v703 = vsub.f32 %v683, %v699
    %v704 = vsub.f32 %v684, %v700
    %v705 = vsub.f32 %v685, %v701
    %v706 = vmul.f32 %v702, %v702
    %v707 = vmul.f32 %v703, %v703
    %v708 = vmul.f32 %v704, %v704
    %v709 = vmul.f32 %v705, %v705
    %v710 = vsel %vm71, %v706, 0.0
    %711 = vadd.xlane.f32.xlu0 %v710
    %v712 = vpop.xlane.xlu0 %711
    %v713 = vsel %vm71, %v707, 0.0
    %714 = vadd.xlane.f32.xlu0 %v713
    %v715 = vpop.xlane.xlu0 %714
    %v716 = vsel %vm71, %v708, 0.0
    %717 = vadd.xlane.f32.xlu0 %v716
    %v718 = vpop.xlane.xlu0 %717
    %v719 = vsel %vm71, %v709, 0.0
    %720 = vadd.xlane.f32.xlu0 %v719
    %v721 = vpop.xlane.xlu0 %720
    %v722 = vmul.f32 %v712, %v90
    %v723 = vmul.f32 %v715, %v90
    %v724 = vmul.f32 %v718, %v90
    %v725 = vmul.f32 %v721, %v90
    %v726 = vadd.f32 %v722, 1e-05
    %v727 = vadd.f32 %v723, 1e-05
    %v728 = vadd.f32 %v724, 1e-05
    %v729 = vadd.f32 %v725, 1e-05
    %v730 = vrsqrt.pop %v726
    %v731 = vmul.f32 %v730, %v726
    %v732 = vmul.f32 %v731, %v730
    %v733 = vmul.f32 0.5, %v732
    %v734 = vsub.f32 1.5, %v733
    %v735 = vmul.f32 %v730, %v734
    %vm736 = vweird.f32 %v726
    %vm737 = vweird.f32 %v730
    %vm738 = vmor %vm736, %vm737
    %v739 = vsel %vm738, %v730, %v735
    %v740 = vrsqrt.pop %v727
    %v741 = vmul.f32 %v740, %v727
    %v742 = vmul.f32 %v741, %v740
    %v743 = vmul.f32 0.5, %v742
    %v744 = vsub.f32 1.5, %v743
    %v745 = vmul.f32 %v740, %v744
    %vm746 = vweird.f32 %v727
    %vm747 = vweird.f32 %v740
    %vm748 = vmor %vm746, %vm747
    %v749 = vsel %vm748, %v740, %v745
    %v750 = vrsqrt.pop %v728
    %v751 = vmul.f32 %v750, %v728
    %v752 = vmul.f32 %v751, %v750
    %v753 = vmul.f32 0.5, %v752
    %v754 = vsub.f32 1.5, %v753
    %v755 = vmul.f32 %v750, %v754
    %vm756 = vweird.f32 %v728
    %vm757 = vweird.f32 %v750
    %vm758 = vmor %vm756, %vm757
    %v759 = vsel %vm758, %v750, %v755
    %v760 = vrsqrt.pop %v729
    %v761 = vmul.f32 %v760, %v729
    %v762 = vmul.f32 %v761, %v760
    %v763 = vmul.f32 0.5, %v762
    %v764 = vsub.f32 1.5, %v763
    %v765 = vmul.f32 %v760, %v764
    %vm766 = vweird.f32 %v729
    %vm767 = vweird.f32 %v760
    %vm768 = vmor %vm766, %vm767
    %v769 = vsel %vm768, %v760, %v765
    %v770 = vmul.f32 %v702, %v739
    %v771 = vmul.f32 %v703, %v749
    %v772 = vmul.f32 %v704, %v759
    %v773 = vmul.f32 %v705, %v769
    %v774 = vld [vmem:[%s2 + $0x80] sm:$0xff]
    %v775 = vld [vmem:[%s2 + $0x88] sm:$0xff]
    %v776 = vld [vmem:[%s2 + $0x90] sm:$0xff]
    %v777 = vld [vmem:[%s2 + $0x98] sm:$0xff]
    %v778 = vld [vmem:[%s2 + $0xa0] sm:$0x1]
    %v779 = vperm.slane %v778, 0
    %v781 = vsel %vm71, %v770, 0
    %v784 = vsel %vm71, %v771, 0
    %v787 = vsel %vm71, %v772, 0
    %v790 = vsel %vm71, %v773, 0
    %792 = vmatpush.msra.mxu0 0.0
    %793 = vmatpush.msra.mxu0 0.0
    %794 = vmatpush.msra.mxu0 0.0
    %795 = vmatpush.msra.mxu0 0.0
    %796 = vmatpush.msra.mxu0 0.0
    %797 = vmatpush.msra.mxu0 0.0
    %798 = vmatpush.msra.mxu0 0.0
    %799 = vmatpush.msra.mxu0 0.0
    %800 = vmatpush.msra.mxu0 0.0
    %801 = vmatpush.msra.mxu0 0.0
    %802 = vmatpush.msra.mxu0 0.0
    %803 = vmatpush.msra.mxu0 0.0
    %804 = vmatpush.msra.mxu0 %v777
    %805 = vmatpush.msra.mxu0 %v776
    %806 = vmatpush.msra.mxu0 %v775
    %807 = vmatpush.msra.mxu0 %v774
    %808 = vmatmul.f32.gmra.mxu0 %v781
    %v809 = vpop.f32.mrf.mxu0
    %v810 = vadd.f32 %v779, %v809
    %811 = vmatmul.f32.gmra.mxu0 %v784
    %v812 = vpop.f32.mrf.mxu0
    %v813 = vadd.f32 %v779, %v812
    %814 = vmatmul.f32.gmra.mxu0 %v787
    %v815 = vpop.f32.mrf.mxu0
    %v816 = vadd.f32 %v779, %v815
    %817 = vmatmul.f32.gmra.mxu0 %v790
    %v818 = vpop.f32.mrf.mxu0
    %v819 = vadd.f32 %v779, %v818
    %820 = vdwg.mxu0
    %v821 = vmul.f32 %v810, 0.5
    %v822 = vmul.f32 %v813, 0.5
    %v823 = vmul.f32 %v816, 0.5
    %v824 = vmul.f32 %v819, 0.5
    %v825 = vmul.f32 %v810, 0.70710677
    %v826 = vmul.f32 %v813, 0.70710677
    %v827 = vmul.f32 %v816, 0.70710677
    %v828 = vmul.f32 %v819, 0.70710677
    %v829 = vand.u32 2147483647, %v825
    %v830 = vand.u32 2147483647, %v826
    %v831 = vand.u32 2147483647, %v827
    %v832 = vand.u32 2147483647, %v828
    %v833 = vmul.f32 %v829, 0.3275911
    %v834 = vmul.f32 %v830, 0.3275911
    %v835 = vmul.f32 %v831, 0.3275911
    %v836 = vmul.f32 %v832, 0.3275911
    %v837 = vadd.f32 %v833, 1.0
    %v838 = vadd.f32 %v834, 1.0
    %v839 = vadd.f32 %v835, 1.0
    %v840 = vadd.f32 %v836, 1.0
    %v841 = vrcp.pop %v837
    %v842 = vmul.f32 %v837, %v841
    %v843 = vsub.f32 1.0, %v842
    %v844 = vmul.f32 %v841, %v843
    %v845 = vadd.f32 %v841, %v844
    %vm846 = vweird.f32 %v837
    %vm847 = vweird.f32 %v841
    %vm848 = vmor %vm846, %vm847
    %v849 = vsel %vm848, %v841, %v845
    %v850 = vand.u32 2147483647, %v837
    %vm851 = vcmp.eq.f32.partialorder %v850, 8.507059e+37
    %v852 = vand.u32 %v837, 2147483648
    %v853 = vor.u32 1.1754944e-38, %v852
    %v854 = vsel %vm851, %v853, %v849
    %v855 = vmul.f32 1.0, %v854
    %v856 = vrcp.pop %v838
    %v857 = vmul.f32 %v838, %v856
    %v858 = vsub.f32 1.0, %v857
    %v859 = vmul.f32 %v856, %v858
    %v860 = vadd.f32 %v856, %v859
    %vm861 = vweird.f32 %v838
    %vm862 = vweird.f32 %v856
    %vm863 = vmor %vm861, %vm862
    %v864 = vsel %vm863, %v856, %v860
    %v865 = vand.u32 2147483647, %v838
    %vm866 = vcmp.eq.f32.partialorder %v865, 8.507059e+37
    %v867 = vand.u32 %v838, 2147483648
    %v868 = vor.u32 1.1754944e-38, %v867
    %v869 = vsel %vm866, %v868, %v864
    %v870 = vmul.f32 1.0, %v869
    %v871 = vrcp.pop %v839
    %v872 = vmul.f32 %v839, %v871
    %v873 = vsub.f32 1.0, %v872
    %v874 = vmul.f32 %v871, %v873
    %v875 = vadd.f32 %v871, %v874
    %vm876 = vweird.f32 %v839
    %vm877 = vweird.f32 %v871
    %vm878 = vmor %vm876, %vm877
    %v879 = vsel %vm878, %v871, %v875
    %v880 = vand.u32 2147483647, %v839
    %vm881 = vcmp.eq.f32.partialorder %v880, 8.507059e+37
    %v882 = vand.u32 %v839, 2147483648
    %v883 = vor.u32 1.1754944e-38, %v882
    %v884 = vsel %vm881, %v883, %v879
    %v885 = vmul.f32 1.0, %v884
    %v886 = vrcp.pop %v840
    %v887 = vmul.f32 %v840, %v886
    %v888 = vsub.f32 1.0, %v887
    %v889 = vmul.f32 %v886, %v888
    %v890 = vadd.f32 %v886, %v889
    %vm891 = vweird.f32 %v840
    %vm892 = vweird.f32 %v886
    %vm893 = vmor %vm891, %vm892
    %v894 = vsel %vm893, %v886, %v890
    %v895 = vand.u32 2147483647, %v840
    %vm896 = vcmp.eq.f32.partialorder %v895, 8.507059e+37
    %v897 = vand.u32 %v840, 2147483648
    %v898 = vor.u32 1.1754944e-38, %v897
    %v899 = vsel %vm896, %v898, %v894
    %v900 = vmul.f32 1.0, %v899
    %v901 = vmul.f32 %v855, 1.0614054
    %v902 = vmul.f32 %v870, 1.0614054
    %v903 = vmul.f32 %v885, 1.0614054
    %v904 = vmul.f32 %v900, 1.0614054
    %v905 = vadd.f32 %v901, -1.4531521
    %v906 = vadd.f32 %v902, -1.4531521
    %v907 = vadd.f32 %v903, -1.4531521
    %v908 = vadd.f32 %v904, -1.4531521
    %v909 = vmul.f32 %v905, %v855
    %v910 = vmul.f32 %v906, %v870
    %v911 = vmul.f32 %v907, %v885
    %v912 = vmul.f32 %v908, %v900
    %v913 = vadd.f32 %v909, 1.4214138
    %v914 = vadd.f32 %v910, 1.4214138
    %v915 = vadd.f32 %v911, 1.4214138
    %v916 = vadd.f32 %v912, 1.4214138
    %v917 = vmul.f32 %v913, %v855
    %v918 = vmul.f32 %v914, %v870
    %v919 = vmul.f32 %v915, %v885
    %v920 = vmul.f32 %v916, %v900
    %v921 = vadd.f32 %v917, -0.28449672
    %v922 = vadd.f32 %v918, -0.28449672
    %v923 = vadd.f32 %v919, -0.28449672
    %v924 = vadd.f32 %v920, -0.28449672
    %v925 = vmul.f32 %v921, %v855
    %v926 = vmul.f32 %v922, %v870
    %v927 = vmul.f32 %v923, %v885
    %v928 = vmul.f32 %v924, %v900
    %v929 = vadd.f32 %v925, 0.2548296
    %v930 = vadd.f32 %v926, 0.2548296
    %v931 = vadd.f32 %v927, 0.2548296
    %v932 = vadd.f32 %v928, 0.2548296
    %v933 = vmul.f32 %v929, %v855
    %v934 = vmul.f32 %v930, %v870
    %v935 = vmul.f32 %v931, %v885
    %v936 = vmul.f32 %v932, %v900
    %v937 = vsub.f32 0.0, %v829
    %v938 = vsub.f32 0.0, %v830
    %v939 = vsub.f32 0.0, %v831
    %v940 = vsub.f32 0.0, %v832
    %v941 = vmul.f32 %v937, %v829
    %v942 = vmul.f32 %v938, %v830
    %v943 = vmul.f32 %v939, %v831
    %v944 = vmul.f32 %v940, %v832
    %v945 = vmul.f32 %v941, 1.442695
    %v946 = vpow.pop %v945
    %v947 = vmul.f32 %v942, 1.442695
    %v948 = vpow.pop %v947
    %v949 = vmul.f32 %v943, 1.442695
    %v950 = vpow.pop %v949
    %v951 = vmul.f32 %v944, 1.442695
    %v952 = vpow.pop %v951
    %v953 = vmul.f32 %v933, %v946
    %v954 = vmul.f32 %v934, %v948
    %v955 = vmul.f32 %v935, %v950
    %v956 = vmul.f32 %v936, %v952
    %v957 = vsub.f32 1.0, %v953
    %v958 = vsub.f32 1.0, %v954
    %v959 = vsub.f32 1.0, %v955
    %v960 = vsub.f32 1.0, %v956
    %vm961 = vcmp.ge.f32.partialorder %v825, 0.0
    %vm962 = vcmp.ge.f32.partialorder %v826, 0.0
    %vm963 = vcmp.ge.f32.partialorder %v827, 0.0
    %vm964 = vcmp.ge.f32.partialorder %v828, 0.0
    %v965 = vsub.f32 0.0, %v957
    %v966 = vsub.f32 0.0, %v958
    %v967 = vsub.f32 0.0, %v959
    %v968 = vsub.f32 0.0, %v960
    %v969 = vsel %vm961, %v957, %v965
    %v970 = vsel %vm962, %v958, %v966
    %v971 = vsel %vm963, %v959, %v967
    %v972 = vsel %vm964, %v960, %v968
    %v973 = vadd.f32 %v969, 1.0
    %v974 = vadd.f32 %v970, 1.0
    %v975 = vadd.f32 %v971, 1.0
    %v976 = vadd.f32 %v972, 1.0
    %v977 = vmul.f32 %v821, %v973
    %v978 = vmul.f32 %v822, %v974
    %v979 = vmul.f32 %v823, %v975
    %v980 = vmul.f32 %v824, %v976
    %v981 = vld [vmem:[%s2 + $0xa8] sm:$0xff]
    %v982 = vld [vmem:[%s2 + $0xb0] sm:$0xff]
    %v983 = vld [vmem:[%s2 + $0xb8] sm:$0xff]
    %v984 = vld [vmem:[%s2 + $0xc0] sm:$0xff]
    %v985 = vld [vmem:[%s2 + $0xc8] sm:$0xff]
    %v986 = vld [vmem:[%s2 + $0xd0] sm:$0xff]
    %v987 = vld [vmem:[%s2 + $0xd8] sm:$0xff]
    %v988 = vld [vmem:[%s2 + $0xe0] sm:$0xff]
    %vm989 = vcmask 523264
    %v991 = vsel %vm989, %v977, 0
    %v994 = vsel %vm989, %v978, 0
    %v997 = vsel %vm989, %v979, 0
    %v1000 = vsel %vm989, %v980, 0
    %1002 = vmatpush.msra.mxu0 0.0
    %1003 = vmatpush.msra.mxu0 0.0
    %1004 = vmatpush.msra.mxu0 0.0
    %1005 = vmatpush.msra.mxu0 0.0
    %1006 = vmatpush.msra.mxu0 0.0
    %1007 = vmatpush.msra.mxu0 0.0
    %1008 = vmatpush.msra.mxu0 0.0
    %1009 = vmatpush.msra.mxu0 0.0
    %1010 = vmatpush.msra.mxu0 %v988
    %1011 = vmatpush.msra.mxu0 %v987
    %1012 = vmatpush.msra.mxu0 %v986
    %1013 = vmatpush.msra.mxu0 %v985
    %1014 = vmatpush.msra.mxu0 %v984
    %1015 = vmatpush.msra.mxu0 %v983
    %1016 = vmatpush.msra.mxu0 %v982
    %1017 = vmatpush.msra.mxu0 %v981
    %1018 = vmatmul.f32.gmra.mxu0 %v991
    %v1019 = vpop.f32.mrf.mxu0
    %v1020 = vadd.f32 0.0, %v1019
    %1021 = vmatmul.f32.gmra.mxu0 %v994
    %v1022 = vpop.f32.mrf.mxu0
    %v1023 = vadd.f32 0.0, %v1022
    %1024 = vmatmul.f32.gmra.mxu0 %v997
    %v1025 = vpop.f32.mrf.mxu0
    %v1026 = vadd.f32 0.0, %v1025
    %1027 = vmatmul.f32.gmra.mxu0 %v1000
    %v1028 = vpop.f32.mrf.mxu0
    %v1029 = vadd.f32 0.0, %v1028
    %1030 = vdwg.mxu0
    %v1031 = vadd.f32 %v682, %v1020
    %v1032 = vadd.f32 %v683, %v1023
    %v1033 = vadd.f32 %v684, %v1026
    %v1034 = vadd.f32 %v685, %v1029
    %v1035 = vld [vmem:[%s2 + $0xe8] sm:$0x1]
    %v1036 = vperm.slane %v1035, 0
    %v1037 = vadd.f32 %v1031, %v1036
    %v1038 = vadd.f32 %v1032, %v1036
    %v1039 = vadd.f32 %v1033, %v1036
    %v1040 = vadd.f32 %v1034, %v1036
    %v1041 = vsel %vm71, %v1037, 0.0
    %1042 = vadd.xlane.f32.xlu0 %v1041
    %v1043 = vpop.xlane.xlu0 %1042
    %v1044 = vsel %vm71, %v1038, 0.0
    %1045 = vadd.xlane.f32.xlu0 %v1044
    %v1046 = vpop.xlane.xlu0 %1045
    %v1047 = vsel %vm71, %v1039, 0.0
    %1048 = vadd.xlane.f32.xlu0 %v1047
    %v1049 = vpop.xlane.xlu0 %1048
    %v1050 = vsel %vm71, %v1040, 0.0
    %1051 = vadd.xlane.f32.xlu0 %v1050
    %v1052 = vpop.xlane.xlu0 %1051
    %v1053 = vmul.f32 %v1043, %v90
    %v1054 = vmul.f32 %v1046, %v90
    %v1055 = vmul.f32 %v1049, %v90
    %v1056 = vmul.f32 %v1052, %v90
    %v1057 = vsub.f32 %v1037, %v1053
    %v1058 = vsub.f32 %v1038, %v1054
    %v1059 = vsub.f32 %v1039, %v1055
    %v1060 = vsub.f32 %v1040, %v1056
    %v1061 = vmul.f32 %v1057, %v1057
    %v1062 = vmul.f32 %v1058, %v1058
    %v1063 = vmul.f32 %v1059, %v1059
    %v1064 = vmul.f32 %v1060, %v1060
    %v1065 = vsel %vm71, %v1061, 0.0
    %1066 = vadd.xlane.f32.xlu0 %v1065
    %v1067 = vpop.xlane.xlu0 %1066
    %v1068 = vsel %vm71, %v1062, 0.0
    %1069 = vadd.xlane.f32.xlu0 %v1068
    %v1070 = vpop.xlane.xlu0 %1069
    %v1071 = vsel %vm71, %v1063, 0.0
    %1072 = vadd.xlane.f32.xlu0 %v1071
    %v1073 = vpop.xlane.xlu0 %1072
    %v1074 = vsel %vm71, %v1064, 0.0
    %1075 = vadd.xlane.f32.xlu0 %v1074
    %v1076 = vpop.xlane.xlu0 %1075
    %v1077 = vmul.f32 %v1067, %v90
    %v1078 = vmul.f32 %v1070, %v90
    %v1079 = vmul.f32 %v1073, %v90
    %v1080 = vmul.f32 %v1076, %v90
    %v1081 = vadd.f32 %v1077, 1e-05
    %v1082 = vadd.f32 %v1078, 1e-05
    %v1083 = vadd.f32 %v1079, 1e-05
    %v1084 = vadd.f32 %v1080, 1e-05
    %v1085 = vrsqrt.pop %v1081
    %v1086 = vmul.f32 %v1085, %v1081
    %v1087 = vmul.f32 %v1086, %v1085
    %v1088 = vmul.f32 0.5, %v1087
    %v1089 = vsub.f32 1.5, %v1088
    %v1090 = vmul.f32 %v1085, %v1089
    %vm1091 = vweird.f32 %v1081
    %vm1092 = vweird.f32 %v1085
    %vm1093 = vmor %vm1091, %vm1092
    %v1094 = vsel %vm1093, %v1085, %v1090
    %v1095 = vrsqrt.pop %v1082
    %v1096 = vmul.f32 %v1095, %v1082
    %v1097 = vmul.f32 %v1096, %v1095
    %v1098 = vmul.f32 0.5, %v1097
    %v1099 = vsub.f32 1.5, %v1098
    %v1100 = vmul.f32 %v1095, %v1099
    %vm1101 = vweird.f32 %v1082
    %vm1102 = vweird.f32 %v1095
    %vm1103 = vmor %vm1101, %vm1102
    %v1104 = vsel %vm1103, %v1095, %v1100
    %v1105 = vrsqrt.pop %v1083
    %v1106 = vmul.f32 %v1105, %v1083
    %v1107 = vmul.f32 %v1106, %v1105
    %v1108 = vmul.f32 0.5, %v1107
    %v1109 = vsub.f32 1.5, %v1108
    %v1110 = vmul.f32 %v1105, %v1109
    %vm1111 = vweird.f32 %v1083
    %vm1112 = vweird.f32 %v1105
    %vm1113 = vmor %vm1111, %vm1112
    %v1114 = vsel %vm1113, %v1105, %v1110
    %v1115 = vrsqrt.pop %v1084
    %v1116 = vmul.f32 %v1115, %v1084
    %v1117 = vmul.f32 %v1116, %v1115
    %v1118 = vmul.f32 0.5, %v1117
    %v1119 = vsub.f32 1.5, %v1118
    %v1120 = vmul.f32 %v1115, %v1119
    %vm1121 = vweird.f32 %v1084
    %vm1122 = vweird.f32 %v1115
    %vm1123 = vmor %vm1121, %vm1122
    %v1124 = vsel %vm1123, %v1115, %v1120
    %v1125 = vmul.f32 %v1057, %v1094
    %v1126 = vmul.f32 %v1058, %v1104
    %v1127 = vmul.f32 %v1059, %v1114
    %v1128 = vmul.f32 %v1060, %v1124
    %v1129 = vld [vmem:[%s2 + $0xf0] sm:$0xff]
    %v1130 = vld [vmem:[%s2 + $0xf8] sm:$0xff]
    %v1131 = vld [vmem:[%s2 + $0x100] sm:$0xff]
    %v1132 = vld [vmem:[%s2 + $0x108] sm:$0xff]
    %v1133 = vld [vmem:[%s2 + $0x110] sm:$0x1]
    %v1134 = vperm.slane %v1133, 0
    %v1136 = vsel %vm71, %v1125, 0
    %v1139 = vsel %vm71, %v1126, 0
    %v1142 = vsel %vm71, %v1127, 0
    %v1145 = vsel %vm71, %v1128, 0
    %1147 = vmatpush.msra.mxu0 0.0
    %1148 = vmatpush.msra.mxu0 0.0
    %1149 = vmatpush.msra.mxu0 0.0
    %1150 = vmatpush.msra.mxu0 0.0
    %1151 = vmatpush.msra.mxu0 0.0
    %1152 = vmatpush.msra.mxu0 0.0
    %1153 = vmatpush.msra.mxu0 0.0
    %1154 = vmatpush.msra.mxu0 0.0
    %1155 = vmatpush.msra.mxu0 0.0
    %1156 = vmatpush.msra.mxu0 0.0
    %1157 = vmatpush.msra.mxu0 0.0
    %1158 = vmatpush.msra.mxu0 0.0
    %1159 = vmatpush.msra.mxu0 %v1132
    %1160 = vmatpush.msra.mxu0 %v1131
    %1161 = vmatpush.msra.mxu0 %v1130
    %1162 = vmatpush.msra.mxu0 %v1129
    %1163 = vmatmul.f32.gmra.mxu0 %v1136
    %v1164 = vpop.f32.mrf.mxu0
    %v1165 = vadd.f32 %v1134, %v1164
    %1166 = vmatmul.f32.gmra.mxu0 %v1139
    %v1167 = vpop.f32.mrf.mxu0
    %v1168 = vadd.f32 %v1134, %v1167
    %1169 = vmatmul.f32.gmra.mxu0 %v1142
    %v1170 = vpop.f32.mrf.mxu0
    %v1171 = vadd.f32 %v1134, %v1170
    %1172 = vmatmul.f32.gmra.mxu0 %v1145
    %v1173 = vpop.f32.mrf.mxu0
    %v1174 = vadd.f32 %v1134, %v1173
    %1175 = vdwg.mxu0
    %v1176 = vld [vmem:[%s2 + $0x118] sm:$0x3]
    %v1177 = vld [vmem:[%s2 + $0x120] sm:$0x3]
    %v1178 = vperm.slane %v1176, 0
    %1180 = vrot.lane.b32.xlu0 %v1178, 16
    %v1181 = vpop.permute.xlu0 %1180
    %v1183 = vmul.f32 %v1165, %v1181
    %v1184 = vmul.f32 %v1168, %v1181
    %1187 = vrot.lane.b32.xlu0 %v1183, 112
    %v1188 = vpop.permute.xlu0 %1187
    %1189 = vrot.lane.b32.xlu0 %v1184, 112
    %v1190 = vpop.permute.xlu0 %1189
    %v1192 = vsel %vm229, %v1165, 0
    %v1195 = vsel %vm229, %v1168, 0
    %v1197 = vsel %vm229, %v1188, 0
    %v1199 = vsel %vm229, %v1190, 0
    %1201 = vmatpush.xpose.msra.mxu0 0.0
    %1202 = vmatpush.xpose.msra.mxu0 0.0
    %1203 = vmatpush.xpose.msra.mxu0 0.0
    %1204 = vmatpush.xpose.msra.mxu0 0.0
    %1205 = vmatpush.xpose.msra.mxu0 0.0
    %1206 = vmatpush.xpose.msra.mxu0 0.0
    %1207 = vmatpush.xpose.msra.mxu0 0.0
    %1208 = vmatpush.xpose.msra.mxu0 0.0
    %1209 = vmatpush.xpose.msra.mxu0 0.0
    %1210 = vmatpush.xpose.msra.mxu0 0.0
    %1211 = vmatpush.xpose.msra.mxu0 0.0
    %1212 = vmatpush.xpose.msra.mxu0 0.0
    %1213 = vmatpush.xpose.msra.mxu0 0.0
    %1214 = vmatpush.xpose.msra.mxu0 0.0
    %1215 = vmatpush.xpose.msra.mxu0 %v1199
    %1216 = vmatpush.xpose.msra.mxu0 %v1197
    %1217 = vmatmul.f32.gmra.mxu0 %v1192
    %v1218 = vpop.f32.mrf.mxu0
    %v1219 = vadd.f32 0.0, %v1218
    %1220 = vmatmul.f32.gmra.mxu0 %v1195
    %v1221 = vpop.f32.mrf.mxu0
    %v1222 = vadd.f32 0.0, %v1221
    %1223 = vdwg.mxu0
    %v1224 = vsel %vm229, %v1219, -inf
    %1225 = vmax.xlane.f32.xlu0 %v1224
    %v1226 = vpop.xlane.xlu0 %1225
    %v1227 = vsel %vm229, %v1222, -inf
    %1228 = vmax.xlane.f32.xlu0 %v1227
    %v1229 = vpop.xlane.xlu0 %1228
    %v1230 = vsub.f32 %v1219, %v1226
    %v1231 = vsub.f32 %v1222, %v1229
    %v1232 = vmul.f32 %v1230, 1.442695
    %v1233 = vpow.pop %v1232
    %v1234 = vmul.f32 %v1231, 1.442695
    %v1235 = vpow.pop %v1234
    %v1236 = vsel %vm229, %v1233, 0.0
    %1237 = vadd.xlane.f32.xlu0 %v1236
    %v1238 = vpop.xlane.xlu0 %1237
    %v1239 = vsel %vm229, %v1235, 0.0
    %1240 = vadd.xlane.f32.xlu0 %v1239
    %v1241 = vpop.xlane.xlu0 %1240
    %v1242 = vrcp.pop %v1238
    %v1243 = vrcp.pop %v1241
    %v1244 = vmul.f32 %v1233, %v1242
    %v1245 = vmul.f32 %v1235, %v1243
    %v1246 = vperm.slane %v1177, 0
    %1248 = vrot.lane.b32.xlu0 %v1246, 32
    %v1249 = vpop.permute.xlu0 %1248
    %v1251 = vmul.f32 %v1165, %v1249
    %v1252 = vmul.f32 %v1168, %v1249
    %v1253 = vperm.slane %v1176, 1
    %1255 = vrot.lane.b32.xlu0 %v1253, 16
    %v1256 = vpop.permute.xlu0 %1255
    %v1258 = vmul.f32 %v1165, %v1256
    %v1259 = vmul.f32 %v1168, %v1256
    %1262 = vrot.lane.b32.xlu0 %v1258, 112
    %v1263 = vpop.permute.xlu0 %1262
    %1264 = vrot.lane.b32.xlu0 %v1259, 112
    %v1265 = vpop.permute.xlu0 %1264
    %v1266 = vsel %vm229, %v1263, 0
    %v1268 = vsel %vm229, %v1265, 0
    %1270 = vmatpush.xpose.msra.mxu0 0.0
    %1271 = vmatpush.xpose.msra.mxu0 0.0
    %1272 = vmatpush.xpose.msra.mxu0 0.0
    %1273 = vmatpush.xpose.msra.mxu0 0.0
    %1274 = vmatpush.xpose.msra.mxu0 0.0
    %1275 = vmatpush.xpose.msra.mxu0 0.0
    %1276 = vmatpush.xpose.msra.mxu0 0.0
    %1277 = vmatpush.xpose.msra.mxu0 0.0
    %1278 = vmatpush.xpose.msra.mxu0 0.0
    %1279 = vmatpush.xpose.msra.mxu0 0.0
    %1280 = vmatpush.xpose.msra.mxu0 0.0
    %1281 = vmatpush.xpose.msra.mxu0 0.0
    %1282 = vmatpush.xpose.msra.mxu0 0.0
    %1283 = vmatpush.xpose.msra.mxu0 0.0
    %1284 = vmatpush.xpose.msra.mxu0 %v1268
    %1285 = vmatpush.xpose.msra.mxu0 %v1266
    %1286 = vmatmul.f32.gmra.mxu0 %v1192
    %v1287 = vpop.f32.mrf.mxu0
    %v1288 = vadd.f32 0.0, %v1287
    %1289 = vmatmul.f32.gmra.mxu0 %v1195
    %v1290 = vpop.f32.mrf.mxu0
    %v1291 = vadd.f32 0.0, %v1290
    %1292 = vdwg.mxu0
    %v1293 = vsel %vm229, %v1288, -inf
    %1294 = vmax.xlane.f32.xlu0 %v1293
    %v1295 = vpop.xlane.xlu0 %1294
    %v1296 = vsel %vm229, %v1291, -inf
    %1297 = vmax.xlane.f32.xlu0 %v1296
    %v1298 = vpop.xlane.xlu0 %1297
    %v1299 = vsub.f32 %v1288, %v1295
    %v1300 = vsub.f32 %v1291, %v1298
    %v1301 = vmul.f32 %v1299, 1.442695
    %v1302 = vpow.pop %v1301
    %v1303 = vmul.f32 %v1300, 1.442695
    %v1304 = vpow.pop %v1303
    %v1305 = vsel %vm229, %v1302, 0.0
    %1306 = vadd.xlane.f32.xlu0 %v1305
    %v1307 = vpop.xlane.xlu0 %1306
    %v1308 = vsel %vm229, %v1304, 0.0
    %1309 = vadd.xlane.f32.xlu0 %v1308
    %v1310 = vpop.xlane.xlu0 %1309
    %v1311 = vrcp.pop %v1307
    %v1312 = vrcp.pop %v1310
    %v1313 = vmul.f32 %v1302, %v1311
    %v1314 = vmul.f32 %v1304, %v1312
    %v1315 = vperm.slane %v1177, 1
    %1317 = vrot.lane.b32.xlu0 %v1315, 32
    %v1318 = vpop.permute.xlu0 %1317
    %v1320 = vmul.f32 %v1165, %v1318
    %v1321 = vmul.f32 %v1168, %v1318
    %1324 = vrot.lane.b32.xlu0 %v1320, 96
    %v1325 = vpop.permute.xlu0 %1324
    %1326 = vrot.lane.b32.xlu0 %v1321, 96
    %v1327 = vpop.permute.xlu0 %1326
    %v1331 = vsel %vm229, %v1313, 0
    %v1334 = vsel %vm229, %v1314, 0
    %1336 = vmatpush.msra.mxu0 0.0
    %1337 = vmatpush.msra.mxu0 0.0
    %1338 = vmatpush.msra.mxu0 0.0
    %1339 = vmatpush.msra.mxu0 0.0
    %1340 = vmatpush.msra.mxu0 0.0
    %1341 = vmatpush.msra.mxu0 0.0
    %1342 = vmatpush.msra.mxu0 0.0
    %1343 = vmatpush.msra.mxu0 0.0
    %1344 = vmatpush.msra.mxu0 0.0
    %1345 = vmatpush.msra.mxu0 0.0
    %1346 = vmatpush.msra.mxu0 0.0
    %1347 = vmatpush.msra.mxu0 0.0
    %1348 = vmatpush.msra.mxu0 0.0
    %1349 = vmatpush.msra.mxu0 0.0
    %1350 = vmatpush.msra.mxu0 %v1327
    %1351 = vmatpush.msra.mxu0 %v1325
    %1352 = vmatmul.f32.gmra.mxu0 %v1331
    %v1353 = vpop.f32.mrf.mxu0
    %v1354 = vadd.f32 0.0, %v1353
    %1355 = vmatmul.f32.gmra.mxu0 %v1334
    %v1356 = vpop.f32.mrf.mxu0
    %v1357 = vadd.f32 0.0, %v1356
    %1358 = vdwg.mxu0
    %1361 = vrot.lane.b32.xlu0 %v1251, 96
    %v1362 = vpop.permute.xlu0 %1361
    %1363 = vrot.lane.b32.xlu0 %v1252, 96
    %v1364 = vpop.permute.xlu0 %1363
    %v1368 = vsel %vm229, %v1244, 0
    %v1371 = vsel %vm229, %v1245, 0
    %1373 = vmatpush.msra.mxu0 0.0
    %1374 = vmatpush.msra.mxu0 0.0
    %1375 = vmatpush.msra.mxu0 0.0
    %1376 = vmatpush.msra.mxu0 0.0
    %1377 = vmatpush.msra.mxu0 0.0
    %1378 = vmatpush.msra.mxu0 0.0
    %1379 = vmatpush.msra.mxu0 0.0
    %1380 = vmatpush.msra.mxu0 0.0
    %1381 = vmatpush.msra.mxu0 0.0
    %1382 = vmatpush.msra.mxu0 0.0
    %1383 = vmatpush.msra.mxu0 0.0
    %1384 = vmatpush.msra.mxu0 0.0
    %1385 = vmatpush.msra.mxu0 0.0
    %1386 = vmatpush.msra.mxu0 0.0
    %1387 = vmatpush.msra.mxu0 %v1364
    %1388 = vmatpush.msra.mxu0 %v1362
    %1389 = vmatmul.f32.gmra.mxu0 %v1368
    %v1390 = vpop.f32.mrf.mxu0
    %v1391 = vadd.f32 %v1354, %v1390
    %1392 = vmatmul.f32.gmra.mxu0 %v1371
    %v1393 = vpop.f32.mrf.mxu0
    %v1394 = vadd.f32 %v1357, %v1393
    %1395 = vdwg.mxu0
    %v1396 = vmul.f32 %v1171, %v1181
    %v1397 = vmul.f32 %v1174, %v1181
    %1400 = vrot.lane.b32.xlu0 %v1396, 112
    %v1401 = vpop.permute.xlu0 %1400
    %1402 = vrot.lane.b32.xlu0 %v1397, 112
    %v1403 = vpop.permute.xlu0 %1402
    %v1405 = vsel %vm229, %v1171, 0
    %v1408 = vsel %vm229, %v1174, 0
    %v1410 = vsel %vm229, %v1401, 0
    %v1412 = vsel %vm229, %v1403, 0
    %1414 = vmatpush.xpose.msra.mxu0 0.0
    %1415 = vmatpush.xpose.msra.mxu0 0.0
    %1416 = vmatpush.xpose.msra.mxu0 0.0
    %1417 = vmatpush.xpose.msra.mxu0 0.0
    %1418 = vmatpush.xpose.msra.mxu0 0.0
    %1419 = vmatpush.xpose.msra.mxu0 0.0
    %1420 = vmatpush.xpose.msra.mxu0 0.0
    %1421 = vmatpush.xpose.msra.mxu0 0.0
    %1422 = vmatpush.xpose.msra.mxu0 0.0
    %1423 = vmatpush.xpose.msra.mxu0 0.0
    %1424 = vmatpush.xpose.msra.mxu0 0.0
    %1425 = vmatpush.xpose.msra.mxu0 0.0
    %1426 = vmatpush.xpose.msra.mxu0 0.0
    %1427 = vmatpush.xpose.msra.mxu0 0.0
    %1428 = vmatpush.xpose.msra.mxu0 %v1412
    %1429 = vmatpush.xpose.msra.mxu0 %v1410
    %1430 = vmatmul.f32.gmra.mxu0 %v1405
    %v1431 = vpop.f32.mrf.mxu0
    %v1432 = vadd.f32 0.0, %v1431
    %1433 = vmatmul.f32.gmra.mxu0 %v1408
    %v1434 = vpop.f32.mrf.mxu0
    %v1435 = vadd.f32 0.0, %v1434
    %1436 = vdwg.mxu0
    %v1437 = vsel %vm229, %v1432, -inf
    %1438 = vmax.xlane.f32.xlu0 %v1437
    %v1439 = vpop.xlane.xlu0 %1438
    %v1440 = vsel %vm229, %v1435, -inf
    %1441 = vmax.xlane.f32.xlu0 %v1440
    %v1442 = vpop.xlane.xlu0 %1441
    %v1443 = vsub.f32 %v1432, %v1439
    %v1444 = vsub.f32 %v1435, %v1442
    %v1445 = vmul.f32 %v1443, 1.442695
    %v1446 = vpow.pop %v1445
    %v1447 = vmul.f32 %v1444, 1.442695
    %v1448 = vpow.pop %v1447
    %v1449 = vsel %vm229, %v1446, 0.0
    %1450 = vadd.xlane.f32.xlu0 %v1449
    %v1451 = vpop.xlane.xlu0 %1450
    %v1452 = vsel %vm229, %v1448, 0.0
    %1453 = vadd.xlane.f32.xlu0 %v1452
    %v1454 = vpop.xlane.xlu0 %1453
    %v1455 = vrcp.pop %v1451
    %v1456 = vrcp.pop %v1454
    %v1457 = vmul.f32 %v1446, %v1455
    %v1458 = vmul.f32 %v1448, %v1456
    %v1459 = vmul.f32 %v1171, %v1249
    %v1460 = vmul.f32 %v1174, %v1249
    %v1461 = vmul.f32 %v1171, %v1256
    %v1462 = vmul.f32 %v1174, %v1256
    %1465 = vrot.lane.b32.xlu0 %v1461, 112
    %v1466 = vpop.permute.xlu0 %1465
    %1467 = vrot.lane.b32.xlu0 %v1462, 112
    %v1468 = vpop.permute.xlu0 %1467
    %v1469 = vsel %vm229, %v1466, 0
    %v1471 = vsel %vm229, %v1468, 0
    %1473 = vmatpush.xpose.msra.mxu0 0.0
    %1474 = vmatpush.xpose.msra.mxu0 0.0
    %1475 = vmatpush.xpose.msra.mxu0 0.0
    %1476 = vmatpush.xpose.msra.mxu0 0.0
    %1477 = vmatpush.xpose.msra.mxu0 0.0
    %1478 = vmatpush.xpose.msra.mxu0 0.0
    %1479 = vmatpush.xpose.msra.mxu0 0.0
    %1480 = vmatpush.xpose.msra.mxu0 0.0
    %1481 = vmatpush.xpose.msra.mxu0 0.0
    %1482 = vmatpush.xpose.msra.mxu0 0.0
    %1483 = vmatpush.xpose.msra.mxu0 0.0
    %1484 = vmatpush.xpose.msra.mxu0 0.0
    %1485 = vmatpush.xpose.msra.mxu0 0.0
    %1486 = vmatpush.xpose.msra.mxu0 0.0
    %1487 = vmatpush.xpose.msra.mxu0 %v1471
    %1488 = vmatpush.xpose.msra.mxu0 %v1469
    %1489 = vmatmul.f32.gmra.mxu0 %v1405
    %v1490 = vpop.f32.mrf.mxu0
    %v1491 = vadd.f32 0.0, %v1490
    %1492 = vmatmul.f32.gmra.mxu0 %v1408
    %v1493 = vpop.f32.mrf.mxu0
    %v1494 = vadd.f32 0.0, %v1493
    %1495 = vdwg.mxu0
    %v1496 = vsel %vm229, %v1491, -inf
    %1497 = vmax.xlane.f32.xlu0 %v1496
    %v1498 = vpop.xlane.xlu0 %1497
    %v1499 = vsel %vm229, %v1494, -inf
    %1500 = vmax.xlane.f32.xlu0 %v1499
    %v1501 = vpop.xlane.xlu0 %1500
    %v1502 = vsub.f32 %v1491, %v1498
    %v1503 = vsub.f32 %v1494, %v1501
    %v1504 = vmul.f32 %v1502, 1.442695
    %v1505 = vpow.pop %v1504
    %v1506 = vmul.f32 %v1503, 1.442695
    %v1507 = vpow.pop %v1506
    %v1508 = vsel %vm229, %v1505, 0.0
    %1509 = vadd.xlane.f32.xlu0 %v1508
    %v1510 = vpop.xlane.xlu0 %1509
    %v1511 = vsel %vm229, %v1507, 0.0
    %1512 = vadd.xlane.f32.xlu0 %v1511
    %v1513 = vpop.xlane.xlu0 %1512
    %v1514 = vrcp.pop %v1510
    %v1515 = vrcp.pop %v1513
    %v1516 = vmul.f32 %v1505, %v1514
    %v1517 = vmul.f32 %v1507, %v1515
    %v1518 = vmul.f32 %v1171, %v1318
    %v1519 = vmul.f32 %v1174, %v1318
    %1522 = vrot.lane.b32.xlu0 %v1518, 96
    %v1523 = vpop.permute.xlu0 %1522
    %1524 = vrot.lane.b32.xlu0 %v1519, 96
    %v1525 = vpop.permute.xlu0 %1524
    %v1529 = vsel %vm229, %v1516, 0
    %v1532 = vsel %vm229, %v1517, 0
    %1534 = vmatpush.msra.mxu0 0.0
    %1535 = vmatpush.msra.mxu0 0.0
    %1536 = vmatpush.msra.mxu0 0.0
    %1537 = vmatpush.msra.mxu0 0.0
    %1538 = vmatpush.msra.mxu0 0.0
    %1539 = vmatpush.msra.mxu0 0.0
    %1540 = vmatpush.msra.mxu0 0.0
    %1541 = vmatpush.msra.mxu0 0.0
    %1542 = vmatpush.msra.mxu0 0.0
    %1543 = vmatpush.msra.mxu0 0.0
    %1544 = vmatpush.msra.mxu0 0.0
    %1545 = vmatpush.msra.mxu0 0.0
    %1546 = vmatpush.msra.mxu0 0.0
    %1547 = vmatpush.msra.mxu0 0.0
    %1548 = vmatpush.msra.mxu0 %v1525
    %1549 = vmatpush.msra.mxu0 %v1523
    %1550 = vmatmul.f32.gmra.mxu0 %v1529
    %v1551 = vpop.f32.mrf.mxu0
    %v1552 = vadd.f32 0.0, %v1551
    %1553 = vmatmul.f32.gmra.mxu0 %v1532
    %v1554 = vpop.f32.mrf.mxu0
    %v1555 = vadd.f32 0.0, %v1554
    %1556 = vdwg.mxu0
    %1559 = vrot.lane.b32.xlu0 %v1459, 96
    %v1560 = vpop.permute.xlu0 %1559
    %1561 = vrot.lane.b32.xlu0 %v1460, 96
    %v1562 = vpop.permute.xlu0 %1561
    %v1566 = vsel %vm229, %v1457, 0
    %v1569 = vsel %vm229, %v1458, 0
    %1571 = vmatpush.msra.mxu0 0.0
    %1572 = vmatpush.msra.mxu0 0.0
    %1573 = vmatpush.msra.mxu0 0.0
    %1574 = vmatpush.msra.mxu0 0.0
    %1575 = vmatpush.msra.mxu0 0.0
    %1576 = vmatpush.msra.mxu0 0.0
    %1577 = vmatpush.msra.mxu0 0.0
    %1578 = vmatpush.msra.mxu0 0.0
    %1579 = vmatpush.msra.mxu0 0.0
    %1580 = vmatpush.msra.mxu0 0.0
    %1581 = vmatpush.msra.mxu0 0.0
    %1582 = vmatpush.msra.mxu0 0.0
    %1583 = vmatpush.msra.mxu0 0.0
    %1584 = vmatpush.msra.mxu0 0.0
    %1585 = vmatpush.msra.mxu0 %v1562
    %1586 = vmatpush.msra.mxu0 %v1560
    %1587 = vmatmul.f32.gmra.mxu0 %v1566
    %v1588 = vpop.f32.mrf.mxu0
    %v1589 = vadd.f32 %v1552, %v1588
    %1590 = vmatmul.f32.gmra.mxu0 %v1569
    %v1591 = vpop.f32.mrf.mxu0
    %v1592 = vadd.f32 %v1555, %v1591
    %1593 = vdwg.mxu0
    %v1594 = vld [vmem:[%s2 + $0x128] sm:$0xff]
    %v1595 = vld [vmem:[%s2 + $0x130] sm:$0xff]
    %v1597 = vsel %vm229, %v1391, 0
    %v1600 = vsel %vm229, %v1394, 0
    %v1603 = vsel %vm229, %v1589, 0
    %v1606 = vsel %vm229, %v1592, 0
    %1608 = vmatpush.msra.mxu0 0.0
    %1609 = vmatpush.msra.mxu0 0.0
    %1610 = vmatpush.msra.mxu0 0.0
    %1611 = vmatpush.msra.mxu0 0.0
    %1612 = vmatpush.msra.mxu0 0.0
    %1613 = vmatpush.msra.mxu0 0.0
    %1614 = vmatpush.msra.mxu0 0.0
    %1615 = vmatpush.msra.mxu0 0.0
    %1616 = vmatpush.msra.mxu0 0.0
    %1617 = vmatpush.msra.mxu0 0.0
    %1618 = vmatpush.msra.mxu0 0.0
    %1619 = vmatpush.msra.mxu0 0.0
    %1620 = vmatpush.msra.mxu0 0.0
    %1621 = vmatpush.msra.mxu0 0.0
    %1622 = vmatpush.msra.mxu0 %v1595
    %1623 = vmatpush.msra.mxu0 %v1594
    %1624 = vmatmul.f32.gmra.mxu0 %v1597
    %v1625 = vpop.f32.mrf.mxu0
    %v1626 = vadd.f32 0.0, %v1625
    %1627 = vmatmul.f32.gmra.mxu0 %v1600
    %v1628 = vpop.f32.mrf.mxu0
    %v1629 = vadd.f32 0.0, %v1628
    %1630 = vmatmul.f32.gmra.mxu0 %v1603
    %v1631 = vpop.f32.mrf.mxu0
    %v1632 = vadd.f32 0.0, %v1631
    %1633 = vmatmul.f32.gmra.mxu0 %v1606
    %v1634 = vpop.f32.mrf.mxu0
    %v1635 = vadd.f32 0.0, %v1634
    %1636 = vdwg.mxu0
    %v1637 = vadd.f32 %v1037, %v1626
    %v1638 = vadd.f32 %v1038, %v1629
    %v1639 = vadd.f32 %v1039, %v1632
    %v1640 = vadd.f32 %v1040, %v1635
    %v1641 = vld [vmem:[%s2 + $0x138] sm:$0x1]
    %v1642 = vperm.slane %v1641, 0
    %v1643 = vadd.f32 %v1637, %v1642
    %v1644 = vadd.f32 %v1638, %v1642
    %v1645 = vadd.f32 %v1639, %v1642
    %v1646 = vadd.f32 %v1640, %v1642
    %v1647 = vsel %vm71, %v1643, 0.0
    %1648 = vadd.xlane.f32.xlu0 %v1647
    %v1649 = vpop.xlane.xlu0 %1648
    %v1650 = vsel %vm71, %v1644, 0.0
    %1651 = vadd.xlane.f32.xlu0 %v1650
    %v1652 = vpop.xlane.xlu0 %1651
    %v1653 = vsel %vm71, %v1645, 0.0
    %1654 = vadd.xlane.f32.xlu0 %v1653
    %v1655 = vpop.xlane.xlu0 %1654
    %v1656 = vsel %vm71, %v1646, 0.0
    %1657 = vadd.xlane.f32.xlu0 %v1656
    %v1658 = vpop.xlane.xlu0 %1657
    %v1659 = vmul.f32 %v1649, %v90
    %v1660 = vmul.f32 %v1652, %v90
    %v1661 = vmul.f32 %v1655, %v90
    %v1662 = vmul.f32 %v1658, %v90
    %v1663 = vsub.f32 %v1643, %v1659
    %v1664 = vsub.f32 %v1644, %v1660
    %v1665 = vsub.f32 %v1645, %v1661
    %v1666 = vsub.f32 %v1646, %v1662
    %v1667 = vmul.f32 %v1663, %v1663
    %v1668 = vmul.f32 %v1664, %v1664
    %v1669 = vmul.f32 %v1665, %v1665
    %v1670 = vmul.f32 %v1666, %v1666
    %v1671 = vsel %vm71, %v1667, 0.0
    %1672 = vadd.xlane.f32.xlu0 %v1671
    %v1673 = vpop.xlane.xlu0 %1672
    %v1674 = vsel %vm71, %v1668, 0.0
    %1675 = vadd.xlane.f32.xlu0 %v1674
    %v1676 = vpop.xlane.xlu0 %1675
    %v1677 = vsel %vm71, %v1669, 0.0
    %1678 = vadd.xlane.f32.xlu0 %v1677
    %v1679 = vpop.xlane.xlu0 %1678
    %v1680 = vsel %vm71, %v1670, 0.0
    %1681 = vadd.xlane.f32.xlu0 %v1680
    %v1682 = vpop.xlane.xlu0 %1681
    %v1683 = vmul.f32 %v1673, %v90
    %v1684 = vmul.f32 %v1676, %v90
    %v1685 = vmul.f32 %v1679, %v90
    %v1686 = vmul.f32 %v1682, %v90
    %v1687 = vadd.f32 %v1683, 1e-05
    %v1688 = vadd.f32 %v1684, 1e-05
    %v1689 = vadd.f32 %v1685, 1e-05
    %v1690 = vadd.f32 %v1686, 1e-05
    %v1691 = vrsqrt.pop %v1687
    %v1692 = vmul.f32 %v1691, %v1687
    %v1693 = vmul.f32 %v1692, %v1691
    %v1694 = vmul.f32 0.5, %v1693
    %v1695 = vsub.f32 1.5, %v1694
    %v1696 = vmul.f32 %v1691, %v1695
    %vm1697 = vweird.f32 %v1687
    %vm1698 = vweird.f32 %v1691
    %vm1699 = vmor %vm1697, %vm1698
    %v1700 = vsel %vm1699, %v1691, %v1696
    %v1701 = vrsqrt.pop %v1688
    %v1702 = vmul.f32 %v1701, %v1688
    %v1703 = vmul.f32 %v1702, %v1701
    %v1704 = vmul.f32 0.5, %v1703
    %v1705 = vsub.f32 1.5, %v1704
    %v1706 = vmul.f32 %v1701, %v1705
    %vm1707 = vweird.f32 %v1688
    %vm1708 = vweird.f32 %v1701
    %vm1709 = vmor %vm1707, %vm1708
    %v1710 = vsel %vm1709, %v1701, %v1706
    %v1711 = vrsqrt.pop %v1689
    %v1712 = vmul.f32 %v1711, %v1689
    %v1713 = vmul.f32 %v1712, %v1711
    %v1714 = vmul.f32 0.5, %v1713
    %v1715 = vsub.f32 1.5, %v1714
    %v1716 = vmul.f32 %v1711, %v1715
    %vm1717 = vweird.f32 %v1689
    %vm1718 = vweird.f32 %v1711
    %vm1719 = vmor %vm1717, %vm1718
    %v1720 = vsel %vm1719, %v1711, %v1716
    %v1721 = vrsqrt.pop %v1690
    %v1722 = vmul.f32 %v1721, %v1690
    %v1723 = vmul.f32 %v1722, %v1721
    %v1724 = vmul.f32 0.5, %v1723
    %v1725 = vsub.f32 1.5, %v1724
    %v1726 = vmul.f32 %v1721, %v1725
    %vm1727 = vweird.f32 %v1690
    %vm1728 = vweird.f32 %v1721
    %vm1729 = vmor %vm1727, %vm1728
    %v1730 = vsel %vm1729, %v1721, %v1726
    %v1731 = vmul.f32 %v1663, %v1700
    %v1732 = vmul.f32 %v1664, %v1710
    %v1733 = vmul.f32 %v1665, %v1720
    %v1734 = vmul.f32 %v1666, %v1730
    %v1735 = vld [vmem:[%s2 + $0x140] sm:$0xff]
    %v1736 = vld [vmem:[%s2 + $0x148] sm:$0xff]
    %v1737 = vld [vmem:[%s2 + $0x150] sm:$0xff]
    %v1738 = vld [vmem:[%s2 + $0x158] sm:$0xff]
    %v1739 = vld [vmem:[%s2 + $0x160] sm:$0x1]
    %v1740 = vperm.slane %v1739, 0
    %v1742 = vsel %vm71, %v1731, 0
    %v1745 = vsel %vm71, %v1732, 0
    %v1748 = vsel %vm71, %v1733, 0
    %v1751 = vsel %vm71, %v1734, 0
    %1753 = vmatpush.msra.mxu0 0.0
    %1754 = vmatpush.msra.mxu0 0.0
    %1755 = vmatpush.msra.mxu0 0.0
    %1756 = vmatpush.msra.mxu0 0.0
    %1757 = vmatpush.msra.mxu0 0.0
    %1758 = vmatpush.msra.mxu0 0.0
    %1759 = vmatpush.msra.mxu0 0.0
    %1760 = vmatpush.msra.mxu0 0.0
    %1761 = vmatpush.msra.mxu0 0.0
    %1762 = vmatpush.msra.mxu0 0.0
    %1763 = vmatpush.msra.mxu0 0.0
    %1764 = vmatpush.msra.mxu0 0.0
    %1765 = vmatpush.msra.mxu0 %v1738
    %1766 = vmatpush.msra.mxu0 %v1737
    %1767 = vmatpush.msra.mxu0 %v1736
    %1768 = vmatpush.msra.mxu0 %v1735
    %1769 = vmatmul.f32.gmra.mxu0 %v1742
    %v1770 = vpop.f32.mrf.mxu0
    %v1771 = vadd.f32 %v1740, %v1770
    %1772 = vmatmul.f32.gmra.mxu0 %v1745
    %v1773 = vpop.f32.mrf.mxu0
    %v1774 = vadd.f32 %v1740, %v1773
    %1775 = vmatmul.f32.gmra.mxu0 %v1748
    %v1776 = vpop.f32.mrf.mxu0
    %v1777 = vadd.f32 %v1740, %v1776
    %1778 = vmatmul.f32.gmra.mxu0 %v1751
    %v1779 = vpop.f32.mrf.mxu0
    %v1780 = vadd.f32 %v1740, %v1779
    %1781 = vdwg.mxu0
    %v1782 = vmul.f32 %v1771, 0.5
    %v1783 = vmul.f32 %v1774, 0.5
    %v1784 = vmul.f32 %v1777, 0.5
    %v1785 = vmul.f32 %v1780, 0.5
    %v1786 = vmul.f32 %v1771, 0.70710677
    %v1787 = vmul.f32 %v1774, 0.70710677
    %v1788 = vmul.f32 %v1777, 0.70710677
    %v1789 = vmul.f32 %v1780, 0.70710677
    %v1790 = vand.u32 2147483647, %v1786
    %v1791 = vand.u32 2147483647, %v1787
    %v1792 = vand.u32 2147483647, %v1788
    %v1793 = vand.u32 2147483647, %v1789
    %v1794 = vmul.f32 %v1790, 0.3275911
    %v1795 = vmul.f32 %v1791, 0.3275911
    %v1796 = vmul.f32 %v1792, 0.3275911
    %v1797 = vmul.f32 %v1793, 0.3275911
    %v1798 = vadd.f32 %v1794, 1.0
    %v1799 = vadd.f32 %v1795, 1.0
    %v1800 = vadd.f32 %v1796, 1.0
    %v1801 = vadd.f32 %v1797, 1.0
    %v1802 = vrcp.pop %v1798
    %v1803 = vmul.f32 %v1798, %v1802
    %v1804 = vsub.f32 1.0, %v1803
    %v1805 = vmul.f32 %v1802, %v1804
    %v1806 = vadd.f32 %v1802, %v1805
    %vm1807 = vweird.f32 %v1798
    %vm1808 = vweird.f32 %v1802
    %vm1809 = vmor %vm1807, %vm1808
    %v1810 = vsel %vm1809, %v1802, %v1806
    %v1811 = vand.u32 2147483647, %v1798
    %vm1812 = vcmp.eq.f32.partialorder %v1811, 8.507059e+37
    %v1813 = vand.u32 %v1798, 2147483648
    %v1814 = vor.u32 1.1754944e-38, %v1813
    %v1815 = vsel %vm1812, %v1814, %v1810
    %v1816 = vmul.f32 1.0, %v1815
    %v1817 = vrcp.pop %v1799
    %v1818 = vmul.f32 %v1799, %v1817
    %v1819 = vsub.f32 1.0, %v1818
    %v1820 = vmul.f32 %v1817, %v1819
    %v1821 = vadd.f32 %v1817, %v1820
    %vm1822 = vweird.f32 %v1799
    %vm1823 = vweird.f32 %v1817
    %vm1824 = vmor %vm1822, %vm1823
    %v1825 = vsel %vm1824, %v1817, %v1821
    %v1826 = vand.u32 2147483647, %v1799
    %vm1827 = vcmp.eq.f32.partialorder %v1826, 8.507059e+37
    %v1828 = vand.u32 %v1799, 2147483648
    %v1829 = vor.u32 1.1754944e-38, %v1828
    %v1830 = vsel %vm1827, %v1829, %v1825
    %v1831 = vmul.f32 1.0, %v1830
    %v1832 = vrcp.pop %v1800
    %v1833 = vmul.f32 %v1800, %v1832
    %v1834 = vsub.f32 1.0, %v1833
    %v1835 = vmul.f32 %v1832, %v1834
    %v1836 = vadd.f32 %v1832, %v1835
    %vm1837 = vweird.f32 %v1800
    %vm1838 = vweird.f32 %v1832
    %vm1839 = vmor %vm1837, %vm1838
    %v1840 = vsel %vm1839, %v1832, %v1836
    %v1841 = vand.u32 2147483647, %v1800
    %vm1842 = vcmp.eq.f32.partialorder %v1841, 8.507059e+37
    %v1843 = vand.u32 %v1800, 2147483648
    %v1844 = vor.u32 1.1754944e-38, %v1843
    %v1845 = vsel %vm1842, %v1844, %v1840
    %v1846 = vmul.f32 1.0, %v1845
    %v1847 = vrcp.pop %v1801
    %v1848 = vmul.f32 %v1801, %v1847
    %v1849 = vsub.f32 1.0, %v1848
    %v1850 = vmul.f32 %v1847, %v1849
    %v1851 = vadd.f32 %v1847, %v1850
    %vm1852 = vweird.f32 %v1801
    %vm1853 = vweird.f32 %v1847
    %vm1854 = vmor %vm1852, %vm1853
    %v1855 = vsel %vm1854, %v1847, %v1851
    %v1856 = vand.u32 2147483647, %v1801
    %vm1857 = vcmp.eq.f32.partialorder %v1856, 8.507059e+37
    %v1858 = vand.u32 %v1801, 2147483648
    %v1859 = vor.u32 1.1754944e-38, %v1858
    %v1860 = vsel %vm1857, %v1859, %v1855
    %v1861 = vmul.f32 1.0, %v1860
    %v1862 = vmul.f32 %v1816, 1.0614054
    %v1863 = vmul.f32 %v1831, 1.0614054
    %v1864 = vmul.f32 %v1846, 1.0614054
    %v1865 = vmul.f32 %v1861, 1.0614054
    %v1866 = vadd.f32 %v1862, -1.4531521
    %v1867 = vadd.f32 %v1863, -1.4531521
    %v1868 = vadd.f32 %v1864, -1.4531521
    %v1869 = vadd.f32 %v1865, -1.4531521
    %v1870 = vmul.f32 %v1866, %v1816
    %v1871 = vmul.f32 %v1867, %v1831
    %v1872 = vmul.f32 %v1868, %v1846
    %v1873 = vmul.f32 %v1869, %v1861
    %v1874 = vadd.f32 %v1870, 1.4214138
    %v1875 = vadd.f32 %v1871, 1.4214138
    %v1876 = vadd.f32 %v1872, 1.4214138
    %v1877 = vadd.f32 %v1873, 1.4214138
    %v1878 = vmul.f32 %v1874, %v1816
    %v1879 = vmul.f32 %v1875, %v1831
    %v1880 = vmul.f32 %v1876, %v1846
    %v1881 = vmul.f32 %v1877, %v1861
    %v1882 = vadd.f32 %v1878, -0.28449672
    %v1883 = vadd.f32 %v1879, -0.28449672
    %v1884 = vadd.f32 %v1880, -0.28449672
    %v1885 = vadd.f32 %v1881, -0.28449672
    %v1886 = vmul.f32 %v1882, %v1816
    %v1887 = vmul.f32 %v1883, %v1831
    %v1888 = vmul.f32 %v1884, %v1846
    %v1889 = vmul.f32 %v1885, %v1861
    %v1890 = vadd.f32 %v1886, 0.2548296
    %v1891 = vadd.f32 %v1887, 0.2548296
    %v1892 = vadd.f32 %v1888, 0.2548296
    %v1893 = vadd.f32 %v1889, 0.2548296
    %v1894 = vmul.f32 %v1890, %v1816
    %v1895 = vmul.f32 %v1891, %v1831
    %v1896 = vmul.f32 %v1892, %v1846
    %v1897 = vmul.f32 %v1893, %v1861
    %v1898 = vsub.f32 0.0, %v1790
    %v1899 = vsub.f32 0.0, %v1791
    %v1900 = vsub.f32 0.0, %v1792
    %v1901 = vsub.f32 0.0, %v1793
    %v1902 = vmul.f32 %v1898, %v1790
    %v1903 = vmul.f32 %v1899, %v1791
    %v1904 = vmul.f32 %v1900, %v1792
    %v1905 = vmul.f32 %v1901, %v1793
    %v1906 = vmul.f32 %v1902, 1.442695
    %v1907 = vpow.pop %v1906
    %v1908 = vmul.f32 %v1903, 1.442695
    %v1909 = vpow.pop %v1908
    %v1910 = vmul.f32 %v1904, 1.442695
    %v1911 = vpow.pop %v1910
    %v1912 = vmul.f32 %v1905, 1.442695
    %v1913 = vpow.pop %v1912
    %v1914 = vmul.f32 %v1894, %v1907
    %v1915 = vmul.f32 %v1895, %v1909
    %v1916 = vmul.f32 %v1896, %v1911
    %v1917 = vmul.f32 %v1897, %v1913
    %v1918 = vsub.f32 1.0, %v1914
    %v1919 = vsub.f32 1.0, %v1915
    %v1920 = vsub.f32 1.0, %v1916
    %v1921 = vsub.f32 1.0, %v1917
    %vm1922 = vcmp.ge.f32.partialorder %v1786, 0.0
    %vm1923 = vcmp.ge.f32.partialorder %v1787, 0.0
    %vm1924 = vcmp.ge.f32.partialorder %v1788, 0.0
    %vm1925 = vcmp.ge.f32.partialorder %v1789, 0.0
    %v1926 = vsub.f32 0.0, %v1918
    %v1927 = vsub.f32 0.0, %v1919
    %v1928 = vsub.f32 0.0, %v1920
    %v1929 = vsub.f32 0.0, %v1921
    %v1930 = vsel %vm1922, %v1918, %v1926
    %v1931 = vsel %vm1923, %v1919, %v1927
    %v1932 = vsel %vm1924, %v1920, %v1928
    %v1933 = vsel %vm1925, %v1921, %v1929
    %v1934 = vadd.f32 %v1930, 1.0
    %v1935 = vadd.f32 %v1931, 1.0
    %v1936 = vadd.f32 %v1932, 1.0
    %v1937 = vadd.f32 %v1933, 1.0
    %v1938 = vmul.f32 %v1782, %v1934
    %v1939 = vmul.f32 %v1783, %v1935
    %v1940 = vmul.f32 %v1784, %v1936
    %v1941 = vmul.f32 %v1785, %v1937
    %v1942 = vld [vmem:[%s2 + $0x168] sm:$0xff]
    %v1943 = vld [vmem:[%s2 + $0x170] sm:$0xff]
    %v1944 = vld [vmem:[%s2 + $0x178] sm:$0xff]
    %v1945 = vld [vmem:[%s2 + $0x180] sm:$0xff]
    %v1946 = vld [vmem:[%s2 + $0x188] sm:$0xff]
    %v1947 = vld [vmem:[%s2 + $0x190] sm:$0xff]
    %v1948 = vld [vmem:[%s2 + $0x198] sm:$0xff]
    %v1949 = vld [vmem:[%s2 + $0x1a0] sm:$0xff]
    %v1951 = vsel %vm989, %v1938, 0
    %v1954 = vsel %vm989, %v1939, 0
    %v1957 = vsel %vm989, %v1940, 0
    %v1960 = vsel %vm989, %v1941, 0
    %1962 = vmatpush.msra.mxu0 0.0
    %1963 = vmatpush.msra.mxu0 0.0
    %1964 = vmatpush.msra.mxu0 0.0
    %1965 = vmatpush.msra.mxu0 0.0
    %1966 = vmatpush.msra.mxu0 0.0
    %1967 = vmatpush.msra.mxu0 0.0
    %1968 = vmatpush.msra.mxu0 0.0
    %1969 = vmatpush.msra.mxu0 0.0
    %1970 = vmatpush.msra.mxu0 %v1949
    %1971 = vmatpush.msra.mxu0 %v1948
    %1972 = vmatpush.msra.mxu0 %v1947
    %1973 = vmatpush.msra.mxu0 %v1946
    %1974 = vmatpush.msra.mxu0 %v1945
    %1975 = vmatpush.msra.mxu0 %v1944
    %1976 = vmatpush.msra.mxu0 %v1943
    %1977 = vmatpush.msra.mxu0 %v1942
    %1978 = vmatmul.f32.gmra.mxu0 %v1951
    %v1979 = vpop.f32.mrf.mxu0
    %v1980 = vadd.f32 0.0, %v1979
    %1981 = vmatmul.f32.gmra.mxu0 %v1954
    %v1982 = vpop.f32.mrf.mxu0
    %v1983 = vadd.f32 0.0, %v1982
    %1984 = vmatmul.f32.gmra.mxu0 %v1957
    %v1985 = vpop.f32.mrf.mxu0
    %v1986 = vadd.f32 0.0, %v1985
    %1987 = vmatmul.f32.gmra.mxu0 %v1960
    %v1988 = vpop.f32.mrf.mxu0
    %v1989 = vadd.f32 0.0, %v1988
    %1990 = vdwg.mxu0
    %v1991 = vadd.f32 %v1643, %v1980
    %v1992 = vadd.f32 %v1644, %v1983
    %v1993 = vadd.f32 %v1645, %v1986
    %v1994 = vadd.f32 %v1646, %v1989
    %v1995 = vld [vmem:[%s2 + $0x1a8] sm:$0x1]
    %v1996 = vperm.slane %v1995, 0
    %v1997 = vadd.f32 %v1991, %v1996
    %v1998 = vadd.f32 %v1992, %v1996
    %v1999 = vadd.f32 %v1993, %v1996
    %v2000 = vadd.f32 %v1994, %v1996
    %v2001 = vld [vmem:[%s2 + $0x270] sm:$0x1]
    %v2002 = vld [vmem:[%s2 + $0x1b0] sm:$0xff]
    %v2003 = vld [vmem:[%s2 + $0x1b8] sm:$0xff]
    %v2004 = vld [vmem:[%s2 + $0x1c0] sm:$0xff]
    %v2005 = vld [vmem:[%s2 + $0x1c8] sm:$0xff]
    %v2006 = vld [vmem:[%s2 + $0x1d0] sm:$0x1]
    %v2007 = vld [vmem:[%s2 + $0x1d8] sm:$0x3]
    %v2008 = vld [vmem:[%s2 + $0x1e0] sm:$0x3]
    %v2009 = vld [vmem:[%s2 + $0x1e8] sm:$0xff]
    %v2010 = vld [vmem:[%s2 + $0x1f0] sm:$0xff]
    %v2011 = vld [vmem:[%s2 + $0x1f8] sm:$0x1]
    %v2012 = vld [vmem:[%s2 + $0x200] sm:$0xff]
    %v2013 = vld [vmem:[%s2 + $0x208] sm:$0xff]
    %v2014 = vld [vmem:[%s2 + $0x210] sm:$0xff]
    %v2015 = vld [vmem:[%s2 + $0x218] sm:$0xff]
    %v2016 = vld [vmem:[%s2 + $0x220] sm:$0x1]
    %v2017 = vld [vmem:[%s2 + $0x228] sm:$0xff]
    %v2018 = vld [vmem:[%s2 + $0x230] sm:$0xff]
    %v2019 = vld [vmem:[%s2 + $0x238] sm:$0xff]
    %v2020 = vld [vmem:[%s2 + $0x240] sm:$0xff]
    %v2021 = vld [vmem:[%s2 + $0x248] sm:$0xff]
    %v2022 = vld [vmem:[%s2 + $0x250] sm:$0xff]
    %v2023 = vld [vmem:[%s2 + $0x258] sm:$0xff]
    %v2024 = vld [vmem:[%s2 + $0x260] sm:$0xff]
    %v2025 = vld [vmem:[%s2 + $0x268] sm:$0x1]
    %v2026 = vperm.slane %v2006, 0
    %2031 = vrot.lane.b32.xlu0 %v2002, 112
    %v2032 = vpop.permute.xlu0 %2031
    %2033 = vrot.lane.b32.xlu0 %v2003, 112
    %v2034 = vpop.permute.xlu0 %2033
    %2035 = vrot.lane.b32.xlu0 %v2004, 112
    %v2036 = vpop.permute.xlu0 %2035
    %2037 = vrot.lane.b32.xlu0 %v2005, 112
    %v2038 = vpop.permute.xlu0 %2037
    %2044 = vrot.lane.b32.xlu0 %v2026, 112
    %v2045 = vpop.permute.xlu0 %2044
    %v2048 = vsel %vm71, %v1997, 0
    %v2051 = vsel %vm71, %v1998, 0
    %v2054 = vsel %vm71, %v1999, 0
    %v2057 = vsel %vm71, %v2000, 0
    %2059 = vmatpush.msra.mxu0 0.0
    %2060 = vmatpush.msra.mxu0 0.0
    %2061 = vmatpush.msra.mxu0 0.0
    %2062 = vmatpush.msra.mxu0 0.0
    %2063 = vmatpush.msra.mxu0 0.0
    %2064 = vmatpush.msra.mxu0 0.0
    %2065 = vmatpush.msra.mxu0 0.0
    %2066 = vmatpush.msra.mxu0 0.0
    %2067 = vmatpush.msra.mxu0 0.0
    %2068 = vmatpush.msra.mxu0 0.0
    %2069 = vmatpush.msra.mxu0 0.0
    %2070 = vmatpush.msra.mxu0 0.0
    %2071 = vmatpush.msra.mxu0 %v2038
    %2072 = vmatpush.msra.mxu0 %v2036
    %2073 = vmatpush.msra.mxu0 %v2034
    %2074 = vmatpush.msra.mxu0 %v2032
    %2075 = vmatmul.f32.gmra.mxu0 %v2048
    %v2076 = vpop.f32.mrf.mxu0
    %v2077 = vadd.f32 %v2045, %v2076
    %2078 = vmatmul.f32.gmra.mxu0 %v2051
    %v2079 = vpop.f32.mrf.mxu0
    %v2080 = vadd.f32 %v2045, %v2079
    %2081 = vmatmul.f32.gmra.mxu0 %v2054
    %v2082 = vpop.f32.mrf.mxu0
    %v2083 = vadd.f32 %v2045, %v2082
    %2084 = vmatmul.f32.gmra.mxu0 %v2057
    %v2085 = vpop.f32.mrf.mxu0
    %v2086 = vadd.f32 %v2045, %v2085
    %2087 = vdwg.mxu0
    %vm2088 = vcmask 253952
    %v2089 = vsel %vm2088, %v2001, 0.0
    %2090 = vadd.xlane.f32.xlu0 %v2089
    %v2091 = vpop.xlane.xlu0 %2090
    %v2092 = vmul.f32 %v2091, %v90
    %v2093 = vsub.f32 %v2001, %v2092
    %v2094 = vmul.f32 %v2093, %v2093
    %v2095 = vsel %vm2088, %v2094, 0.0
    %2096 = vadd.xlane.f32.xlu0 %v2095
    %v2097 = vpop.xlane.xlu0 %2096
    %v2098 = vmul.f32 %v2097, %v90
    %v2099 = vadd.f32 %v2098, 1e-05
    %v2100 = vrsqrt.pop %v2099
    %v2101 = vmul.f32 %v2100, %v2099
    %v2102 = vmul.f32 %v2101, %v2100
    %v2103 = vmul.f32 0.5, %v2102
    %v2104 = vsub.f32 1.5, %v2103
    %v2105 = vmul.f32 %v2100, %v2104
    %vm2106 = vweird.f32 %v2099
    %vm2107 = vweird.f32 %v2100
    %vm2108 = vmor %vm2106, %vm2107
    %v2109 = vsel %vm2108, %v2100, %v2105
    %v2110 = vmul.f32 %v2093, %v2109
    %v2112 = vsel %vm71, %v2110, 0
    %2114 = vmatpush.msra.mxu0 0.0
    %2115 = vmatpush.msra.mxu0 0.0
    %2116 = vmatpush.msra.mxu0 0.0
    %2117 = vmatpush.msra.mxu0 0.0
    %2118 = vmatpush.msra.mxu0 0.0
    %2119 = vmatpush.msra.mxu0 0.0
    %2120 = vmatpush.msra.mxu0 0.0
    %2121 = vmatpush.msra.mxu0 0.0
    %2122 = vmatpush.msra.mxu0 0.0
    %2123 = vmatpush.msra.mxu0 0.0
    %2124 = vmatpush.msra.mxu0 0.0
    %2125 = vmatpush.msra.mxu0 0.0
    %2126 = vmatpush.msra.mxu0 %v2005
    %2127 = vmatpush.msra.mxu0 %v2004
    %2128 = vmatpush.msra.mxu0 %v2003
    %2129 = vmatpush.msra.mxu0 %v2002
    %2130 = vmatmul.f32.gmra.mxu0 %v2112
    %v2131 = vpop.f32.mrf.mxu0
    %v2132 = vadd.f32 %v2006, %v2131
    %2133 = vdwg.mxu0
    %2135 = vrot.lane.b32.xlu0 %v2007, 16
    %v2136 = vpop.permute.xlu0 %2135
    %v2138 = vmul.f32 %v2132, %v2136
    %2140 = vrot.lane.b32.xlu0 %v2138, 112
    %v2141 = vpop.permute.xlu0 %2140
    %v2143 = vmul.f32 %v2132, %v2141
    %vm2144 = vcmask 122880
    %v2145 = vsel %vm2144, %v2143, 0.0
    %2146 = vadd.xlane.f32.xlu0 %v2145
    %v2147 = vpop.xlane.xlu0 %2146
    %v2148 = vperm.slane %v2007, 0
    %v2149 = vmul.f32 %v2077, %v2148
    %v2150 = vmul.f32 %v2080, %v2148
    %v2152 = vsel %vm229, %v2132, 0
    %v2155 = vsel %vm229, %v2149, 0
    %v2158 = vsel %vm229, %v2150, 0
    %2160 = vmatpush.xpose.msra.mxu0 0.0
    %2161 = vmatpush.xpose.msra.mxu0 0.0
    %2162 = vmatpush.xpose.msra.mxu0 0.0
    %2163 = vmatpush.xpose.msra.mxu0 0.0
    %2164 = vmatpush.xpose.msra.mxu0 0.0
    %2165 = vmatpush.xpose.msra.mxu0 0.0
    %2166 = vmatpush.xpose.msra.mxu0 0.0
    %2167 = vmatpush.xpose.msra.mxu0 0.0
    %2168 = vmatpush.xpose.msra.mxu0 0.0
    %2169 = vmatpush.xpose.msra.mxu0 0.0
    %2170 = vmatpush.xpose.msra.mxu0 0.0
    %2171 = vmatpush.xpose.msra.mxu0 0.0
    %2172 = vmatpush.xpose.msra.mxu0 0.0
    %2173 = vmatpush.xpose.msra.mxu0 0.0
    %2174 = vmatpush.xpose.msra.mxu0 %v2158
    %2175 = vmatpush.xpose.msra.mxu0 %v2155
    %2176 = vmatmul.f32.gmra.mxu0 %v2152
    %v2177 = vpop.f32.mrf.mxu0
    %v2178 = vadd.f32 0.0, %v2177
    %2179 = vdwg.mxu0
    %v2180 = vsel %vm2144, %v2178, -inf
    %2181 = vmax.xlane.f32.xlu0 %v2180
    %v2182 = vpop.xlane.xlu0 %2181
    %v2183 = vmax.f32 %v2147, %v2182
    %v2184 = vsub.f32 %v2147, %v2183
    %v2185 = vmul.f32 %v2184, 1.442695
    %v2186 = vpow.pop %v2185
    %v2187 = vsub.f32 %v2178, %v2183
    %v2188 = vmul.f32 %v2187, 1.442695
    %v2189 = vpow.pop %v2188
    %v2190 = vsel %vm2144, %v2189, 0.0
    %2191 = vadd.xlane.f32.xlu0 %v2190
    %v2192 = vpop.xlane.xlu0 %2191
    %v2193 = vadd.f32 %v2186, %v2192
    %v2194 = vrcp.pop %v2193
    %v2195 = vmul.f32 %v2186, %v2194
    %2197 = vrot.lane.b32.xlu0 %v2008, 32
    %v2198 = vpop.permute.xlu0 %2197
    %v2200 = vmul.f32 %v2132, %v2198
    %v2201 = vmul.f32 %v2195, %v2200
    %v2202 = vmul.f32 %v2189, %v2194
    %v2203 = vperm.slane %v2008, 0
    %2205 = vrot.lane.b32.xlu0 %v2203, 16
    %v2206 = vpop.permute.xlu0 %2205
    %v2208 = vmul.f32 %v2077, %v2206
    %v2209 = vmul.f32 %v2080, %v2206
    %2212 = vrot.lane.b32.xlu0 %v2208, 112
    %v2213 = vpop.permute.xlu0 %2212
    %2214 = vrot.lane.b32.xlu0 %v2209, 112
    %v2215 = vpop.permute.xlu0 %2214
    %v2219 = vsel %vm229, %v2202, 0
    %2221 = vmatpush.msra.mxu0 0.0
    %2222 = vmatpush.msra.mxu0 0.0
    %2223 = vmatpush.msra.mxu0 0.0
    %2224 = vmatpush.msra.mxu0 0.0
    %2225 = vmatpush.msra.mxu0 0.0
    %2226 = vmatpush.msra.mxu0 0.0
    %2227 = vmatpush.msra.mxu0 0.0
    %2228 = vmatpush.msra.mxu0 0.0
    %2229 = vmatpush.msra.mxu0 0.0
    %2230 = vmatpush.msra.mxu0 0.0
    %2231 = vmatpush.msra.mxu0 0.0
    %2232 = vmatpush.msra.mxu0 0.0
    %2233 = vmatpush.msra.mxu0 0.0
    %2234 = vmatpush.msra.mxu0 0.0
    %2235 = vmatpush.msra.mxu0 %v2215
    %2236 = vmatpush.msra.mxu0 %v2213
    %2237 = vmatmul.f32.gmra.mxu0 %v2219
    %v2238 = vpop.f32.mrf.mxu0
    %v2239 = vadd.f32 0.0, %v2238
    %2240 = vdwg.mxu0
    %2242 = vrot.lane.b32.xlu0 %v2239, 32
    %v2243 = vpop.permute.xlu0 %2242
    %v2245 = vadd.f32 %v2201, %v2243
    %v2246 = vrot.slane %v2007, 1
    %2247 = vrot.lane.b32.xlu0 %v2246, 16
    %v2248 = vpop.permute.xlu0 %2247
    %v2250 = vmul.f32 %v2132, %v2248
    %2252 = vrot.lane.b32.xlu0 %v2250, 112
    %v2253 = vpop.permute.xlu0 %2252
    %v2255 = vmul.f32 %v2132, %v2253
    %v2256 = vsel %vm2144, %v2255, 0.0
    %2257 = vadd.xlane.f32.xlu0 %v2256
    %v2258 = vpop.xlane.xlu0 %2257
    %v2259 = vperm.slane %v2007, 1
    %v2260 = vmul.f32 %v2077, %v2259
    %v2261 = vmul.f32 %v2080, %v2259
    %v2263 = vsel %vm229, %v2260, 0
    %v2266 = vsel %vm229, %v2261, 0
    %2268 = vmatpush.xpose.msra.mxu0 0.0
    %2269 = vmatpush.xpose.msra.mxu0 0.0
    %2270 = vmatpush.xpose.msra.mxu0 0.0
    %2271 = vmatpush.xpose.msra.mxu0 0.0
    %2272 = vmatpush.xpose.msra.mxu0 0.0
    %2273 = vmatpush.xpose.msra.mxu0 0.0
    %2274 = vmatpush.xpose.msra.mxu0 0.0
    %2275 = vmatpush.xpose.msra.mxu0 0.0
    %2276 = vmatpush.xpose.msra.mxu0 0.0
    %2277 = vmatpush.xpose.msra.mxu0 0.0
    %2278 = vmatpush.xpose.msra.mxu0 0.0
    %2279 = vmatpush.xpose.msra.mxu0 0.0
    %2280 = vmatpush.xpose.msra.mxu0 0.0
    %2281 = vmatpush.xpose.msra.mxu0 0.0
    %2282 = vmatpush.xpose.msra.mxu0 %v2266
    %2283 = vmatpush.xpose.msra.mxu0 %v2263
    %2284 = vmatmul.f32.gmra.mxu0 %v2152
    %v2285 = vpop.f32.mrf.mxu0
    %v2286 = vadd.f32 0.0, %v2285
    %2287 = vdwg.mxu0
    %v2288 = vsel %vm2144, %v2286, -inf
    %2289 = vmax.xlane.f32.xlu0 %v2288
    %v2290 = vpop.xlane.xlu0 %2289
    %v2291 = vmax.f32 %v2258, %v2290
    %v2292 = vsub.f32 %v2258, %v2291
    %v2293 = vmul.f32 %v2292, 1.442695
    %v2294 = vpow.pop %v2293
    %v2295 = vsub.f32 %v2286, %v2291
    %v2296 = vmul.f32 %v2295, 1.442695
    %v2297 = vpow.pop %v2296
    %v2298 = vsel %vm2144, %v2297, 0.0
    %2299 = vadd.xlane.f32.xlu0 %v2298
    %v2300 = vpop.xlane.xlu0 %2299
    %v2301 = vadd.f32 %v2294, %v2300
    %v2302 = vrcp.pop %v2301
    %v2303 = vmul.f32 %v2294, %v2302
    %v2304 = vrot.slane %v2008, 1
    %2305 = vrot.lane.b32.xlu0 %v2304, 32
    %v2306 = vpop.permute.xlu0 %2305
    %v2308 = vmul.f32 %v2132, %v2306
    %v2309 = vmul.f32 %v2303, %v2308
    %v2310 = vmul.f32 %v2297, %v2302
    %v2311 = vperm.slane %v2008, 1
    %2313 = vrot.lane.b32.xlu0 %v2311, 16
    %v2314 = vpop.permute.xlu0 %2313
    %v2316 = vmul.f32 %v2077, %v2314
    %v2317 = vmul.f32 %v2080, %v2314
    %2320 = vrot.lane.b32.xlu0 %v2316, 112
    %v2321 = vpop.permute.xlu0 %2320
    %2322 = vrot.lane.b32.xlu0 %v2317, 112
    %v2323 = vpop.permute.xlu0 %2322
    %v2327 = vsel %vm229, %v2310, 0
    %2329 = vmatpush.msra.mxu0 0.0
    %2330 = vmatpush.msra.mxu0 0.0
    %2331 = vmatpush.msra.mxu0 0.0
    %2332 = vmatpush.msra.mxu0 0.0
    %2333 = vmatpush.msra.mxu0 0.0
    %2334 = vmatpush.msra.mxu0 0.0
    %2335 = vmatpush.msra.mxu0 0.0
    %2336 = vmatpush.msra.mxu0 0.0
    %2337 = vmatpush.msra.mxu0 0.0
    %2338 = vmatpush.msra.mxu0 0.0
    %2339 = vmatpush.msra.mxu0 0.0
    %2340 = vmatpush.msra.mxu0 0.0
    %2341 = vmatpush.msra.mxu0 0.0
    %2342 = vmatpush.msra.mxu0 0.0
    %2343 = vmatpush.msra.mxu0 %v2323
    %2344 = vmatpush.msra.mxu0 %v2321
    %2345 = vmatmul.f32.gmra.mxu0 %v2327
    %v2346 = vpop.f32.mrf.mxu0
    %v2347 = vadd.f32 0.0, %v2346
    %2348 = vdwg.mxu0
    %2350 = vrot.lane.b32.xlu0 %v2347, 32
    %v2351 = vpop.permute.xlu0 %2350
    %v2353 = vadd.f32 %v2309, %v2351
    %v2354 = vadd.f32 %v2245, %v2353
    %2356 = vrot.lane.b32.xlu0 %v2354, 96
    %v2357 = vpop.permute.xlu0 %2356
    %v2358 = vsel %vm229, %v2357, 0
    %2360 = vmatpush.msra.mxu0 0.0
    %2361 = vmatpush.msra.mxu0 0.0
    %2362 = vmatpush.msra.mxu0 0.0
    %2363 = vmatpush.msra.mxu0 0.0
    %2364 = vmatpush.msra.mxu0 0.0
    %2365 = vmatpush.msra.mxu0 0.0
    %2366 = vmatpush.msra.mxu0 0.0
    %2367 = vmatpush.msra.mxu0 0.0
    %2368 = vmatpush.msra.mxu0 0.0
    %2369 = vmatpush.msra.mxu0 0.0
    %2370 = vmatpush.msra.mxu0 0.0
    %2371 = vmatpush.msra.mxu0 0.0
    %2372 = vmatpush.msra.mxu0 0.0
    %2373 = vmatpush.msra.mxu0 0.0
    %2374 = vmatpush.msra.mxu0 %v2010
    %2375 = vmatpush.msra.mxu0 %v2009
    %2376 = vmatmul.f32.gmra.mxu0 %v2358
    %v2377 = vpop.f32.mrf.mxu0
    %v2378 = vadd.f32 0.0, %v2377
    %2379 = vdwg.mxu0
    %v2380 = vadd.f32 %v2001, %v2378
    %v2381 = vadd.f32 %v2380, %v2011
    %v2382 = vsel %vm2088, %v2381, 0.0
    %2383 = vadd.xlane.f32.xlu0 %v2382
    %v2384 = vpop.xlane.xlu0 %2383
    %v2385 = vmul.f32 %v2384, %v90
    %v2386 = vsub.f32 %v2381, %v2385
    %v2387 = vmul.f32 %v2386, %v2386
    %v2388 = vsel %vm2088, %v2387, 0.0
    %2389 = vadd.xlane.f32.xlu0 %v2388
    %v2390 = vpop.xlane.xlu0 %2389
    %v2391 = vmul.f32 %v2390, %v90
    %v2392 = vadd.f32 %v2391, 1e-05
    %v2393 = vrsqrt.pop %v2392
    %v2394 = vmul.f32 %v2393, %v2392
    %v2395 = vmul.f32 %v2394, %v2393
    %v2396 = vmul.f32 0.5, %v2395
    %v2397 = vsub.f32 1.5, %v2396
    %v2398 = vmul.f32 %v2393, %v2397
    %vm2399 = vweird.f32 %v2392
    %vm2400 = vweird.f32 %v2393
    %vm2401 = vmor %vm2399, %vm2400
    %v2402 = vsel %vm2401, %v2393, %v2398
    %v2403 = vmul.f32 %v2386, %v2402
    %v2405 = vsel %vm71, %v2403, 0
    %2407 = vmatpush.msra.mxu0 0.0
    %2408 = vmatpush.msra.mxu0 0.0
    %2409 = vmatpush.msra.mxu0 0.0
    %2410 = vmatpush.msra.mxu0 0.0
    %2411 = vmatpush.msra.mxu0 0.0
    %2412 = vmatpush.msra.mxu0 0.0
    %2413 = vmatpush.msra.mxu0 0.0
    %2414 = vmatpush.msra.mxu0 0.0
    %2415 = vmatpush.msra.mxu0 0.0
    %2416 = vmatpush.msra.mxu0 0.0
    %2417 = vmatpush.msra.mxu0 0.0
    %2418 = vmatpush.msra.mxu0 0.0
    %2419 = vmatpush.msra.mxu0 %v2015
    %2420 = vmatpush.msra.mxu0 %v2014
    %2421 = vmatpush.msra.mxu0 %v2013
    %2422 = vmatpush.msra.mxu0 %v2012
    %2423 = vmatmul.f32.gmra.mxu0 %v2405
    %v2424 = vpop.f32.mrf.mxu0
    %v2425 = vadd.f32 %v2016, %v2424
    %2426 = vdwg.mxu0
    %v2427 = vmul.f32 %v2425, 0.5
    %v2428 = vmul.f32 %v2425, 0.70710677
    %v2429 = vand.u32 2147483647, %v2428
    %v2430 = vmul.f32 %v2429, 0.3275911
    %v2431 = vadd.f32 %v2430, 1.0
    %v2432 = vrcp.pop %v2431
    %v2433 = vmul.f32 %v2431, %v2432
    %v2434 = vsub.f32 1.0, %v2433
    %v2435 = vmul.f32 %v2432, %v2434
    %v2436 = vadd.f32 %v2432, %v2435
    %vm2437 = vweird.f32 %v2431
    %vm2438 = vweird.f32 %v2432
    %vm2439 = vmor %vm2437, %vm2438
    %v2440 = vsel %vm2439, %v2432, %v2436
    %v2441 = vand.u32 2147483647, %v2431
    %vm2442 = vcmp.eq.f32.partialorder %v2441, 8.507059e+37
    %v2443 = vand.u32 %v2431, 2147483648
    %v2444 = vor.u32 1.1754944e-38, %v2443
    %v2445 = vsel %vm2442, %v2444, %v2440
    %v2446 = vmul.f32 1.0, %v2445
    %v2447 = vmul.f32 %v2446, 1.0614054
    %v2448 = vadd.f32 %v2447, -1.4531521
    %v2449 = vmul.f32 %v2448, %v2446
    %v2450 = vadd.f32 %v2449, 1.4214138
    %v2451 = vmul.f32 %v2450, %v2446
    %v2452 = vadd.f32 %v2451, -0.28449672
    %v2453 = vmul.f32 %v2452, %v2446
    %v2454 = vadd.f32 %v2453, 0.2548296
    %v2455 = vmul.f32 %v2454, %v2446
    %v2456 = vsub.f32 0.0, %v2429
    %v2457 = vmul.f32 %v2456, %v2429
    %v2458 = vmul.f32 %v2457, 1.442695
    %v2459 = vpow.pop %v2458
    %v2460 = vmul.f32 %v2455, %v2459
    %v2461 = vsub.f32 1.0, %v2460
    %vm2462 = vcmp.ge.f32.partialorder %v2428, 0.0
    %v2463 = vsub.f32 0.0, %v2461
    %v2464 = vsel %vm2462, %v2461, %v2463
    %v2465 = vadd.f32 %v2464, 1.0
    %v2466 = vmul.f32 %v2427, %v2465
    %v2468 = vsel %vm989, %v2466, 0
    %2470 = vmatpush.msra.mxu0 0.0
    %2471 = vmatpush.msra.mxu0 0.0
    %2472 = vmatpush.msra.mxu0 0.0
    %2473 = vmatpush.msra.mxu0 0.0
    %2474 = vmatpush.msra.mxu0 0.0
    %2475 = vmatpush.msra.mxu0 0.0
    %2476 = vmatpush.msra.mxu0 0.0
    %2477 = vmatpush.msra.mxu0 0.0
    %2478 = vmatpush.msra.mxu0 %v2024
    %2479 = vmatpush.msra.mxu0 %v2023
    %2480 = vmatpush.msra.mxu0 %v2022
    %2481 = vmatpush.msra.mxu0 %v2021
    %2482 = vmatpush.msra.mxu0 %v2020
    %2483 = vmatpush.msra.mxu0 %v2019
    %2484 = vmatpush.msra.mxu0 %v2018
    %2485 = vmatpush.msra.mxu0 %v2017
    %2486 = vmatmul.f32.gmra.mxu0 %v2468
    %v2487 = vpop.f32.mrf.mxu0
    %v2488 = vadd.f32 0.0, %v2487
    %2489 = vdwg.mxu0
    %v2490 = vadd.f32 %v2381, %v2488
    %v2491 = vadd.f32 %v2490, %v2025
    %v2492 = vmul.f32 %v2083, %v2148
    %v2493 = vmul.f32 %v2086, %v2148
    %v2495 = vsel %vm229, %v2492, 0
    %v2498 = vsel %vm229, %v2493, 0
    %2500 = vmatpush.xpose.msra.mxu0 0.0
    %2501 = vmatpush.xpose.msra.mxu0 0.0
    %2502 = vmatpush.xpose.msra.mxu0 0.0
    %2503 = vmatpush.xpose.msra.mxu0 0.0
    %2504 = vmatpush.xpose.msra.mxu0 0.0
    %2505 = vmatpush.xpose.msra.mxu0 0.0
    %2506 = vmatpush.xpose.msra.mxu0 0.0
    %2507 = vmatpush.xpose.msra.mxu0 0.0
    %2508 = vmatpush.xpose.msra.mxu0 0.0
    %2509 = vmatpush.xpose.msra.mxu0 0.0
    %2510 = vmatpush.xpose.msra.mxu0 0.0
    %2511 = vmatpush.xpose.msra.mxu0 0.0
    %2512 = vmatpush.xpose.msra.mxu0 0.0
    %2513 = vmatpush.xpose.msra.mxu0 0.0
    %2514 = vmatpush.xpose.msra.mxu0 %v2498
    %2515 = vmatpush.xpose.msra.mxu0 %v2495
    %2516 = vmatmul.f32.gmra.mxu0 %v2152
    %v2517 = vpop.f32.mrf.mxu0
    %v2518 = vadd.f32 0.0, %v2517
    %2519 = vdwg.mxu0
    %v2520 = vsel %vm2144, %v2518, -inf
    %2521 = vmax.xlane.f32.xlu0 %v2520
    %v2522 = vpop.xlane.xlu0 %2521
    %v2523 = vmax.f32 %v2147, %v2522
    %v2524 = vsub.f32 %v2147, %v2523
    %v2525 = vmul.f32 %v2524, 1.442695
    %v2526 = vpow.pop %v2525
    %v2527 = vsub.f32 %v2518, %v2523
    %v2528 = vmul.f32 %v2527, 1.442695
    %v2529 = vpow.pop %v2528
    %v2530 = vsel %vm2144, %v2529, 0.0
    %2531 = vadd.xlane.f32.xlu0 %v2530
    %v2532 = vpop.xlane.xlu0 %2531
    %v2533 = vadd.f32 %v2526, %v2532
    %v2534 = vrcp.pop %v2533
    %v2535 = vmul.f32 %v2526, %v2534
    %v2536 = vmul.f32 %v2535, %v2200
    %v2537 = vmul.f32 %v2529, %v2534
    %v2538 = vmul.f32 %v2083, %v2206
    %v2539 = vmul.f32 %v2086, %v2206
    %2542 = vrot.lane.b32.xlu0 %v2538, 112
    %v2543 = vpop.permute.xlu0 %2542
    %2544 = vrot.lane.b32.xlu0 %v2539, 112
    %v2545 = vpop.permute.xlu0 %2544
    %v2549 = vsel %vm229, %v2537, 0
    %2551 = vmatpush.msra.mxu0 0.0
    %2552 = vmatpush.msra.mxu0 0.0
    %2553 = vmatpush.msra.mxu0 0.0
    %2554 = vmatpush.msra.mxu0 0.0
    %2555 = vmatpush.msra.mxu0 0.0
    %2556 = vmatpush.msra.mxu0 0.0
    %2557 = vmatpush.msra.mxu0 0.0
    %2558 = vmatpush.msra.mxu0 0.0
    %2559 = vmatpush.msra.mxu0 0.0
    %2560 = vmatpush.msra.mxu0 0.0
    %2561 = vmatpush.msra.mxu0 0.0
    %2562 = vmatpush.msra.mxu0 0.0
    %2563 = vmatpush.msra.mxu0 0.0
    %2564 = vmatpush.msra.mxu0 0.0
    %2565 = vmatpush.msra.mxu0 %v2545
    %2566 = vmatpush.msra.mxu0 %v2543
    %2567 = vmatmul.f32.gmra.mxu0 %v2549
    %v2568 = vpop.f32.mrf.mxu0
    %v2569 = vadd.f32 0.0, %v2568
    %2570 = vdwg.mxu0
    %2572 = vrot.lane.b32.xlu0 %v2569, 32
    %v2573 = vpop.permute.xlu0 %2572
    %v2575 = vadd.f32 %v2536, %v2573
    %v2576 = vmul.f32 %v2083, %v2259
    %v2577 = vmul.f32 %v2086, %v2259
    %v2579 = vsel %vm229, %v2576, 0
    %v2582 = vsel %vm229, %v2577, 0
    %2584 = vmatpush.xpose.msra.mxu0 0.0
    %2585 = vmatpush.xpose.msra.mxu0 0.0
    %2586 = vmatpush.xpose.msra.mxu0 0.0
    %2587 = vmatpush.xpose.msra.mxu0 0.0
    %2588 = vmatpush.xpose.msra.mxu0 0.0
    %2589 = vmatpush.xpose.msra.mxu0 0.0
    %2590 = vmatpush.xpose.msra.mxu0 0.0
    %2591 = vmatpush.xpose.msra.mxu0 0.0
    %2592 = vmatpush.xpose.msra.mxu0 0.0
    %2593 = vmatpush.xpose.msra.mxu0 0.0
    %2594 = vmatpush.xpose.msra.mxu0 0.0
    %2595 = vmatpush.xpose.msra.mxu0 0.0
    %2596 = vmatpush.xpose.msra.mxu0 0.0
    %2597 = vmatpush.xpose.msra.mxu0 0.0
    %2598 = vmatpush.xpose.msra.mxu0 %v2582
    %2599 = vmatpush.xpose.msra.mxu0 %v2579
    %2600 = vmatmul.f32.gmra.mxu0 %v2152
    %v2601 = vpop.f32.mrf.mxu0
    %v2602 = vadd.f32 0.0, %v2601
    %2603 = vdwg.mxu0
    %v2604 = vsel %vm2144, %v2602, -inf
    %2605 = vmax.xlane.f32.xlu0 %v2604
    %v2606 = vpop.xlane.xlu0 %2605
    %v2607 = vmax.f32 %v2258, %v2606
    %v2608 = vsub.f32 %v2258, %v2607
    %v2609 = vmul.f32 %v2608, 1.442695
    %v2610 = vpow.pop %v2609
    %v2611 = vsub.f32 %v2602, %v2607
    %v2612 = vmul.f32 %v2611, 1.442695
    %v2613 = vpow.pop %v2612
    %v2614 = vsel %vm2144, %v2613, 0.0
    %2615 = vadd.xlane.f32.xlu0 %v2614
    %v2616 = vpop.xlane.xlu0 %2615
    %v2617 = vadd.f32 %v2610, %v2616
    %v2618 = vrcp.pop %v2617
    %v2619 = vmul.f32 %v2610, %v2618
    %v2620 = vmul.f32 %v2619, %v2308
    %v2621 = vmul.f32 %v2613, %v2618
    %v2622 = vmul.f32 %v2083, %v2314
    %v2623 = vmul.f32 %v2086, %v2314
    %2626 = vrot.lane.b32.xlu0 %v2622, 112
    %v2627 = vpop.permute.xlu0 %2626
    %2628 = vrot.lane.b32.xlu0 %v2623, 112
    %v2629 = vpop.permute.xlu0 %2628
    %v2633 = vsel %vm229, %v2621, 0
    %2635 = vmatpush.msra.mxu0 0.0
    %2636 = vmatpush.msra.mxu0 0.0
    %2637 = vmatpush.msra.mxu0 0.0
    %2638 = vmatpush.msra.mxu0 0.0
    %2639 = vmatpush.msra.mxu0 0.0
    %2640 = vmatpush.msra.mxu0 0.0
    %2641 = vmatpush.msra.mxu0 0.0
    %2642 = vmatpush.msra.mxu0 0.0
    %2643 = vmatpush.msra.mxu0 0.0
    %2644 = vmatpush.msra.mxu0 0.0
    %2645 = vmatpush.msra.mxu0 0.0
    %2646 = vmatpush.msra.mxu0 0.0
    %2647 = vmatpush.msra.mxu0 0.0
    %2648 = vmatpush.msra.mxu0 0.0
    %2649 = vmatpush.msra.mxu0 %v2629
    %2650 = vmatpush.msra.mxu0 %v2627
    %2651 = vmatmul.f32.gmra.mxu0 %v2633
    %v2652 = vpop.f32.mrf.mxu0
    %v2653 = vadd.f32 0.0, %v2652
    %2654 = vdwg.mxu0
    %2656 = vrot.lane.b32.xlu0 %v2653, 32
    %v2657 = vpop.permute.xlu0 %2656
    %v2659 = vadd.f32 %v2620, %v2657
    %v2660 = vadd.f32 %v2575, %v2659
    %2662 = vrot.lane.b32.xlu0 %v2660, 96
    %v2663 = vpop.permute.xlu0 %2662
    %v2664 = vsel %vm229, %v2663, 0
    %2666 = vmatpush.msra.mxu0 0.0
    %2667 = vmatpush.msra.mxu0 0.0
    %2668 = vmatpush.msra.mxu0 0.0
    %2669 = vmatpush.msra.mxu0 0.0
    %2670 = vmatpush.msra.mxu0 0.0
    %2671 = vmatpush.msra.mxu0 0.0
    %2672 = vmatpush.msra.mxu0 0.0
    %2673 = vmatpush.msra.mxu0 0.0
    %2674 = vmatpush.msra.mxu0 0.0
    %2675 = vmatpush.msra.mxu0 0.0
    %2676 = vmatpush.msra.mxu0 0.0
    %2677 = vmatpush.msra.mxu0 0.0
    %2678 = vmatpush.msra.mxu0 0.0
    %2679 = vmatpush.msra.mxu0 0.0
    %2680 = vmatpush.msra.mxu0 %v2010
    %2681 = vmatpush.msra.mxu0 %v2009
    %2682 = vmatmul.f32.gmra.mxu0 %v2664
    %v2683 = vpop.f32.mrf.mxu0
    %v2684 = vadd.f32 0.0, %v2683
    %2685 = vdwg.mxu0
    %v2686 = vadd.f32 %v2001, %v2684
    %v2687 = vadd.f32 %v2686, %v2011
    %v2688 = vsel %vm2088, %v2687, 0.0
    %2689 = vadd.xlane.f32.xlu0 %v2688
    %v2690 = vpop.xlane.xlu0 %2689
    %v2691 = vmul.f32 %v2690, %v90
    %v2692 = vsub.f32 %v2687, %v2691
    %v2693 = vmul.f32 %v2692, %v2692
    %v2694 = vsel %vm2088, %v2693, 0.0
    %2695 = vadd.xlane.f32.xlu0 %v2694
    %v2696 = vpop.xlane.xlu0 %2695
    %v2697 = vmul.f32 %v2696, %v90
    %v2698 = vadd.f32 %v2697, 1e-05
    %v2699 = vrsqrt.pop %v2698
    %v2700 = vmul.f32 %v2699, %v2698
    %v2701 = vmul.f32 %v2700, %v2699
    %v2702 = vmul.f32 0.5, %v2701
    %v2703 = vsub.f32 1.5, %v2702
    %v2704 = vmul.f32 %v2699, %v2703
    %vm2705 = vweird.f32 %v2698
    %vm2706 = vweird.f32 %v2699
    %vm2707 = vmor %vm2705, %vm2706
    %v2708 = vsel %vm2707, %v2699, %v2704
    %v2709 = vmul.f32 %v2692, %v2708
    %v2711 = vsel %vm71, %v2709, 0
    %2713 = vmatpush.msra.mxu0 0.0
    %2714 = vmatpush.msra.mxu0 0.0
    %2715 = vmatpush.msra.mxu0 0.0
    %2716 = vmatpush.msra.mxu0 0.0
    %2717 = vmatpush.msra.mxu0 0.0
    %2718 = vmatpush.msra.mxu0 0.0
    %2719 = vmatpush.msra.mxu0 0.0
    %2720 = vmatpush.msra.mxu0 0.0
    %2721 = vmatpush.msra.mxu0 0.0
    %2722 = vmatpush.msra.mxu0 0.0
    %2723 = vmatpush.msra.mxu0 0.0
    %2724 = vmatpush.msra.mxu0 0.0
    %2725 = vmatpush.msra.mxu0 %v2015
    %2726 = vmatpush.msra.mxu0 %v2014
    %2727 = vmatpush.msra.mxu0 %v2013
    %2728 = vmatpush.msra.mxu0 %v2012
    %2729 = vmatmul.f32.gmra.mxu0 %v2711
    %v2730 = vpop.f32.mrf.mxu0
    %v2731 = vadd.f32 %v2016, %v2730
    %2732 = vdwg.mxu0
    %v2733 = vmul.f32 %v2731, 0.5
    %v2734 = vmul.f32 %v2731, 0.70710677
    %v2735 = vand.u32 2147483647, %v2734
    %v2736 = vmul.f32 %v2735, 0.3275911
    %v2737 = vadd.f32 %v2736, 1.0
    %v2738 = vrcp.pop %v2737
    %v2739 = vmul.f32 %v2737, %v2738
    %v2740 = vsub.f32 1.0, %v2739
    %v2741 = vmul.f32 %v2738, %v2740
    %v2742 = vadd.f32 %v2738, %v2741
    %vm2743 = vweird.f32 %v2737
    %vm2744 = vweird.f32 %v2738
    %vm2745 = vmor %vm2743, %vm2744
    %v2746 = vsel %vm2745, %v2738, %v2742
    %v2747 = vand.u32 2147483647, %v2737
    %vm2748 = vcmp.eq.f32.partialorder %v2747, 8.507059e+37
    %v2749 = vand.u32 %v2737, 2147483648
    %v2750 = vor.u32 1.1754944e-38, %v2749
    %v2751 = vsel %vm2748, %v2750, %v2746
    %v2752 = vmul.f32 1.0, %v2751
    %v2753 = vmul.f32 %v2752, 1.0614054
    %v2754 = vadd.f32 %v2753, -1.4531521
    %v2755 = vmul.f32 %v2754, %v2752
    %v2756 = vadd.f32 %v2755, 1.4214138
    %v2757 = vmul.f32 %v2756, %v2752
    %v2758 = vadd.f32 %v2757, -0.28449672
    %v2759 = vmul.f32 %v2758, %v2752
    %v2760 = vadd.f32 %v2759, 0.2548296
    %v2761 = vmul.f32 %v2760, %v2752
    %v2762 = vsub.f32 0.0, %v2735
    %v2763 = vmul.f32 %v2762, %v2735
    %v2764 = vmul.f32 %v2763, 1.442695
    %v2765 = vpow.pop %v2764
    %v2766 = vmul.f32 %v2761, %v2765
    %v2767 = vsub.f32 1.0, %v2766
    %vm2768 = vcmp.ge.f32.partialorder %v2734, 0.0
    %v2769 = vsub.f32 0.0, %v2767
    %v2770 = vsel %vm2768, %v2767, %v2769
    %v2771 = vadd.f32 %v2770, 1.0
    %v2772 = vmul.f32 %v2733, %v2771
    %v2774 = vsel %vm989, %v2772, 0
    %2776 = vmatpush.msra.mxu0 0.0
    %2777 = vmatpush.msra.mxu0 0.0
    %2778 = vmatpush.msra.mxu0 0.0
    %2779 = vmatpush.msra.mxu0 0.0
    %2780 = vmatpush.msra.mxu0 0.0
    %2781 = vmatpush.msra.mxu0 0.0
    %2782 = vmatpush.msra.mxu0 0.0
    %2783 = vmatpush.msra.mxu0 0.0
    %2784 = vmatpush.msra.mxu0 %v2024
    %2785 = vmatpush.msra.mxu0 %v2023
    %2786 = vmatpush.msra.mxu0 %v2022
    %2787 = vmatpush.msra.mxu0 %v2021
    %2788 = vmatpush.msra.mxu0 %v2020
    %2789 = vmatpush.msra.mxu0 %v2019
    %2790 = vmatpush.msra.mxu0 %v2018
    %2791 = vmatpush.msra.mxu0 %v2017
    %2792 = vmatmul.f32.gmra.mxu0 %v2774
    %v2793 = vpop.f32.mrf.mxu0
    %v2794 = vadd.f32 0.0, %v2793
    %2795 = vdwg.mxu0
    %v2796 = vadd.f32 %v2687, %v2794
    %v2797 = vadd.f32 %v2796, %v2025
    %v2798 = vld [vmem:[%s2 + $0x278] sm:$0xff]
    %v2799 = vld [vmem:[%s2 + $0x280] sm:$0xff]
    %v2800 = vld [vmem:[%s2 + $0x288] sm:$0xff]
    %v2801 = vld [vmem:[%s2 + $0x290] sm:$0xff]
    %v2802 = vld [vmem:[%s2 + $0x298] sm:$0x1]
    %v2803 = vsel %vm2088, %v2491, 0.0
    %2804 = vadd.xlane.f32.xlu0 %v2803
    %v2805 = vpop.xlane.xlu0 %2804
    %v2806 = vmul.f32 %v2805, %v90
    %v2807 = vsub.f32 %v2491, %v2806
    %v2808 = vmul.f32 %v2807, %v2807
    %v2809 = vsel %vm2088, %v2808, 0.0
    %2810 = vadd.xlane.f32.xlu0 %v2809
    %v2811 = vpop.xlane.xlu0 %2810
    %v2812 = vmul.f32 %v2811, %v90
    %v2813 = vadd.f32 %v2812, 1e-05
    %v2814 = vrsqrt.pop %v2813
    %v2815 = vmul.f32 %v2814, %v2813
    %v2816 = vmul.f32 %v2815, %v2814
    %v2817 = vmul.f32 0.5, %v2816
    %v2818 = vsub.f32 1.5, %v2817
    %v2819 = vmul.f32 %v2814, %v2818
    %vm2820 = vweird.f32 %v2813
    %vm2821 = vweird.f32 %v2814
    %vm2822 = vmor %vm2820, %vm2821
    %v2823 = vsel %vm2822, %v2814, %v2819
    %v2824 = vmul.f32 %v2807, %v2823
    %v2826 = vsel %vm71, %v2824, 0
    %2828 = vmatpush.msra.mxu0 0.0
    %2829 = vmatpush.msra.mxu0 0.0
    %2830 = vmatpush.msra.mxu0 0.0
    %2831 = vmatpush.msra.mxu0 0.0
    %2832 = vmatpush.msra.mxu0 0.0
    %2833 = vmatpush.msra.mxu0 0.0
    %2834 = vmatpush.msra.mxu0 0.0
    %2835 = vmatpush.msra.mxu0 0.0
    %2836 = vmatpush.msra.mxu0 0.0
    %2837 = vmatpush.msra.mxu0 0.0
    %2838 = vmatpush.msra.mxu0 0.0
    %2839 = vmatpush.msra.mxu0 0.0
    %2840 = vmatpush.msra.mxu0 %v2801
    %2841 = vmatpush.msra.mxu0 %v2800
    %2842 = vmatpush.msra.mxu0 %v2799
    %2843 = vmatpush.msra.mxu0 %v2798
    %2844 = vmatmul.f32.gmra.mxu0 %v2826
    %v2845 = vpop.f32.mrf.mxu0
    %v2846 = vadd.f32 %v2802, %v2845
    %2847 = vdwg.mxu0
    %2848 = vst [vmem:[#allocation2] sm:$0x1] %v2846
    %v2849 = vsel %vm2088, %v2797, 0.0
    %2850 = vadd.xlane.f32.xlu0 %v2849
    %v2851 = vpop.xlane.xlu0 %2850
    %v2852 = vmul.f32 %v2851, %v90
    %v2853 = vsub.f32 %v2797, %v2852
    %v2854 = vmul.f32 %v2853, %v2853
    %v2855 = vsel %vm2088, %v2854, 0.0
    %2856 = vadd.xlane.f32.xlu0 %v2855
    %v2857 = vpop.xlane.xlu0 %2856
    %v2858 = vmul.f32 %v2857, %v90
    %v2859 = vadd.f32 %v2858, 1e-05
    %v2860 = vrsqrt.pop %v2859
    %v2861 = vmul.f32 %v2860, %v2859
    %v2862 = vmul.f32 %v2861, %v2860
    %v2863 = vmul.f32 0.5, %v2862
    %v2864 = vsub.f32 1.5, %v2863
    %v2865 = vmul.f32 %v2860, %v2864
    %vm2866 = vweird.f32 %v2859
    %vm2867 = vweird.f32 %v2860
    %vm2868 = vmor %vm2866, %vm2867
    %v2869 = vsel %vm2868, %v2860, %v2865
    %v2870 = vmul.f32 %v2853, %v2869
    %v2872 = vsel %vm71, %v2870, 0
    %2874 = vmatpush.msra.mxu0 0.0
    %2875 = vmatpush.msra.mxu0 0.0
    %2876 = vmatpush.msra.mxu0 0.0
    %2877 = vmatpush.msra.mxu0 0.0
    %2878 = vmatpush.msra.mxu0 0.0
    %2879 = vmatpush.msra.mxu0 0.0
    %2880 = vmatpush.msra.mxu0 0.0
    %2881 = vmatpush.msra.mxu0 0.0
    %2882 = vmatpush.msra.mxu0 0.0
    %2883 = vmatpush.msra.mxu0 0.0
    %2884 = vmatpush.msra.mxu0 0.0
    %2885 = vmatpush.msra.mxu0 0.0
    %2886 = vmatpush.msra.mxu0 %v2801
    %2887 = vmatpush.msra.mxu0 %v2800
    %2888 = vmatpush.msra.mxu0 %v2799
    %2889 = vmatpush.msra.mxu0 %v2798
    %2890 = vmatmul.f32.gmra.mxu0 %v2872
    %v2891 = vpop.f32.mrf.mxu0
    %v2892 = vadd.f32 %v2802, %v2891
    %2893 = vdwg.mxu0
    %2894 = vst [vmem:[#allocation2 + $0x1] sm:$0x1] %v2892
    // Predicated region
    $region14: #{cait_forward.1} parent=1 // pred_check
      _
    $region15: #{cait_forward.1} parent=1 // pred_check_branch
      %2896 = sbr.rel (0) target = $region17
    $region16: #{cait_forward.1} parent=1 // pred_region
      %2898 = vsyncadd [#allocation3], 0
      %s2900 = sshll.u32 [#allocation2], 4
      %s2901 = int_to_ptr.vmem [resolvable:$true] %s2900
      %s2902 = sshll.u32 %s3, 4
      %s2903 = int_to_ptr.hbm [resolvable:$true] %s2902
      %2905 = dma.vmem_to_hbm [thread:$0]  %s2901, 32, %s2903, [#allocation3]
    $region17: #{cait_forward.1} parent=1 // pred_fallthru
      _
    // Predicated region
    $region18: #{cait_forward.1} parent=1 // pred_check
      _
    $region19: #{cait_forward.1} parent=1 // pred_check_branch
      %2907 = sbr.rel (0) target = $region21
    $region20: #{cait_forward.1} parent=1 // pred_region
      %2909 = dma.done [#allocation3], 32
    $region21: #{cait_forward.1} parent=1 // pred_fallthru
      _
    %2910 = vsyncpa [#allocation3], 1

</llo_original>
